<compile_context>
chip_gen: v5e
topology: v5e:2x2
jax: 0.10.0
libtpu: 0.0.40
codegen_flags: <defaults>
</compile_context>

<pallas_src>
import jax
import jax.numpy as jnp
from jax import lax
from jax.experimental import pallas as pl
from jax.experimental.pallas import tpu as pltpu

EXPANSION = 1          # ResNet BasicBlock expansion
LANES = 128            # lane-dense channel padding


# ------------------------------ small helpers ------------------------------ #

def _vmem_budget():
    cap = 64 * 1024 * 1024                       # conservative fallback (v7x/TC)
    try:
        info_cap = pltpu.get_tpu_info().vmem_capacity_bytes
        if info_cap:
            cap = int(info_cap)
    except Exception:
        pass
    return int(0.75 * cap)


def _fold_bn(gamma, beta, mean, var, eps=1e-5):
    scale = gamma / jnp.sqrt(var + eps)
    shift = beta - mean * scale
    return scale, shift


def _pad_last(a, target):
    extra = target - a.shape[-1]
    if extra <= 0:
        return a
    return jnp.pad(a, [(0, 0)] * (a.ndim - 1) + [(0, extra)])


def _phase_split(x_nhwc, kh, kw, stride, pad):
    """Spatially pad x and split into stride*stride phases (no duplication).

    Returns phases of shape (N, s*s*Hq, Wq, C) where rows [t*Hq:(t+1)*Hq)
    (t = p*s + q) hold xpad[:, p::s, q::s, :].  The input window of conv tap
    (i, j) is phases[t, i//s : i//s+Ho, j//s : j//s+Wo] with t=(i%s)*s+(j%s).
    """
    N, H, W, C = x_nhwc.shape
    s = stride
    Ho = (H + 2 * pad - kh) // s + 1
    Wo = (W + 2 * pad - kw) // s + 1
    Hq = -(-(H + 2 * pad) // s)
    Wq = -(-(W + 2 * pad) // s)
    xp = jnp.pad(x_nhwc, ((0, 0), (pad, Hq * s - H - pad),
                          (pad, Wq * s - W - pad), (0, 0)))
    phases = [xp[:, p::s, q::s, :] for p in range(s) for q in range(s)]
    return jnp.concatenate(phases, axis=1), (Hq, Wq, Ho, Wo)


# ----------------------- fused BigBlock Pallas kernel ----------------------- #

def _make_bigblock_kernel(*, nb, stride, has_down, Hq, Wq, Ho, Wo):
    s = stride
    C = LANES
    M = Ho * Wo

    def kernel(*refs):
        ph_ref, w1_ref, b1_ref, w2_ref, b2_ref = refs[:5]
        rest = refs[5:]
        if has_down:
            wd_ref, bd_ref, o_ref, act_ref, mid_ref = rest
        else:
            o_ref, act_ref, mid_ref = rest

        # Zero only the 1-px halo border of the VMEM scratches; the interiors
        # are fully overwritten each step.  Done every step (not program_id==0)
        # so it is correct with megacore "parallel" grid sharding.
        zrow = jnp.zeros((1, Wo + 2, C), jnp.bfloat16)
        zcol = jnp.zeros((Ho + 2, 1, C), jnp.bfloat16)
        for scr in (act_ref, mid_ref):
            scr[0:1, :, :] = zrow
            scr[Ho + 1:Ho + 2, :, :] = zrow
            scr[:, 0:1, :] = zcol
            scr[:, Wo + 1:Wo + 2, :] = zcol

        def tap_phase(i, j):
            # shifted conv-input window of the (phase-split) block-0 input
            t = (i % s) * s + (j % s)
            r0 = t * Hq + i // s
            c0 = j // s
            return ph_ref[0, r0:r0 + Ho, c0:c0 + Wo, :]           # (Ho, Wo, C)

        def slab_phase():
            win = jnp.concatenate([tap_phase(i, j)
                                   for i in range(3) for j in range(3)], axis=-1)
            return win.reshape(M, 9 * C)                          # im2col in VMEM

        def slab_scratch(src):
            win = jnp.concatenate([src[i:i + Ho, j:j + Wo, :]
                                   for i in range(3) for j in range(3)], axis=-1)
            return win.reshape(M, 9 * C)

        def conv(slab, w, b):   # one MXU dot per conv, K = 9*128 packed taps
            return jnp.dot(slab, w, preferred_element_type=jnp.float32) + b

        # ---------------- block 0 (stride s, optional downsample) ------------
        out1 = jnp.maximum(conv(slab_phase(), w1_ref[0], b1_ref[0]), 0.0)
        mid_ref[1:1 + Ho, 1:1 + Wo, :] = (
            out1.reshape(Ho, Wo, C).astype(jnp.bfloat16))
        if has_down:
            idn = (jnp.dot(tap_phase(1, 1).reshape(M, C), wd_ref[...],
                           preferred_element_type=jnp.float32) + bd_ref[...])
        else:
            idn = tap_phase(1, 1).reshape(M, C).astype(jnp.float32)
        y = jnp.maximum(conv(slab_scratch(mid_ref), w2_ref[0], b2_ref[0]) + idn,
                        0.0)

        # ------------- blocks 1..nb-1 (stride 1, identity residual) ----------
        for b in range(1, nb):
            act_ref[1:1 + Ho, 1:1 + Wo, :] = (
                y.reshape(Ho, Wo, C).astype(jnp.bfloat16))
            out1 = jnp.maximum(
                conv(slab_scratch(act_ref), w1_ref[b], b1_ref[b]), 0.0)
            mid_ref[1:1 + Ho, 1:1 + Wo, :] = (
                out1.reshape(Ho, Wo, C).astype(jnp.bfloat16))
            idn = act_ref[1:1 + Ho, 1:1 + Wo, :].reshape(M, C).astype(jnp.float32)
            y = jnp.maximum(
                conv(slab_scratch(mid_ref), w2_ref[b], b2_ref[b]) + idn, 0.0)

        o_ref[0] = y.astype(o_ref.dtype)          # lane-dense (Ho*Wo, 128) store

    return kernel


# ------------------------------ forward wrapper ----------------------------- #

def big_block_forward(params, x_nchw):
    nb = len(params)
    stride = params[0]["stride"]
    planes = params[0]["conv1_w"].shape[-1]
    N, cin, H, W = x_nchw.shape
    C = LANES
    assert cin <= C and planes * EXPANSION <= C

    # NCHW -> NHWC, bf16, lane-pad channels to 128 once for the whole BigBlock.
    x = jnp.transpose(x_nchw, (0, 2, 3, 1)).astype(jnp.bfloat16)
    x = _pad_last(x, C)
    phases, (Hq, Wq, Ho, Wo) = _phase_split(x, 3, 3, stride, 1)
    M = Ho * Wo

    # Fold BN scale into conv weights, pack 9 taps along K, lane-pad cin/cout.
    w1s, b1s, w2s, b2s = [], [], [], []
    for bidx, p in enumerate(params):
        assert bidx == 0 or "down_w" not in p
        ci = p["conv1_w"].shape[2]
        s1, sh1 = _fold_bn(*p["bn1"])
        s2, sh2 = _fold_bn(*p["bn2"])
        w1 = jnp.zeros((3, 3, C, C), jnp.float32).at[:, :, :ci, :planes].set(
            p["conv1_w"] * s1)
        w2 = jnp.zeros((3, 3, C, C), jnp.float32).at[:, :, :planes, :planes].set(
            p["conv2_w"] * s2)
        w1s.append(w1.reshape(9 * C, C))
        w2s.append(w2.reshape(9 * C, C))
        b1s.append(_pad_last(sh1.reshape(1, planes), C))
        b2s.append(_pad_last(sh2.reshape(1, planes), C))
    w1 = jnp.stack(w1s).astype(jnp.bfloat16)          # (nb, 9*128, 128)
    w2 = jnp.stack(w2s).astype(jnp.bfloat16)          # (nb, 9*128, 128)
    b1 = jnp.stack(b1s).astype(jnp.float32)           # (nb, 1, 128)
    b2 = jnp.stack(b2s).astype(jnp.float32)

    has_down = "down_w" in params[0]
    extra = []
    if has_down:
        sd, bd_ = _fold_bn(*params[0]["down_bn"])
        wd = jnp.zeros((C, C), jnp.float32).at[:cin, :planes * EXPANSION].set(
            params[0]["down_w"].reshape(cin, planes * EXPANSION) * sd)
        extra = [wd.astype(jnp.bfloat16),
                 _pad_last(bd_.reshape(1, planes * EXPANSION), C).astype(jnp.float32)]
    else:
        assert cin == planes * EXPANSION and stride == 1

    kernel = _make_bigblock_kernel(nb=nb, stride=stride, has_down=has_down,
                                   Hq=Hq, Wq=Wq, Ho=Ho, Wo=Wo)

    def rep(a):   # whole-array block, identical for every grid step (resident)
        nd = a.ndim
        return pl.BlockSpec(a.shape, lambda n, _nd=nd: (0,) * _nd)

    weight_args = [w1, b1, w2, b2] + extra
    in_specs = ([pl.BlockSpec((1,) + phases.shape[1:], lambda n: (n, 0, 0, 0))]
                + [rep(a) for a in weight_args])
    out_specs = pl.BlockSpec((1, M, C), lambda n: (n, 0, 0))
    out_shape = jax.ShapeDtypeStruct((N, M, C), jnp.bfloat16)
    scratch = [pltpu.VMEM((Ho + 2, Wo + 2, C), jnp.bfloat16),   # block input
               pltpu.VMEM((Ho + 2, Wo + 2, C), jnp.bfloat16)]   # conv1 output

    # VMEM estimate: resident (constant index_map) weights counted once,
    # per-step input/output blocks double-buffered, plus scratch.
    def nbytes(a):
        return a.size * a.dtype.itemsize
    budget = _vmem_budget()
    resident = sum(nbytes(a) for a in weight_args)
    per_step = nbytes(phases) // N + M * C * 2
    scr_bytes = 2 * (Ho + 2) * (Wo + 2) * C * 2
    est = resident + 2 * per_step + scr_bytes
    assert est <= budget, f"fused BigBlock needs {est} B VMEM > budget {budget}"

    out = pl.pallas_call(
        kernel,
        grid=(N,),
        in_specs=in_specs,
        out_specs=out_specs,
        out_shape=out_shape,
        scratch_shapes=scratch,
        compiler_params=pltpu.CompilerParams(
            dimension_semantics=("parallel",),
            vmem_limit_bytes=budget),
    )(phases, *weight_args)

    out = out.reshape(N, Ho, Wo, C)[..., :planes * EXPANSION]
    return jnp.transpose(out, (0, 3, 1, 2)).astype(jnp.float32)   # NHWC -> NCHW


# ----------------------- parameter init (deterministic) --------------------- #

def _init_bn(keys, c):
    gamma = 1.0 + 0.1 * jax.random.normal(keys[0], (c,), jnp.float32)
    beta = 0.1 * jax.random.normal(keys[1], (c,), jnp.float32)
    mean = 0.1 * jax.random.normal(keys[2], (c,), jnp.float32)
    var = 1.0 + 0.1 * jnp.abs(jax.random.normal(keys[3], (c,), jnp.float32))
    return (gamma, beta, mean, var)


def init_basic_block(key, inplanes, planes, stride):
    keys = jax.random.split(key, 16)
    p = {"stride": stride}
    p["conv1_w"] = 0.1 * jax.random.normal(keys[0], (3, 3, inplanes, planes),
                                           jnp.float32)
    p["bn1"] = _init_bn(keys[1:5], planes)
    p["conv2_w"] = 0.1 * jax.random.normal(keys[5], (3, 3, planes, planes),
                                           jnp.float32)
    p["bn2"] = _init_bn(keys[6:10], planes)
    if stride != 1 or inplanes != planes * EXPANSION:
        p["down_w"] = 0.1 * jax.random.normal(
            keys[10], (1, 1, inplanes, planes * EXPANSION), jnp.float32)
        p["down_bn"] = _init_bn(keys[11:15], planes * EXPANSION)
    return p


def init_big_block(key, inplanes, planes, stride, layers_count):
    keys = jax.random.split(key, layers_count)
    params = [init_basic_block(keys[0], inplanes, planes, stride)]
    for i in range(1, layers_count):
        params.append(init_basic_block(keys[i], planes * EXPANSION, planes, 1))
    return params


# --------------------------- pure-JAX reference ----------------------------- #

def _ref_conv_bn(x, w, scale, shift, stride, pad, relu, residual=None):
    y = lax.conv_general_dilated(
        x, w, window_strides=(stride, stride), padding=[(pad, pad), (pad, pad)],
        dimension_numbers=("NHWC", "HWIO", "NHWC"),
        precision=lax.Precision.HIGHEST)
    y = y * scale + shift
    if residual is not None:
        y = y + residual
    if relu:
        y = jnp.maximum(y, 0.0)
    return y


def ref_big_block_forward(params, x_nchw):
    x = jnp.transpose(x_nchw, (0, 2, 3, 1))
    for p in params:
        s1, b1 = _fold_bn(*p["bn1"])
        out = _ref_conv_bn(x, p["conv1_w"], s1, b1, p["stride"], 1, True)
        if "down_w" in p:
            sd, bd = _fold_bn(*p["down_bn"])
            identity = _ref_conv_bn(x, p["down_w"], sd, bd, p["stride"], 0, False)
        else:
            identity = x
        s2, b2 = _fold_bn(*p["bn2"])
        # final ReLU after the residual add (BasicBlock semantics)
        x = _ref_conv_bn(out, p["conv2_w"], s2, b2, 1, 1, True, residual=identity)
    return jnp.transpose(x, (0, 3, 1, 2))


# ---------------------------------- main ------------------------------------ #

if __name__ == "__main__":
    key = jax.random.PRNGKey(0)
    k_x, k_p = jax.random.split(key)

    # BigBlock(BasicBlock, inplanes=4, planes=8, stride=2, layers_count=2)
    N, inplanes, H, W = 2, 4, 16, 16
    planes, stride, layers_count = 8, 2, 2

    x = jax.random.normal(k_x, (N, inplanes, H, W), jnp.float32)   # NCHW
    params = init_big_block(k_p, inplanes, planes, stride, layers_count)

    fwd = jax.jit(lambda xx: big_block_forward(params, xx))
    out = jax.block_until_ready(fwd(x))

    ref = jax.block_until_ready(ref_big_block_forward(params, x))
    assert out.shape == (N, planes * EXPANSION, H // stride, W // stride), out.shape
    max_err = float(jnp.max(jnp.abs(out - ref)))
    # bf16 datapath (weights/activations/intermediates) vs f32 reference.
    assert jnp.allclose(out, ref, atol=5e-2, rtol=5e-2), f"mismatch: {max_err}"

    print("KERNEL_OK")
</pallas_src>

<mosaic_0001>
module attributes {stable_mosaic.version = 11 : i64} {
  func.func @kernel(%arg0: i32, %arg1: memref<1x36x9x128xbf16, #tpu.memory_space<vmem>>, %arg2: memref<2x1152x128xbf16, #tpu.memory_space<vmem>>, %arg3: memref<2x1x128xf32, #tpu.memory_space<vmem>>, %arg4: memref<2x1152x128xbf16, #tpu.memory_space<vmem>>, %arg5: memref<2x1x128xf32, #tpu.memory_space<vmem>>, %arg6: memref<128x128xbf16, #tpu.memory_space<vmem>>, %arg7: memref<1x128xf32, #tpu.memory_space<vmem>>, %arg8: memref<1x64x128xbf16, #tpu.memory_space<vmem>>, %arg9: memref<10x10x128xbf16, #tpu.memory_space<vmem>>, %arg10: memref<10x10x128xbf16, #tpu.memory_space<vmem>>) attributes {dimension_semantics = [#tpu.dimension_semantics<parallel>], iteration_bounds = array<i64: 2>, scalar_prefetch = 0 : i64, scratch_operands = 2 : i64, tpu.core_type = #tpu.core_type<tc>, window_params = [{transform_indices = @transform_0, window_bounds = array<i64: 1, 36, 9, 128>}, {pipeline_mode = #tpu.pipeline_mode<synchronous>, transform_indices = @transform_1, window_bounds = array<i64: 2, 1152, 128>}, {pipeline_mode = #tpu.pipeline_mode<synchronous>, transform_indices = @transform_2, window_bounds = array<i64: 2, 1, 128>}, {pipeline_mode = #tpu.pipeline_mode<synchronous>, transform_indices = @transform_3, window_bounds = array<i64: 2, 1152, 128>}, {pipeline_mode = #tpu.pipeline_mode<synchronous>, transform_indices = @transform_4, window_bounds = array<i64: 2, 1, 128>}, {pipeline_mode = #tpu.pipeline_mode<synchronous>, transform_indices = @transform_5, window_bounds = array<i64: 128, 128>}, {pipeline_mode = #tpu.pipeline_mode<synchronous>, transform_indices = @transform_6, window_bounds = array<i64: 1, 128>}, {transform_indices = @transform_7, window_bounds = array<i64: 1, 64, 128>}]} {
    %cst = arith.constant 0.000000e+00 : bf16
    %0 = vector.broadcast %cst : bf16 to vector<1x10x128xbf16>
    %cst_0 = arith.constant 0.000000e+00 : bf16
    %1 = vector.broadcast %cst_0 : bf16 to vector<10x1x128xbf16>
    %c0 = arith.constant 0 : index
    %c0_1 = arith.constant 0 : index
    %c0_2 = arith.constant 0 : index
    %2 = vector.load %arg9[%c0, %c0_1, %c0_2] : memref<10x10x128xbf16, #tpu.memory_space<vmem>>, vector<1x10x128xbf16>
    tpu.vector_store %arg9[%c0, %c0_1, %c0_2], %0 {strides = array<i32>} : memref<10x10x128xbf16, #tpu.memory_space<vmem>>, vector<1x10x128xbf16>,
    %c9 = arith.constant 9 : index
    %c0_3 = arith.constant 0 : index
    %c0_4 = arith.constant 0 : index
    %3 = vector.load %arg9[%c9, %c0_3, %c0_4] : memref<10x10x128xbf16, #tpu.memory_space<vmem>>, vector<1x10x128xbf16>
    tpu.vector_store %arg9[%c9, %c0_3, %c0_4], %0 {strides = array<i32>} : memref<10x10x128xbf16, #tpu.memory_space<vmem>>, vector<1x10x128xbf16>,
    %c0_5 = arith.constant 0 : index
    %c0_6 = arith.constant 0 : index
    %c0_7 = arith.constant 0 : index
    %4 = vector.load %arg9[%c0_5, %c0_6, %c0_7] : memref<10x10x128xbf16, #tpu.memory_space<vmem>>, vector<10x1x128xbf16>
    tpu.vector_store %arg9[%c0_5, %c0_6, %c0_7], %1 {strides = array<i32>} : memref<10x10x128xbf16, #tpu.memory_space<vmem>>, vector<10x1x128xbf16>,
    %c0_8 = arith.constant 0 : index
    %c9_9 = arith.constant 9 : index
    %c0_10 = arith.constant 0 : index
    %5 = vector.load %arg9[%c0_8, %c9_9, %c0_10] : memref<10x10x128xbf16, #tpu.memory_space<vmem>>, vector<10x1x128xbf16>
    tpu.vector_store %arg9[%c0_8, %c9_9, %c0_10], %1 {strides = array<i32>} : memref<10x10x128xbf16, #tpu.memory_space<vmem>>, vector<10x1x128xbf16>,
    %c0_11 = arith.constant 0 : index
    %c0_12 = arith.constant 0 : index
    %c0_13 = arith.constant 0 : index
    %6 = vector.load %arg10[%c0_11, %c0_12, %c0_13] : memref<10x10x128xbf16, #tpu.memory_space<vmem>>, vector<1x10x128xbf16>
    tpu.vector_store %arg10[%c0_11, %c0_12, %c0_13], %0 {strides = array<i32>} : memref<10x10x128xbf16, #tpu.memory_space<vmem>>, vector<1x10x128xbf16>,
    %c9_14 = arith.constant 9 : index
    %c0_15 = arith.constant 0 : index
    %c0_16 = arith.constant 0 : index
    %7 = vector.load %arg10[%c9_14, %c0_15, %c0_16] : memref<10x10x128xbf16, #tpu.memory_space<vmem>>, vector<1x10x128xbf16>
    tpu.vector_store %arg10[%c9_14, %c0_15, %c0_16], %0 {strides = array<i32>} : memref<10x10x128xbf16, #tpu.memory_space<vmem>>, vector<1x10x128xbf16>,
    %c0_17 = arith.constant 0 : index
    %c0_18 = arith.constant 0 : index
    %c0_19 = arith.constant 0 : index
    %8 = vector.load %arg10[%c0_17, %c0_18, %c0_19] : memref<10x10x128xbf16, #tpu.memory_space<vmem>>, vector<10x1x128xbf16>
    tpu.vector_store %arg10[%c0_17, %c0_18, %c0_19], %1 {strides = array<i32>} : memref<10x10x128xbf16, #tpu.memory_space<vmem>>, vector<10x1x128xbf16>,
    %c0_20 = arith.constant 0 : index
    %c9_21 = arith.constant 9 : index
    %c0_22 = arith.constant 0 : index
    %9 = vector.load %arg10[%c0_20, %c9_21, %c0_22] : memref<10x10x128xbf16, #tpu.memory_space<vmem>>, vector<10x1x128xbf16>
    tpu.vector_store %arg10[%c0_20, %c9_21, %c0_22], %1 {strides = array<i32>} : memref<10x10x128xbf16, #tpu.memory_space<vmem>>, vector<10x1x128xbf16>,
    %c0_23 = arith.constant 0 : index
    %c0_24 = arith.constant 0 : index
    %c0_25 = arith.constant 0 : index
    %c0_26 = arith.constant 0 : index
    %10 = vector.load %arg1[%c0_23, %c0_24, %c0_25, %c0_26] : memref<1x36x9x128xbf16, #tpu.memory_space<vmem>>, vector<1x8x8x128xbf16>
    %11 = vector.shape_cast %10 : vector<1x8x8x128xbf16> to vector<8x8x128xbf16>
    %c0_27 = arith.constant 0 : index
    %c9_28 = arith.constant 9 : index
    %c0_29 = arith.constant 0 : index
    %c0_30 = arith.constant 0 : index
    %12 = vector.load %arg1[%c0_27, %c9_28, %c0_29, %c0_30] : memref<1x36x9x128xbf16, #tpu.memory_space<vmem>>, vector<1x8x8x128xbf16>
    %13 = vector.shape_cast %12 : vector<1x8x8x128xbf16> to vector<8x8x128xbf16>
    %c0_31 = arith.constant 0 : index
    %c0_32 = arith.constant 0 : index
    %c1 = arith.constant 1 : index
    %c0_33 = arith.constant 0 : index
    %14 = vector.load %arg1[%c0_31, %c0_32, %c1, %c0_33] : memref<1x36x9x128xbf16, #tpu.memory_space<vmem>>, vector<1x8x8x128xbf16>
    %15 = vector.shape_cast %14 : vector<1x8x8x128xbf16> to vector<8x8x128xbf16>
    %c0_34 = arith.constant 0 : index
    %c18 = arith.constant 18 : index
    %c0_35 = arith.constant 0 : index
    %c0_36 = arith.constant 0 : index
    %16 = vector.load %arg1[%c0_34, %c18, %c0_35, %c0_36] : memref<1x36x9x128xbf16, #tpu.memory_space<vmem>>, vector<1x8x8x128xbf16>
    %17 = vector.shape_cast %16 : vector<1x8x8x128xbf16> to vector<8x8x128xbf16>
    %c0_37 = arith.constant 0 : index
    %c27 = arith.constant 27 : index
    %c0_38 = arith.constant 0 : index
    %c0_39 = arith.constant 0 : index
    %18 = vector.load %arg1[%c0_37, %c27, %c0_38, %c0_39] : memref<1x36x9x128xbf16, #tpu.memory_space<vmem>>, vector<1x8x8x128xbf16>
    %19 = vector.shape_cast %18 : vector<1x8x8x128xbf16> to vector<8x8x128xbf16>
    %c0_40 = arith.constant 0 : index
    %c18_41 = arith.constant 18 : index
    %c1_42 = arith.constant 1 : index
    %c0_43 = arith.constant 0 : index
    %20 = vector.load %arg1[%c0_40, %c18_41, %c1_42, %c0_43] : memref<1x36x9x128xbf16, #tpu.memory_space<vmem>>, vector<1x8x8x128xbf16>
    %21 = vector.shape_cast %20 : vector<1x8x8x128xbf16> to vector<8x8x128xbf16>
    %c0_44 = arith.constant 0 : index
    %c1_45 = arith.constant 1 : index
    %c0_46 = arith.constant 0 : index
    %c0_47 = arith.constant 0 : index
    %22 = vector.load %arg1[%c0_44, %c1_45, %c0_46, %c0_47] : memref<1x36x9x128xbf16, #tpu.memory_space<vmem>>, vector<1x8x8x128xbf16>
    %23 = vector.shape_cast %22 : vector<1x8x8x128xbf16> to vector<8x8x128xbf16>
    %c0_48 = arith.constant 0 : index
    %c10 = arith.constant 10 : index
    %c0_49 = arith.constant 0 : index
    %c0_50 = arith.constant 0 : index
    %24 = vector.load %arg1[%c0_48, %c10, %c0_49, %c0_50] : memref<1x36x9x128xbf16, #tpu.memory_space<vmem>>, vector<1x8x8x128xbf16>
    %25 = vector.shape_cast %24 : vector<1x8x8x128xbf16> to vector<8x8x128xbf16>
    %c0_51 = arith.constant 0 : index
    %c1_52 = arith.constant 1 : index
    %c1_53 = arith.constant 1 : index
    %c0_54 = arith.constant 0 : index
    %26 = vector.load %arg1[%c0_51, %c1_52, %c1_53, %c0_54] : memref<1x36x9x128xbf16, #tpu.memory_space<vmem>>, vector<1x8x8x128xbf16>
    %27 = vector.shape_cast %26 : vector<1x8x8x128xbf16> to vector<8x8x128xbf16>
    %28 = tpu.concatenate %11, %13, %15, %17, %19, %21, %23, %25, %27 in 2 : vector<8x8x128xbf16>, vector<8x8x128xbf16>, vector<8x8x128xbf16>, vector<8x8x128xbf16>, vector<8x8x128xbf16>, vector<8x8x128xbf16>, vector<8x8x128xbf16>, vector<8x8x128xbf16>, vector<8x8x128xbf16> -> vector<8x8x1152xbf16>
    %29 = vector.shape_cast %28 : vector<8x8x1152xbf16> to vector<64x1152xbf16>
    %c0_55 = arith.constant 0 : index
    %c0_56 = arith.constant 0 : index
    %c0_57 = arith.constant 0 : index
    %30 = vector.load %arg2[%c0_55, %c0_56, %c0_57] : memref<2x1152x128xbf16, #tpu.memory_space<vmem>>, vector<1x1152x128xbf16>
    %31 = vector.shape_cast %30 : vector<1x1152x128xbf16> to vector<1152x128xbf16>
    %c0_58 = arith.constant 0 : index
    %c0_59 = arith.constant 0 : index
    %c0_60 = arith.constant 0 : index
    %32 = vector.load %arg3[%c0_58, %c0_59, %c0_60] : memref<2x1x128xf32, #tpu.memory_space<vmem>>, vector<1x1x128xf32>
    %33 = vector.shape_cast %32 : vector<1x1x128xf32> to vector<1x128xf32>
    %cst_61 = arith.constant dense<0.000000e+00> : vector<64x128xf32>
    %34 = tpu.matmul %29, %31, %cst_61 {dimension_numbers = #tpu.dot_dimension_numbers<[1], [0], [0], [1], [0, 0, 1, 1], [], []>} : vector<64x1152xbf16>, vector<1152x128xbf16>, vector<64x128xf32> -> vector<64x128xf32>
    %35 = vector.broadcast %33 : vector<1x128xf32> to vector<64x128xf32>
    %36 = arith.addf %34, %35 : vector<64x128xf32>
    %cst_62 = arith.constant 0.000000e+00 : f32
    %37 = vector.broadcast %cst_62 : f32 to vector<64x128xf32>
    %38 = arith.maximumf %36, %37 : vector<64x128xf32>
    %39 = vector.shape_cast %38 : vector<64x128xf32> to vector<8x8x128xf32>
    %40 = arith.truncf %39 : vector<8x8x128xf32> to vector<8x8x128xbf16>
    %c1_63 = arith.constant 1 : index
    %c1_64 = arith.constant 1 : index
    %c0_65 = arith.constant 0 : index
    %41 = vector.load %arg10[%c1_63, %c1_64, %c0_65] : memref<10x10x128xbf16, #tpu.memory_space<vmem>>, vector<8x8x128xbf16>
    tpu.vector_store %arg10[%c1_63, %c1_64, %c0_65], %40 {strides = array<i32>} : memref<10x10x128xbf16, #tpu.memory_space<vmem>>, vector<8x8x128xbf16>,
    %c0_66 = arith.constant 0 : index
    %c27_67 = arith.constant 27 : index
    %c0_68 = arith.constant 0 : index
    %c0_69 = arith.constant 0 : index
    %42 = vector.load %arg1[%c0_66, %c27_67, %c0_68, %c0_69] : memref<1x36x9x128xbf16, #tpu.memory_space<vmem>>, vector<1x8x8x128xbf16>
    %43 = vector.shape_cast %42 : vector<1x8x8x128xbf16> to vector<8x8x128xbf16>
    %44 = vector.shape_cast %43 : vector<8x8x128xbf16> to vector<64x128xbf16>
    %c0_70 = arith.constant 0 : index
    %c0_71 = arith.constant 0 : index
    %45 = vector.load %arg6[%c0_70, %c0_71] : memref<128x128xbf16, #tpu.memory_space<vmem>>, vector<128x128xbf16>
    %cst_72 = arith.constant dense<0.000000e+00> : vector<64x128xf32>
    %46 = tpu.matmul %44, %45, %cst_72 {dimension_numbers = #tpu.dot_dimension_numbers<[1], [0], [0], [1], [0, 0, 1, 1], [], []>} : vector<64x128xbf16>, vector<128x128xbf16>, vector<64x128xf32> -> vector<64x128xf32>
    %c0_73 = arith.constant 0 : index
    %c0_74 = arith.constant 0 : index
    %47 = vector.load %arg7[%c0_73, %c0_74] : memref<1x128xf32, #tpu.memory_space<vmem>>, vector<1x128xf32>
    %48 = vector.broadcast %47 : vector<1x128xf32> to vector<64x128xf32>
    %49 = arith.addf %46, %48 : vector<64x128xf32>
    %c0_75 = arith.constant 0 : index
    %c0_76 = arith.constant 0 : index
    %c0_77 = arith.constant 0 : index
    %50 = vector.load %arg10[%c0_75, %c0_76, %c0_77] : memref<10x10x128xbf16, #tpu.memory_space<vmem>>, vector<8x8x128xbf16>
    %c0_78 = arith.constant 0 : index
    %c1_79 = arith.constant 1 : index
    %c0_80 = arith.constant 0 : index
    %51 = vector.load %arg10[%c0_78, %c1_79, %c0_80] : memref<10x10x128xbf16, #tpu.memory_space<vmem>>, vector<8x8x128xbf16>
    %c0_81 = arith.constant 0 : index
    %c2 = arith.constant 2 : index
    %c0_82 = arith.constant 0 : index
    %52 = vector.load %arg10[%c0_81, %c2, %c0_82] : memref<10x10x128xbf16, #tpu.memory_space<vmem>>, vector<8x8x128xbf16>
    %c1_83 = arith.constant 1 : index
    %c0_84 = arith.constant 0 : index
    %c0_85 = arith.constant 0 : index
    %53 = vector.load %arg10[%c1_83, %c0_84, %c0_85] : memref<10x10x128xbf16, #tpu.memory_space<vmem>>, vector<8x8x128xbf16>
    %c1_86 = arith.constant 1 : index
    %c1_87 = arith.constant 1 : index
    %c0_88 = arith.constant 0 : index
    %54 = vector.load %arg10[%c1_86, %c1_87, %c0_88] : memref<10x10x128xbf16, #tpu.memory_space<vmem>>, vector<8x8x128xbf16>
    %c1_89 = arith.constant 1 : index
    %c2_90 = arith.constant 2 : index
    %c0_91 = arith.constant 0 : index
    %55 = vector.load %arg10[%c1_89, %c2_90, %c0_91] : memref<10x10x128xbf16, #tpu.memory_space<vmem>>, vector<8x8x128xbf16>
    %c2_92 = arith.constant 2 : index
    %c0_93 = arith.constant 0 : index
    %c0_94 = arith.constant 0 : index
    %56 = vector.load %arg10[%c2_92, %c0_93, %c0_94] : memref<10x10x128xbf16, #tpu.memory_space<vmem>>, vector<8x8x128xbf16>
    %c2_95 = arith.constant 2 : index
    %c1_96 = arith.constant 1 : index
    %c0_97 = arith.constant 0 : index
    %57 = vector.load %arg10[%c2_95, %c1_96, %c0_97] : memref<10x10x128xbf16, #tpu.memory_space<vmem>>, vector<8x8x128xbf16>
    %c2_98 = arith.constant 2 : index
    %c2_99 = arith.constant 2 : index
    %c0_100 = arith.constant 0 : index
    %58 = vector.load %arg10[%c2_98, %c2_99, %c0_100] : memref<10x10x128xbf16, #tpu.memory_space<vmem>>, vector<8x8x128xbf16>
    %59 = tpu.concatenate %50, %51, %52, %53, %54, %55, %56, %57, %58 in 2 : vector<8x8x128xbf16>, vector<8x8x128xbf16>, vector<8x8x128xbf16>, vector<8x8x128xbf16>, vector<8x8x128xbf16>, vector<8x8x128xbf16>, vector<8x8x128xbf16>, vector<8x8x128xbf16>, vector<8x8x128xbf16> -> vector<8x8x1152xbf16>
    %60 = vector.shape_cast %59 : vector<8x8x1152xbf16> to vector<64x1152xbf16>
    %c0_101 = arith.constant 0 : index
    %c0_102 = arith.constant 0 : index
    %c0_103 = arith.constant 0 : index
    %61 = vector.load %arg4[%c0_101, %c0_102, %c0_103] : memref<2x1152x128xbf16, #tpu.memory_space<vmem>>, vector<1x1152x128xbf16>
    %62 = vector.shape_cast %61 : vector<1x1152x128xbf16> to vector<1152x128xbf16>
    %c0_104 = arith.constant 0 : index
    %c0_105 = arith.constant 0 : index
    %c0_106 = arith.constant 0 : index
    %63 = vector.load %arg5[%c0_104, %c0_105, %c0_106] : memref<2x1x128xf32, #tpu.memory_space<vmem>>, vector<1x1x128xf32>
    %64 = vector.shape_cast %63 : vector<1x1x128xf32> to vector<1x128xf32>
    %cst_107 = arith.constant dense<0.000000e+00> : vector<64x128xf32>
    %65 = tpu.matmul %60, %62, %cst_107 {dimension_numbers = #tpu.dot_dimension_numbers<[1], [0], [0], [1], [0, 0, 1, 1], [], []>} : vector<64x1152xbf16>, vector<1152x128xbf16>, vector<64x128xf32> -> vector<64x128xf32>
    %66 = vector.broadcast %64 : vector<1x128xf32> to vector<64x128xf32>
    %67 = arith.addf %65, %66 : vector<64x128xf32>
    %68 = arith.addf %67, %49 : vector<64x128xf32>
    %cst_108 = arith.constant 0.000000e+00 : f32
    %69 = vector.broadcast %cst_108 : f32 to vector<64x128xf32>
    %70 = arith.maximumf %68, %69 : vector<64x128xf32>
    %71 = vector.shape_cast %70 : vector<64x128xf32> to vector<8x8x128xf32>
    %72 = arith.truncf %71 : vector<8x8x128xf32> to vector<8x8x128xbf16>
    %c1_109 = arith.constant 1 : index
    %c1_110 = arith.constant 1 : index
    %c0_111 = arith.constant 0 : index
    %73 = vector.load %arg9[%c1_109, %c1_110, %c0_111] : memref<10x10x128xbf16, #tpu.memory_space<vmem>>, vector<8x8x128xbf16>
    tpu.vector_store %arg9[%c1_109, %c1_110, %c0_111], %72 {strides = array<i32>} : memref<10x10x128xbf16, #tpu.memory_space<vmem>>, vector<8x8x128xbf16>,
    %c0_112 = arith.constant 0 : index
    %c0_113 = arith.constant 0 : index
    %c0_114 = arith.constant 0 : index
    %74 = vector.load %arg9[%c0_112, %c0_113, %c0_114] : memref<10x10x128xbf16, #tpu.memory_space<vmem>>, vector<8x8x128xbf16>
    %c0_115 = arith.constant 0 : index
    %c1_116 = arith.constant 1 : index
    %c0_117 = arith.constant 0 : index
    %75 = vector.load %arg9[%c0_115, %c1_116, %c0_117] : memref<10x10x128xbf16, #tpu.memory_space<vmem>>, vector<8x8x128xbf16>
    %c0_118 = arith.constant 0 : index
    %c2_119 = arith.constant 2 : index
    %c0_120 = arith.constant 0 : index
    %76 = vector.load %arg9[%c0_118, %c2_119, %c0_120] : memref<10x10x128xbf16, #tpu.memory_space<vmem>>, vector<8x8x128xbf16>
    %c1_121 = arith.constant 1 : index
    %c0_122 = arith.constant 0 : index
    %c0_123 = arith.constant 0 : index
    %77 = vector.load %arg9[%c1_121, %c0_122, %c0_123] : memref<10x10x128xbf16, #tpu.memory_space<vmem>>, vector<8x8x128xbf16>
    %c1_124 = arith.constant 1 : index
    %c1_125 = arith.constant 1 : index
    %c0_126 = arith.constant 0 : index
    %78 = vector.load %arg9[%c1_124, %c1_125, %c0_126] : memref<10x10x128xbf16, #tpu.memory_space<vmem>>, vector<8x8x128xbf16>
    %c1_127 = arith.constant 1 : index
    %c2_128 = arith.constant 2 : index
    %c0_129 = arith.constant 0 : index
    %79 = vector.load %arg9[%c1_127, %c2_128, %c0_129] : memref<10x10x128xbf16, #tpu.memory_space<vmem>>, vector<8x8x128xbf16>
    %c2_130 = arith.constant 2 : index
    %c0_131 = arith.constant 0 : index
    %c0_132 = arith.constant 0 : index
    %80 = vector.load %arg9[%c2_130, %c0_131, %c0_132] : memref<10x10x128xbf16, #tpu.memory_space<vmem>>, vector<8x8x128xbf16>
    %c2_133 = arith.constant 2 : index
    %c1_134 = arith.constant 1 : index
    %c0_135 = arith.constant 0 : index
    %81 = vector.load %arg9[%c2_133, %c1_134, %c0_135] : memref<10x10x128xbf16, #tpu.memory_space<vmem>>, vector<8x8x128xbf16>
    %c2_136 = arith.constant 2 : index
    %c2_137 = arith.constant 2 : index
    %c0_138 = arith.constant 0 : index
    %82 = vector.load %arg9[%c2_136, %c2_137, %c0_138] : memref<10x10x128xbf16, #tpu.memory_space<vmem>>, vector<8x8x128xbf16>
    %83 = tpu.concatenate %74, %75, %76, %77, %78, %79, %80, %81, %82 in 2 : vector<8x8x128xbf16>, vector<8x8x128xbf16>, vector<8x8x128xbf16>, vector<8x8x128xbf16>, vector<8x8x128xbf16>, vector<8x8x128xbf16>, vector<8x8x128xbf16>, vector<8x8x128xbf16>, vector<8x8x128xbf16> -> vector<8x8x1152xbf16>
    %84 = vector.shape_cast %83 : vector<8x8x1152xbf16> to vector<64x1152xbf16>
    %c1_139 = arith.constant 1 : index
    %c0_140 = arith.constant 0 : index
    %c0_141 = arith.constant 0 : index
    %85 = vector.load %arg2[%c1_139, %c0_140, %c0_141] : memref<2x1152x128xbf16, #tpu.memory_space<vmem>>, vector<1x1152x128xbf16>
    %86 = vector.shape_cast %85 : vector<1x1152x128xbf16> to vector<1152x128xbf16>
    %c1_142 = arith.constant 1 : index
    %c0_143 = arith.constant 0 : index
    %c0_144 = arith.constant 0 : index
    %87 = vector.load %arg3[%c1_142, %c0_143, %c0_144] : memref<2x1x128xf32, #tpu.memory_space<vmem>>, vector<1x1x128xf32>
    %88 = vector.shape_cast %87 : vector<1x1x128xf32> to vector<1x128xf32>
    %cst_145 = arith.constant dense<0.000000e+00> : vector<64x128xf32>
    %89 = tpu.matmul %84, %86, %cst_145 {dimension_numbers = #tpu.dot_dimension_numbers<[1], [0], [0], [1], [0, 0, 1, 1], [], []>} : vector<64x1152xbf16>, vector<1152x128xbf16>, vector<64x128xf32> -> vector<64x128xf32>
    %90 = vector.broadcast %88 : vector<1x128xf32> to vector<64x128xf32>
    %91 = arith.addf %89, %90 : vector<64x128xf32>
    %cst_146 = arith.constant 0.000000e+00 : f32
    %92 = vector.broadcast %cst_146 : f32 to vector<64x128xf32>
    %93 = arith.maximumf %91, %92 : vector<64x128xf32>
    %94 = vector.shape_cast %93 : vector<64x128xf32> to vector<8x8x128xf32>
    %95 = arith.truncf %94 : vector<8x8x128xf32> to vector<8x8x128xbf16>
    %c1_147 = arith.constant 1 : index
    %c1_148 = arith.constant 1 : index
    %c0_149 = arith.constant 0 : index
    %96 = vector.load %arg10[%c1_147, %c1_148, %c0_149] : memref<10x10x128xbf16, #tpu.memory_space<vmem>>, vector<8x8x128xbf16>
    tpu.vector_store %arg10[%c1_147, %c1_148, %c0_149], %95 {strides = array<i32>} : memref<10x10x128xbf16, #tpu.memory_space<vmem>>, vector<8x8x128xbf16>,
    %c1_150 = arith.constant 1 : index
    %c1_151 = arith.constant 1 : index
    %c0_152 = arith.constant 0 : index
    %97 = vector.load %arg9[%c1_150, %c1_151, %c0_152] : memref<10x10x128xbf16, #tpu.memory_space<vmem>>, vector<8x8x128xbf16>
    %98 = vector.shape_cast %97 : vector<8x8x128xbf16> to vector<64x128xbf16>
    %99 = arith.extf %98 : vector<64x128xbf16> to vector<64x128xf32>
    %c0_153 = arith.constant 0 : index
    %c0_154 = arith.constant 0 : index
    %c0_155 = arith.constant 0 : index
    %100 = vector.load %arg10[%c0_153, %c0_154, %c0_155] : memref<10x10x128xbf16, #tpu.memory_space<vmem>>, vector<8x8x128xbf16>
    %c0_156 = arith.constant 0 : index
    %c1_157 = arith.constant 1 : index
    %c0_158 = arith.constant 0 : index
    %101 = vector.load %arg10[%c0_156, %c1_157, %c0_158] : memref<10x10x128xbf16, #tpu.memory_space<vmem>>, vector<8x8x128xbf16>
    %c0_159 = arith.constant 0 : index
    %c2_160 = arith.constant 2 : index
    %c0_161 = arith.constant 0 : index
    %102 = vector.load %arg10[%c0_159, %c2_160, %c0_161] : memref<10x10x128xbf16, #tpu.memory_space<vmem>>, vector<8x8x128xbf16>
    %c1_162 = arith.constant 1 : index
    %c0_163 = arith.constant 0 : index
    %c0_164 = arith.constant 0 : index
    %103 = vector.load %arg10[%c1_162, %c0_163, %c0_164] : memref<10x10x128xbf16, #tpu.memory_space<vmem>>, vector<8x8x128xbf16>
    %c1_165 = arith.constant 1 : index
    %c1_166 = arith.constant 1 : index
    %c0_167 = arith.constant 0 : index
    %104 = vector.load %arg10[%c1_165, %c1_166, %c0_167] : memref<10x10x128xbf16, #tpu.memory_space<vmem>>, vector<8x8x128xbf16>
    %c1_168 = arith.constant 1 : index
    %c2_169 = arith.constant 2 : index
    %c0_170 = arith.constant 0 : index
    %105 = vector.load %arg10[%c1_168, %c2_169, %c0_170] : memref<10x10x128xbf16, #tpu.memory_space<vmem>>, vector<8x8x128xbf16>
    %c2_171 = arith.constant 2 : index
    %c0_172 = arith.constant 0 : index
    %c0_173 = arith.constant 0 : index
    %106 = vector.load %arg10[%c2_171, %c0_172, %c0_173] : memref<10x10x128xbf16, #tpu.memory_space<vmem>>, vector<8x8x128xbf16>
    %c2_174 = arith.constant 2 : index
    %c1_175 = arith.constant 1 : index
    %c0_176 = arith.constant 0 : index
    %107 = vector.load %arg10[%c2_174, %c1_175, %c0_176] : memref<10x10x128xbf16, #tpu.memory_space<vmem>>, vector<8x8x128xbf16>
    %c2_177 = arith.constant 2 : index
    %c2_178 = arith.constant 2 : index
    %c0_179 = arith.constant 0 : index
    %108 = vector.load %arg10[%c2_177, %c2_178, %c0_179] : memref<10x10x128xbf16, #tpu.memory_space<vmem>>, vector<8x8x128xbf16>
    %109 = tpu.concatenate %100, %101, %102, %103, %104, %105, %106, %107, %108 in 2 : vector<8x8x128xbf16>, vector<8x8x128xbf16>, vector<8x8x128xbf16>, vector<8x8x128xbf16>, vector<8x8x128xbf16>, vector<8x8x128xbf16>, vector<8x8x128xbf16>, vector<8x8x128xbf16>, vector<8x8x128xbf16> -> vector<8x8x1152xbf16>
    %110 = vector.shape_cast %109 : vector<8x8x1152xbf16> to vector<64x1152xbf16>
    %c1_180 = arith.constant 1 : index
    %c0_181 = arith.constant 0 : index
    %c0_182 = arith.constant 0 : index
    %111 = vector.load %arg4[%c1_180, %c0_181, %c0_182] : memref<2x1152x128xbf16, #tpu.memory_space<vmem>>, vector<1x1152x128xbf16>
    %112 = vector.shape_cast %111 : vector<1x1152x128xbf16> to vector<1152x128xbf16>
    %c1_183 = arith.constant 1 : index
    %c0_184 = arith.constant 0 : index
    %c0_185 = arith.constant 0 : index
    %113 = vector.load %arg5[%c1_183, %c0_184, %c0_185] : memref<2x1x128xf32, #tpu.memory_space<vmem>>, vector<1x1x128xf32>
    %114 = vector.shape_cast %113 : vector<1x1x128xf32> to vector<1x128xf32>
    %cst_186 = arith.constant dense<0.000000e+00> : vector<64x128xf32>
    %115 = tpu.matmul %110, %112, %cst_186 {dimension_numbers = #tpu.dot_dimension_numbers<[1], [0], [0], [1], [0, 0, 1, 1], [], []>} : vector<64x1152xbf16>, vector<1152x128xbf16>, vector<64x128xf32> -> vector<64x128xf32>
    %116 = vector.broadcast %114 : vector<1x128xf32> to vector<64x128xf32>
    %117 = arith.addf %115, %116 : vector<64x128xf32>
    %118 = arith.addf %117, %99 : vector<64x128xf32>
    %cst_187 = arith.constant 0.000000e+00 : f32
    %119 = vector.broadcast %cst_187 : f32 to vector<64x128xf32>
    %120 = arith.maximumf %118, %119 : vector<64x128xf32>
    %121 = arith.truncf %120 : vector<64x128xf32> to vector<64x128xbf16>
    %c0_188 = arith.constant 0 : index
    %c0_189 = arith.constant 0 : index
    %c0_190 = arith.constant 0 : index
    %122 = vector.load %arg8[%c0_188, %c0_189, %c0_190] : memref<1x64x128xbf16, #tpu.memory_space<vmem>>, vector<1x64x128xbf16>
    %123 = vector.shape_cast %122 : vector<1x64x128xbf16> to vector<64x128xbf16>
    %124 = vector.shape_cast %121 : vector<64x128xbf16> to vector<1x64x128xbf16>
    tpu.vector_store %arg8[%c0_188, %c0_189, %c0_190], %124 {strides = array<i32>} : memref<1x64x128xbf16, #tpu.memory_space<vmem>>, vector<1x64x128xbf16>,
    return
  }
  func.func @transform_0(%arg0: i32) -> (i32, i32, i32, i32) {
    %c0_i32 = arith.constant 0 : i32
    %c0_i32_0 = arith.constant 0 : i32
    %c0_i32_1 = arith.constant 0 : i32
    %c0_i32_2 = arith.constant 0 : i32
    return %arg0, %c0_i32, %c0_i32_0, %c0_i32_1 : i32, i32, i32, i32
  }
  func.func @transform_1(%arg0: i32) -> (i32, i32, i32) {
    %c0_i32 = arith.constant 0 : i32
    %c0_i32_0 = arith.constant 0 : i32
    %c0_i32_1 = arith.constant 0 : i32
    %c0_i32_2 = arith.constant 0 : i32
    return %c0_i32, %c0_i32_0, %c0_i32_1 : i32, i32, i32
  }
  func.func @transform_2(%arg0: i32) -> (i32, i32, i32) {
    %c0_i32 = arith.constant 0 : i32
    %c0_i32_0 = arith.constant 0 : i32
    %c0_i32_1 = arith.constant 0 : i32
    %c0_i32_2 = arith.constant 0 : i32
    return %c0_i32, %c0_i32_0, %c0_i32_1 : i32, i32, i32
  }
  func.func @transform_3(%arg0: i32) -> (i32, i32, i32) {
    %c0_i32 = arith.constant 0 : i32
    %c0_i32_0 = arith.constant 0 : i32
    %c0_i32_1 = arith.constant 0 : i32
    %c0_i32_2 = arith.constant 0 : i32
    return %c0_i32, %c0_i32_0, %c0_i32_1 : i32, i32, i32
  }
  func.func @transform_4(%arg0: i32) -> (i32, i32, i32) {
    %c0_i32 = arith.constant 0 : i32
    %c0_i32_0 = arith.constant 0 : i32
    %c0_i32_1 = arith.constant 0 : i32
    %c0_i32_2 = arith.constant 0 : i32
    return %c0_i32, %c0_i32_0, %c0_i32_1 : i32, i32, i32
  }
  func.func @transform_5(%arg0: i32) -> (i32, i32) {
    %c0_i32 = arith.constant 0 : i32
    %c0_i32_0 = arith.constant 0 : i32
    %c0_i32_1 = arith.constant 0 : i32
    return %c0_i32, %c0_i32_0 : i32, i32
  }
  func.func @transform_6(%arg0: i32) -> (i32, i32) {
    %c0_i32 = arith.constant 0 : i32
    %c0_i32_0 = arith.constant 0 : i32
    %c0_i32_1 = arith.constant 0 : i32
    return %c0_i32, %c0_i32_0 : i32, i32
  }
  func.func @transform_7(%arg0: i32) -> (i32, i32, i32) {
    %c0_i32 = arith.constant 0 : i32
    %c0_i32_0 = arith.constant 0 : i32
    %c0_i32_1 = arith.constant 0 : i32
    return %arg0, %c0_i32, %c0_i32_0 : i32, i32, i32
  }
}

</mosaic_0001>

<llo_original>
// kernel: _lambda_.1
$region0: #{_lambda_.1}
  #allocation0 [shape = 'u32[]', space=smem, size = 0x4, offset = 0x4, fixed_abs, tag = 'smem constant byte address 0x4 - core index']
  #allocation1 [shape = 'u32[72,128]{1,0:T(1,128)}', space=vmem, size = 0x9000, scoped, tag = 'internal scratch']
  #allocation2 [shape = 'bf16[10,10,128]{2,1,0:T(8,128)(2,1)}', space=vmem, size = 0xa000, scoped, tag = 'scratch operand']
  #allocation3 [shape = 'bf16[10,10,128]{2,1,0:T(8,128)(2,1)}', space=vmem, size = 0xa000, scoped, tag = 'scratch operand']
  %s0 = inlined_call_operand.vmem [shape: bf16[2,36,9,128], index: 0, kind: input, shape index: {}]
  %s1 = inlined_call_operand.vmem [shape: bf16[2,1152,128], index: 1, kind: input, shape index: {}]
  %s2 = inlined_call_operand.vmem [shape: f32[2,1,128], index: 2, kind: input, shape index: {}]
  %s3 = inlined_call_operand.vmem [shape: bf16[2,1152,128], index: 3, kind: input, shape index: {}]
  %s4 = inlined_call_operand.vmem [shape: f32[2,1,128], index: 4, kind: input, shape index: {}]
  %s5 = inlined_call_operand.vmem [shape: bf16[128,128], index: 5, kind: input, shape index: {}]
  %s6 = inlined_call_operand.vmem [shape: f32[1,128], index: 6, kind: input, shape index: {}]
  %s7 = inlined_call_operand.vmem [shape: bf16[2,64,128], index: 7, kind: output, shape index: {}]
  %s8 = sld [smem:[#allocation0]]
  $region61: #{_lambda_.1} parent=0
    _
  %s10 = ssub.s32 1, %s8
  %s11 = scalar_select 0, %s10, %s8
  loop: start=0, step=1, limit=4
  $region2: #{_lambda_.1} parent=0 // loop_pre_header
    _
  $region3: #{_lambda_.1} parent=0 // loop_header
    %s13 = sphi 0, %s17
    %p14 = scmp.ge.s32.totalorder %s13, 4
    %s23 = sphi 0, %s25
    %s26 = sphi 0, %s23
    %s27 = sphi 0, %s26
    %s43 = sphi 0, %s27
    %s47 = sphi 0, %s47
    %s49 = sphi 0, %s47
    %s50 = sphi 0, %s49
    %s64 = sphi 0, %s50
    %s68 = sphi 0, %s68
    %s70 = sphi 0, %s68
    %s71 = sphi 0, %s70
    %s85 = sphi 0, %s71
    %s89 = sphi 0, %s89
    %s91 = sphi 0, %s89
    %s92 = sphi 0, %s91
    %s106 = sphi 0, %s92
    %s110 = sphi 0, %s110
    %s112 = sphi 0, %s110
    %s113 = sphi 0, %s112
    %s127 = sphi 0, %s113
    %s131 = sphi 0, %s131
    %s133 = sphi 0, %s131
    %s134 = sphi 0, %s133
    %s148 = sphi 0, %s134
    %s152 = sphi 0, %s152
    %s154 = sphi 0, %s152
    %s155 = sphi 0, %s154
    %s169 = sphi 0, %s155
    %s175 = sphi 0, %s177
    %s178 = sphi 0, %s175
    %s179 = sphi 0, %s178
    %s195 = sphi 0, %s179
  $region4: #{_lambda_.1} parent=0 // loop_header_branch
    %16 = sbr.rel (%p14) target = $region8
  $region5: #{_lambda_.1} parent=0 // loop_body
    %s18 = ssub.s32 %s13, 1
    %s19 = ssub.s32 %s13, 2
    %s20 = sadd.s32 %s13, 1
    %s21 = ssub.s32 %s13, %s20
    %p22 = scmp.eq.s32.totalorder %s21, 0
    %s24 = sadd.s32 %s23, 1
    %s25 = scalar_select %p22, %s23, %s24
    %p28 = pneg %p22
    %p29 = scmp.eq.s32.totalorder %s13, 1
    %p30 = por %p28, %p29
    %p31 = scmp.ne.s32.totalorder %s23, %s26
    %p32 = scmp.eq.s32.totalorder %s13, 0
    %p33 = por %p31, %p32
    %p34 = scmp.ne.s32.totalorder %s23, %s26
    %p35 = scmp.eq.s32.totalorder %s18, 1
    %p36 = por %p34, %p35
    %p37 = scmp.ne.s32.totalorder %s26, %s27
    %p38 = scmp.eq.s32.totalorder %s18, 0
    %p39 = por %p37, %p38
    %p40 = scmp.ne.s32.totalorder %s26, %s27
    %p41 = scmp.eq.s32.totalorder %s19, 1
    %p42 = por %p40, %p41
    %p44 = scmp.ne.s32.totalorder %s27, %s43
    %p45 = scmp.eq.s32.totalorder %s19, 0
    %p46 = por %p44, %p45
    %s48 = sadd.s32 %s47, 1
    %p51 = scmp.eq.s32.totalorder %s13, 1
    %p52 = scmp.ne.s32.totalorder %s47, %s49
    %p53 = scmp.eq.s32.totalorder %s13, 0
    %p54 = por %p52, %p53
    %p55 = scmp.ne.s32.totalorder %s47, %s49
    %p56 = scmp.eq.s32.totalorder %s18, 1
    %p57 = por %p55, %p56
    %p58 = scmp.ne.s32.totalorder %s49, %s50
    %p59 = scmp.eq.s32.totalorder %s18, 0
    %p60 = por %p58, %p59
    %p61 = scmp.ne.s32.totalorder %s49, %s50
    %p62 = scmp.eq.s32.totalorder %s19, 1
    %p63 = por %p61, %p62
    %p65 = scmp.ne.s32.totalorder %s50, %s64
    %p66 = scmp.eq.s32.totalorder %s19, 0
    %p67 = por %p65, %p66
    %s69 = sadd.s32 %s68, 1
    %p72 = scmp.eq.s32.totalorder %s13, 1
    %p73 = scmp.ne.s32.totalorder %s68, %s70
    %p74 = scmp.eq.s32.totalorder %s13, 0
    %p75 = por %p73, %p74
    %p76 = scmp.ne.s32.totalorder %s68, %s70
    %p77 = scmp.eq.s32.totalorder %s18, 1
    %p78 = por %p76, %p77
    %p79 = scmp.ne.s32.totalorder %s70, %s71
    %p80 = scmp.eq.s32.totalorder %s18, 0
    %p81 = por %p79, %p80
    %p82 = scmp.ne.s32.totalorder %s70, %s71
    %p83 = scmp.eq.s32.totalorder %s19, 1
    %p84 = por %p82, %p83
    %p86 = scmp.ne.s32.totalorder %s71, %s85
    %p87 = scmp.eq.s32.totalorder %s19, 0
    %p88 = por %p86, %p87
    %s90 = sadd.s32 %s89, 1
    %p93 = scmp.eq.s32.totalorder %s13, 1
    %p94 = scmp.ne.s32.totalorder %s89, %s91
    %p95 = scmp.eq.s32.totalorder %s13, 0
    %p96 = por %p94, %p95
    %p97 = scmp.ne.s32.totalorder %s89, %s91
    %p98 = scmp.eq.s32.totalorder %s18, 1
    %p99 = por %p97, %p98
    %p100 = scmp.ne.s32.totalorder %s91, %s92
    %p101 = scmp.eq.s32.totalorder %s18, 0
    %p102 = por %p100, %p101
    %p103 = scmp.ne.s32.totalorder %s91, %s92
    %p104 = scmp.eq.s32.totalorder %s19, 1
    %p105 = por %p103, %p104
    %p107 = scmp.ne.s32.totalorder %s92, %s106
    %p108 = scmp.eq.s32.totalorder %s19, 0
    %p109 = por %p107, %p108
    %s111 = sadd.s32 %s110, 1
    %p114 = scmp.eq.s32.totalorder %s13, 1
    %p115 = scmp.ne.s32.totalorder %s110, %s112
    %p116 = scmp.eq.s32.totalorder %s13, 0
    %p117 = por %p115, %p116
    %p118 = scmp.ne.s32.totalorder %s110, %s112
    %p119 = scmp.eq.s32.totalorder %s18, 1
    %p120 = por %p118, %p119
    %p121 = scmp.ne.s32.totalorder %s112, %s113
    %p122 = scmp.eq.s32.totalorder %s18, 0
    %p123 = por %p121, %p122
    %p124 = scmp.ne.s32.totalorder %s112, %s113
    %p125 = scmp.eq.s32.totalorder %s19, 1
    %p126 = por %p124, %p125
    %p128 = scmp.ne.s32.totalorder %s113, %s127
    %p129 = scmp.eq.s32.totalorder %s19, 0
    %p130 = por %p128, %p129
    %s132 = sadd.s32 %s131, 1
    %p135 = scmp.eq.s32.totalorder %s13, 1
    %p136 = scmp.ne.s32.totalorder %s131, %s133
    %p137 = scmp.eq.s32.totalorder %s13, 0
    %p138 = por %p136, %p137
    %p139 = scmp.ne.s32.totalorder %s131, %s133
    %p140 = scmp.eq.s32.totalorder %s18, 1
    %p141 = por %p139, %p140
    %p142 = scmp.ne.s32.totalorder %s133, %s134
    %p143 = scmp.eq.s32.totalorder %s18, 0
    %p144 = por %p142, %p143
    %p145 = scmp.ne.s32.totalorder %s133, %s134
    %p146 = scmp.eq.s32.totalorder %s19, 1
    %p147 = por %p145, %p146
    %p149 = scmp.ne.s32.totalorder %s134, %s148
    %p150 = scmp.eq.s32.totalorder %s19, 0
    %p151 = por %p149, %p150
    %s153 = sadd.s32 %s152, 1
    %p156 = scmp.eq.s32.totalorder %s13, 1
    %p157 = scmp.ne.s32.totalorder %s152, %s154
    %p158 = scmp.eq.s32.totalorder %s13, 0
    %p159 = por %p157, %p158
    %p160 = scmp.ne.s32.totalorder %s152, %s154
    %p161 = scmp.eq.s32.totalorder %s18, 1
    %p162 = por %p160, %p161
    %p163 = scmp.ne.s32.totalorder %s154, %s155
    %p164 = scmp.eq.s32.totalorder %s18, 0
    %p165 = por %p163, %p164
    %p166 = scmp.ne.s32.totalorder %s154, %s155
    %p167 = scmp.eq.s32.totalorder %s19, 1
    %p168 = por %p166, %p167
    %p170 = scmp.ne.s32.totalorder %s155, %s169
    %p171 = scmp.eq.s32.totalorder %s19, 0
    %p172 = por %p170, %p171
    %s173 = ssub.s32 %s13, %s20
    %p174 = scmp.eq.s32.totalorder %s173, 0
    %s176 = sadd.s32 %s175, 1
    %s177 = scalar_select %p174, %s175, %s176
    %p180 = pneg %p174
    %p181 = scmp.eq.s32.totalorder %s13, 1
    %p182 = por %p180, %p181
    %p183 = scmp.ne.s32.totalorder %s175, %s178
    %p184 = scmp.eq.s32.totalorder %s13, 0
    %p185 = por %p183, %p184
    %p186 = scmp.ne.s32.totalorder %s175, %s178
    %p187 = scmp.eq.s32.totalorder %s18, 1
    %p188 = por %p186, %p187
    %p189 = scmp.ne.s32.totalorder %s178, %s179
    %p190 = scmp.eq.s32.totalorder %s18, 0
    %p191 = por %p189, %p190
    %p192 = scmp.ne.s32.totalorder %s178, %s179
    %p193 = scmp.eq.s32.totalorder %s19, 1
    %p194 = por %p192, %p193
    %p196 = scmp.ne.s32.totalorder %s179, %s195
    %p197 = scmp.eq.s32.totalorder %s19, 0
    %p198 = por %p196, %p197
    %p199 = scmp.le.s32.totalorder 1, %s13
    %p200 = scmp.lt.s32.totalorder %s13, 3
    %p201 = pnand %p199, %p200
    %p202 = pneg %p201
    // Predicated region
    $region9: #{_lambda_.1} parent=5 // pred_check
      _
    $region10: #{_lambda_.1} parent=5 // pred_check_branch
      %204 = sbr.rel (%p201) target = $region12
    $region11: #{_lambda_.1} parent=5 // pred_region
      %s205 = ssub.s32 %s13, 1
      // Predicated region
      $region13: #{_lambda_.1} parent=11 // pred_check
        %p206 = pneg %p60
      $region14: #{_lambda_.1} parent=11 // pred_check_branch
        %208 = sbr.rel (%p206) target = $region16
      $region15: #{_lambda_.1} parent=11 // pred_region
        _
      $region16: #{_lambda_.1} parent=11 // pred_fallthru
        _
      // Predicated region
      $region17: #{_lambda_.1} parent=11 // pred_check
        %p209 = pneg %p81
      $region18: #{_lambda_.1} parent=11 // pred_check_branch
        %211 = sbr.rel (%p209) target = $region20
      $region19: #{_lambda_.1} parent=11 // pred_region
        _
      $region20: #{_lambda_.1} parent=11 // pred_fallthru
        _
      // Predicated region
      $region21: #{_lambda_.1} parent=11 // pred_check
        %p212 = pneg %p102
      $region22: #{_lambda_.1} parent=11 // pred_check_branch
        %214 = sbr.rel (%p212) target = $region24
      $region23: #{_lambda_.1} parent=11 // pred_region
        _
      $region24: #{_lambda_.1} parent=11 // pred_fallthru
        _
      // Predicated region
      $region25: #{_lambda_.1} parent=11 // pred_check
        %p215 = pneg %p123
      $region26: #{_lambda_.1} parent=11 // pred_check_branch
        %217 = sbr.rel (%p215) target = $region28
      $region27: #{_lambda_.1} parent=11 // pred_region
        _
      $region28: #{_lambda_.1} parent=11 // pred_fallthru
        _
      // Predicated region
      $region29: #{_lambda_.1} parent=11 // pred_check
        %p218 = pneg %p144
      $region30: #{_lambda_.1} parent=11 // pred_check_branch
        %220 = sbr.rel (%p218) target = $region32
      $region31: #{_lambda_.1} parent=11 // pred_region
        _
      $region32: #{_lambda_.1} parent=11 // pred_fallthru
        _
      // Predicated region
      $region33: #{_lambda_.1} parent=11 // pred_check
        %p221 = pneg %p165
      $region34: #{_lambda_.1} parent=11 // pred_check_branch
        %223 = sbr.rel (%p221) target = $region36
      $region35: #{_lambda_.1} parent=11 // pred_region
        _
      $region36: #{_lambda_.1} parent=11 // pred_fallthru
        _
    $region12: #{_lambda_.1} parent=5 // pred_fallthru
      _
    %p224 = scmp.lt.s32.totalorder %s13, 2
    // Predicated region
    $region37: #{_lambda_.1} parent=5 // pred_check
      %p225 = pneg %p224
    $region38: #{_lambda_.1} parent=5 // pred_check_branch
      %227 = sbr.rel (%p225) target = $region40
    $region39: #{_lambda_.1} parent=5 // pred_region
      // Predicated region
      $region41: #{_lambda_.1} parent=39 // pred_check
        %p228 = pneg %p33
      $region42: #{_lambda_.1} parent=39 // pred_check_branch
        %230 = sbr.rel (%p228) target = $region44
      $region43: #{_lambda_.1} parent=39 // pred_region
        %p231 = scmp.lt.s32.totalorder %s13, 1
        %s232 = scalar_select %p231, %s13, 1
        %s233 = smul.addr %s232, 72
        %s234 = smul.addr %s233, 4
        %s235 = scalar_lea.vmem %s0, %s234
      $region44: #{_lambda_.1} parent=39 // pred_fallthru
        _
    $region40: #{_lambda_.1} parent=5 // pred_fallthru
      _
    %p236 = scmp.le.s32.totalorder 1, %s13
    %p237 = scmp.lt.s32.totalorder %s13, 3
    %p238 = pnand %p236, %p237
    %p239 = pneg %p238
    // Predicated region
    $region45: #{_lambda_.1} parent=5 // pred_check
      _
    $region46: #{_lambda_.1} parent=5 // pred_check_branch
      %241 = sbr.rel (%p238) target = $region48
    $region47: #{_lambda_.1} parent=5 // pred_region
      %s242 = ssub.s32 %s13, 1
      %p243 = scmp.lt.s32.totalorder %s18, 1
      %s244 = scalar_select %p243, %s18, 1
      %s245 = smul.addr %s244, 72
      %s246 = smul.addr %s245, 4
      %s247 = scalar_lea.vmem %s0, %s246
      %p248 = pneg %p39
      %p249 = pneg %p36
      %p250 = pneg %p60
      %p251 = pneg %p57
      %p252 = pneg %p81
      %p253 = pneg %p78
      %p254 = pneg %p102
      %p255 = pneg %p99
      %p256 = pneg %p123
      %p257 = pneg %p120
      %p258 = pneg %p144
      %p259 = pneg %p141
      %p260 = pneg %p165
      %p261 = pneg %p162
      %p262 = pneg %p191
      %p263 = pneg %p188
      %p264 = scmp.lt.s32.totalorder %s18, 1
      %s265 = scalar_select %p264, %s18, 1
      %s266 = smul.addr %s265, 8
      %s267 = smul.addr %s266, 4
      %s268 = scalar_lea.vmem %s7, %s267
      %p269 = scmp.lt.s32.totalorder %s18, 1
      %s270 = scalar_select %p269, %s18, 1
      %s271 = smul.addr %s270, 72
      %s272 = smul.addr %s271, 4
      %s273 = scalar_lea.vmem %s0, %s272
      %p274 = scmp.lt.s32.totalorder %s18, 1
      %s275 = scalar_select %p274, %s18, 1
      %s276 = smul.addr %s275, 8
      %s277 = smul.addr %s276, 4
      %s278 = scalar_lea.vmem %s7, %s277
      %280 = vst [vmem:[#allocation2] sm:$0xf] 0
      %281 = vst [vmem:[#allocation2 + $0x4] sm:$0x1] 0
      %s282 = scalar_lea.vmem [#allocation2], 72
      %283 = vst [vmem:[%s282] sm:$0xf] 0
      %284 = vst [vmem:[%s282 + $0x4] sm:$0x1] 0
      %vm285 = vcmask 1040384
      %vm286 = vsmask.f32 256
      %vm287 = vmand %vm285, %vm286
      %v288 = vld [vmem:[#allocation2] sm:$0x1]
      %v289 = vsel %vm287, 0, %v288
      %290 = vst [vmem:[#allocation2] sm:$0x1] %v289
      %v291 = vld [vmem:[#allocation2 + $0x8] sm:$0x1]
      %v292 = vsel %vm287, 0, %v291
      %293 = vst [vmem:[#allocation2 + $0x8] sm:$0x1] %v292
      %v294 = vld [vmem:[#allocation2 + $0x10] sm:$0x1]
      %v295 = vsel %vm287, 0, %v294
      %296 = vst [vmem:[#allocation2 + $0x10] sm:$0x1] %v295
      %v297 = vld [vmem:[#allocation2 + $0x18] sm:$0x1]
      %v298 = vsel %vm287, 0, %v297
      %299 = vst [vmem:[#allocation2 + $0x18] sm:$0x1] %v298
      %v300 = vld [vmem:[#allocation2 + $0x20] sm:$0x1]
      %v301 = vsel %vm287, 0, %v300
      %302 = vst [vmem:[#allocation2 + $0x20] sm:$0x1] %v301
      %v303 = vld [vmem:[#allocation2 + $0x28] sm:$0x1]
      %v304 = vsel %vm287, 0, %v303
      %305 = vst [vmem:[#allocation2 + $0x28] sm:$0x1] %v304
      %v306 = vld [vmem:[#allocation2 + $0x30] sm:$0x1]
      %v307 = vsel %vm287, 0, %v306
      %308 = vst [vmem:[#allocation2 + $0x30] sm:$0x1] %v307
      %v309 = vld [vmem:[#allocation2 + $0x38] sm:$0x1]
      %v310 = vsel %vm287, 0, %v309
      %311 = vst [vmem:[#allocation2 + $0x38] sm:$0x1] %v310
      %v312 = vld [vmem:[#allocation2 + $0x40] sm:$0x1]
      %v313 = vsel %vm287, 0, %v312
      %314 = vst [vmem:[#allocation2 + $0x40] sm:$0x1] %v313
      %v315 = vld [vmem:[#allocation2 + $0x48] sm:$0x1]
      %v316 = vsel %vm287, 0, %v315
      %317 = vst [vmem:[#allocation2 + $0x48] sm:$0x1] %v316
      %vm318 = vsmask.f32 7938
      %vm319 = vmand %vm285, %vm318
      %v320 = vld [vmem:[#allocation2 + $0x4] sm:$0x1]
      %v321 = vsel %vm319, 0, %v320
      %322 = vst [vmem:[#allocation2 + $0x4] sm:$0x1] %v321
      %v323 = vld [vmem:[#allocation2 + $0xc] sm:$0x1]
      %v324 = vsel %vm319, 0, %v323
      %325 = vst [vmem:[#allocation2 + $0xc] sm:$0x1] %v324
      %v326 = vld [vmem:[#allocation2 + $0x14] sm:$0x1]
      %v327 = vsel %vm319, 0, %v326
      %328 = vst [vmem:[#allocation2 + $0x14] sm:$0x1] %v327
      %v329 = vld [vmem:[#allocation2 + $0x1c] sm:$0x1]
      %v330 = vsel %vm319, 0, %v329
      %331 = vst [vmem:[#allocation2 + $0x1c] sm:$0x1] %v330
      %v332 = vld [vmem:[#allocation2 + $0x24] sm:$0x1]
      %v333 = vsel %vm319, 0, %v332
      %334 = vst [vmem:[#allocation2 + $0x24] sm:$0x1] %v333
      %v335 = vld [vmem:[#allocation2 + $0x2c] sm:$0x1]
      %v336 = vsel %vm319, 0, %v335
      %337 = vst [vmem:[#allocation2 + $0x2c] sm:$0x1] %v336
      %v338 = vld [vmem:[#allocation2 + $0x34] sm:$0x1]
      %v339 = vsel %vm319, 0, %v338
      %340 = vst [vmem:[#allocation2 + $0x34] sm:$0x1] %v339
      %v341 = vld [vmem:[#allocation2 + $0x3c] sm:$0x1]
      %v342 = vsel %vm319, 0, %v341
      %343 = vst [vmem:[#allocation2 + $0x3c] sm:$0x1] %v342
      %v344 = vld [vmem:[#allocation2 + $0x44] sm:$0x1]
      %v345 = vsel %vm319, 0, %v344
      %346 = vst [vmem:[#allocation2 + $0x44] sm:$0x1] %v345
      %v347 = vld [vmem:[#allocation2 + $0x4c] sm:$0x1]
      %v348 = vsel %vm319, 0, %v347
      %349 = vst [vmem:[#allocation2 + $0x4c] sm:$0x1] %v348
      %350 = vst [vmem:[#allocation3] sm:$0xf] 0
      %351 = vst [vmem:[#allocation3 + $0x4] sm:$0x1] 0
      %s352 = scalar_lea.vmem [#allocation3], 72
      %353 = vst [vmem:[%s352] sm:$0xf] 0
      %354 = vst [vmem:[%s352 + $0x4] sm:$0x1] 0
      %v355 = vld [vmem:[#allocation3] sm:$0x1]
      %v356 = vsel %vm287, 0, %v355
      %357 = vst [vmem:[#allocation3] sm:$0x1] %v356
      %v358 = vld [vmem:[#allocation3 + $0x8] sm:$0x1]
      %v359 = vsel %vm287, 0, %v358
      %360 = vst [vmem:[#allocation3 + $0x8] sm:$0x1] %v359
      %v361 = vld [vmem:[#allocation3 + $0x10] sm:$0x1]
      %v362 = vsel %vm287, 0, %v361
      %363 = vst [vmem:[#allocation3 + $0x10] sm:$0x1] %v362
      %v364 = vld [vmem:[#allocation3 + $0x18] sm:$0x1]
      %v365 = vsel %vm287, 0, %v364
      %366 = vst [vmem:[#allocation3 + $0x18] sm:$0x1] %v365
      %v367 = vld [vmem:[#allocation3 + $0x20] sm:$0x1]
      %v368 = vsel %vm287, 0, %v367
      %369 = vst [vmem:[#allocation3 + $0x20] sm:$0x1] %v368
      %v370 = vld [vmem:[#allocation3 + $0x28] sm:$0x1]
      %v371 = vsel %vm287, 0, %v370
      %372 = vst [vmem:[#allocation3 + $0x28] sm:$0x1] %v371
      %v373 = vld [vmem:[#allocation3 + $0x30] sm:$0x1]
      %v374 = vsel %vm287, 0, %v373
      %375 = vst [vmem:[#allocation3 + $0x30] sm:$0x1] %v374
      %v376 = vld [vmem:[#allocation3 + $0x38] sm:$0x1]
      %v377 = vsel %vm287, 0, %v376
      %378 = vst [vmem:[#allocation3 + $0x38] sm:$0x1] %v377
      %v379 = vld [vmem:[#allocation3 + $0x40] sm:$0x1]
      %v380 = vsel %vm287, 0, %v379
      %381 = vst [vmem:[#allocation3 + $0x40] sm:$0x1] %v380
      %v382 = vld [vmem:[#allocation3 + $0x48] sm:$0x1]
      %v383 = vsel %vm287, 0, %v382
      %384 = vst [vmem:[#allocation3 + $0x48] sm:$0x1] %v383
      %v385 = vld [vmem:[#allocation3 + $0x4] sm:$0x1]
      %v386 = vsel %vm319, 0, %v385
      %387 = vst [vmem:[#allocation3 + $0x4] sm:$0x1] %v386
      %v388 = vld [vmem:[#allocation3 + $0xc] sm:$0x1]
      %v389 = vsel %vm319, 0, %v388
      %390 = vst [vmem:[#allocation3 + $0xc] sm:$0x1] %v389
      %v391 = vld [vmem:[#allocation3 + $0x14] sm:$0x1]
      %v392 = vsel %vm319, 0, %v391
      %393 = vst [vmem:[#allocation3 + $0x14] sm:$0x1] %v392
      %v394 = vld [vmem:[#allocation3 + $0x1c] sm:$0x1]
      %v395 = vsel %vm319, 0, %v394
      %396 = vst [vmem:[#allocation3 + $0x1c] sm:$0x1] %v395
      %v397 = vld [vmem:[#allocation3 + $0x24] sm:$0x1]
      %v398 = vsel %vm319, 0, %v397
      %399 = vst [vmem:[#allocation3 + $0x24] sm:$0x1] %v398
      %v400 = vld [vmem:[#allocation3 + $0x2c] sm:$0x1]
      %v401 = vsel %vm319, 0, %v400
      %402 = vst [vmem:[#allocation3 + $0x2c] sm:$0x1] %v401
      %v403 = vld [vmem:[#allocation3 + $0x34] sm:$0x1]
      %v404 = vsel %vm319, 0, %v403
      %405 = vst [vmem:[#allocation3 + $0x34] sm:$0x1] %v404
      %v406 = vld [vmem:[#allocation3 + $0x3c] sm:$0x1]
      %v407 = vsel %vm319, 0, %v406
      %408 = vst [vmem:[#allocation3 + $0x3c] sm:$0x1] %v407
      %v409 = vld [vmem:[#allocation3 + $0x44] sm:$0x1]
      %v410 = vsel %vm319, 0, %v409
      %411 = vst [vmem:[#allocation3 + $0x44] sm:$0x1] %v410
      %v412 = vld [vmem:[#allocation3 + $0x4c] sm:$0x1]
      %v413 = vsel %vm319, 0, %v412
      %414 = vst [vmem:[#allocation3 + $0x4c] sm:$0x1] %v413
      %v415 = vld [vmem:[%s273] sm:$0xf]
      %v416 = vld [vmem:[%s273 + $0x8] sm:$0xf]
      %v417 = vld [vmem:[%s273 + $0x10] sm:$0xf]
      %v418 = vld [vmem:[%s273 + $0x18] sm:$0xf]
      %v419 = vld [vmem:[%s273 + $0x20] sm:$0xf]
      %v420 = vld [vmem:[%s273 + $0x28] sm:$0xf]
      %v421 = vld [vmem:[%s273 + $0x30] sm:$0xf]
      %v422 = vld [vmem:[%s273 + $0x38] sm:$0xf]
      %s423 = scalar_lea.vmem %s273, 72
      %v424 = vld [vmem:[%s423] sm:$0xf]
      %v425 = vld [vmem:[%s423 + $0x8] sm:$0xf]
      %v426 = vld [vmem:[%s423 + $0x10] sm:$0xf]
      %v427 = vld [vmem:[%s423 + $0x18] sm:$0xf]
      %v428 = vld [vmem:[%s423 + $0x20] sm:$0xf]
      %v429 = vld [vmem:[%s423 + $0x28] sm:$0xf]
      %v430 = vld [vmem:[%s423 + $0x30] sm:$0xf]
      %v431 = vld [vmem:[%s423 + $0x38] sm:$0xf]
      %v432 = vld [vmem:[%s273 + $0x4] sm:$0x1]
      %v433 = vld [vmem:[%s273 + $0xc] sm:$0x1]
      %v434 = vld [vmem:[%s273 + $0x14] sm:$0x1]
      %v435 = vld [vmem:[%s273 + $0x1c] sm:$0x1]
      %v436 = vld [vmem:[%s273 + $0x24] sm:$0x1]
      %v437 = vld [vmem:[%s273 + $0x2c] sm:$0x1]
      %v438 = vld [vmem:[%s273 + $0x34] sm:$0x1]
      %v439 = vld [vmem:[%s273 + $0x3c] sm:$0x1]
      %s440 = scalar_lea.vmem %s273, 144
      %v441 = vld [vmem:[%s440] sm:$0xf]
      %v442 = vld [vmem:[%s440 + $0x8] sm:$0xf]
      %v443 = vld [vmem:[%s440 + $0x10] sm:$0xf]
      %v444 = vld [vmem:[%s440 + $0x18] sm:$0xf]
      %v445 = vld [vmem:[%s440 + $0x20] sm:$0xf]
      %v446 = vld [vmem:[%s440 + $0x28] sm:$0xf]
      %v447 = vld [vmem:[%s440 + $0x30] sm:$0xf]
      %v448 = vld [vmem:[%s440 + $0x38] sm:$0xf]
      %s449 = scalar_lea.vmem %s273, 216
      %v450 = vld [vmem:[%s449] sm:$0xf]
      %v451 = vld [vmem:[%s449 + $0x8] sm:$0xf]
      %v452 = vld [vmem:[%s449 + $0x10] sm:$0xf]
      %v453 = vld [vmem:[%s449 + $0x18] sm:$0xf]
      %v454 = vld [vmem:[%s449 + $0x20] sm:$0xf]
      %v455 = vld [vmem:[%s449 + $0x28] sm:$0xf]
      %v456 = vld [vmem:[%s449 + $0x30] sm:$0xf]
      %v457 = vld [vmem:[%s449 + $0x38] sm:$0xf]
      %v458 = vld [vmem:[%s440 + $0x4] sm:$0x1]
      %v459 = vld [vmem:[%s440 + $0xc] sm:$0x1]
      %v460 = vld [vmem:[%s440 + $0x14] sm:$0x1]
      %v461 = vld [vmem:[%s440 + $0x1c] sm:$0x1]
      %v462 = vld [vmem:[%s440 + $0x24] sm:$0x1]
      %v463 = vld [vmem:[%s440 + $0x2c] sm:$0x1]
      %v464 = vld [vmem:[%s440 + $0x34] sm:$0x1]
      %v465 = vld [vmem:[%s440 + $0x3c] sm:$0x1]
      %s466 = scalar_lea.vmem %s273, 8
      %v467 = vld [vmem:[%s466] sm:$0xf]
      %v468 = vld [vmem:[%s466 + $0x8] sm:$0xf]
      %v469 = vld [vmem:[%s466 + $0x10] sm:$0xf]
      %v470 = vld [vmem:[%s466 + $0x18] sm:$0xf]
      %v471 = vld [vmem:[%s466 + $0x20] sm:$0xf]
      %v472 = vld [vmem:[%s466 + $0x28] sm:$0xf]
      %v473 = vld [vmem:[%s466 + $0x30] sm:$0xf]
      %v474 = vld [vmem:[%s466 + $0x38] sm:$0xf]
      %s475 = scalar_lea.vmem %s273, 80
      %v476 = vld [vmem:[%s475] sm:$0xf]
      %v477 = vld [vmem:[%s475 + $0x8] sm:$0xf]
      %v478 = vld [vmem:[%s475 + $0x10] sm:$0xf]
      %v479 = vld [vmem:[%s475 + $0x18] sm:$0xf]
      %v480 = vld [vmem:[%s475 + $0x20] sm:$0xf]
      %v481 = vld [vmem:[%s475 + $0x28] sm:$0xf]
      %v482 = vld [vmem:[%s475 + $0x30] sm:$0xf]
      %v483 = vld [vmem:[%s475 + $0x38] sm:$0xf]
      %v484 = vld [vmem:[%s466 + $0x4] sm:$0x1]
      %v485 = vld [vmem:[%s466 + $0xc] sm:$0x1]
      %v486 = vld [vmem:[%s466 + $0x14] sm:$0x1]
      %v487 = vld [vmem:[%s466 + $0x1c] sm:$0x1]
      %v488 = vld [vmem:[%s466 + $0x24] sm:$0x1]
      %v489 = vld [vmem:[%s466 + $0x2c] sm:$0x1]
      %v490 = vld [vmem:[%s466 + $0x34] sm:$0x1]
      %v491 = vld [vmem:[%s466 + $0x3c] sm:$0x1]
      %v508 = vunpack.c.l.b16 %v415
      %v509 = vunpack.c.l.b16 %v432
      %v510 = vunpack.c.l.b16 %v416
      %v511 = vunpack.c.l.b16 %v433
      %v512 = vunpack.c.l.b16 %v417
      %v513 = vunpack.c.l.b16 %v434
      %v514 = vunpack.c.l.b16 %v418
      %v515 = vunpack.c.l.b16 %v435
      %v516 = vunpack.c.l.b16 %v419
      %v517 = vunpack.c.l.b16 %v436
      %v518 = vunpack.c.l.b16 %v420
      %v519 = vunpack.c.l.b16 %v437
      %v520 = vunpack.c.l.b16 %v421
      %v521 = vunpack.c.l.b16 %v438
      %v522 = vunpack.c.l.b16 %v422
      %v523 = vunpack.c.l.b16 %v439
      %v524 = vpack.c.b16 %v509, %v508
      %v525 = vpack.c.b16 %v511, %v510
      %v526 = vpack.c.b16 %v513, %v512
      %v527 = vpack.c.b16 %v515, %v514
      %v528 = vpack.c.b16 %v517, %v516
      %v529 = vpack.c.b16 %v519, %v518
      %v530 = vpack.c.b16 %v521, %v520
      %v531 = vpack.c.b16 %v523, %v522
      %v533 = vshrl.u32 %v524, 16
      %v535 = vshll.u32 %v524, 16
      %v537 = vrot.slane %v535, 1
      %v538 = vor.u32 %v533, %v537
      %v540 = vshrl.u32 %v525, 16
      %v542 = vshll.u32 %v525, 16
      %v544 = vrot.slane %v542, 1
      %v545 = vor.u32 %v540, %v544
      %v547 = vshrl.u32 %v526, 16
      %v549 = vshll.u32 %v526, 16
      %v551 = vrot.slane %v549, 1
      %v552 = vor.u32 %v547, %v551
      %v554 = vshrl.u32 %v527, 16
      %v556 = vshll.u32 %v527, 16
      %v558 = vrot.slane %v556, 1
      %v559 = vor.u32 %v554, %v558
      %v561 = vshrl.u32 %v528, 16
      %v563 = vshll.u32 %v528, 16
      %v565 = vrot.slane %v563, 1
      %v566 = vor.u32 %v561, %v565
      %v568 = vshrl.u32 %v529, 16
      %v570 = vshll.u32 %v529, 16
      %v572 = vrot.slane %v570, 1
      %v573 = vor.u32 %v568, %v572
      %v575 = vshrl.u32 %v530, 16
      %v577 = vshll.u32 %v530, 16
      %v579 = vrot.slane %v577, 1
      %v580 = vor.u32 %v575, %v579
      %v582 = vshrl.u32 %v531, 16
      %v584 = vshll.u32 %v531, 16
      %v586 = vrot.slane %v584, 1
      %v587 = vor.u32 %v582, %v586
      %v604 = vunpack.c.l.b16 %v441
      %v605 = vunpack.c.l.b16 %v458
      %v606 = vunpack.c.l.b16 %v442
      %v607 = vunpack.c.l.b16 %v459
      %v608 = vunpack.c.l.b16 %v443
      %v609 = vunpack.c.l.b16 %v460
      %v610 = vunpack.c.l.b16 %v444
      %v611 = vunpack.c.l.b16 %v461
      %v612 = vunpack.c.l.b16 %v445
      %v613 = vunpack.c.l.b16 %v462
      %v614 = vunpack.c.l.b16 %v446
      %v615 = vunpack.c.l.b16 %v463
      %v616 = vunpack.c.l.b16 %v447
      %v617 = vunpack.c.l.b16 %v464
      %v618 = vunpack.c.l.b16 %v448
      %v619 = vunpack.c.l.b16 %v465
      %v620 = vpack.c.b16 %v605, %v604
      %v621 = vpack.c.b16 %v607, %v606
      %v622 = vpack.c.b16 %v609, %v608
      %v623 = vpack.c.b16 %v611, %v610
      %v624 = vpack.c.b16 %v613, %v612
      %v625 = vpack.c.b16 %v615, %v614
      %v626 = vpack.c.b16 %v617, %v616
      %v627 = vpack.c.b16 %v619, %v618
      %v629 = vshrl.u32 %v620, 16
      %v631 = vshll.u32 %v620, 16
      %v633 = vrot.slane %v631, 1
      %v634 = vor.u32 %v629, %v633
      %v636 = vshrl.u32 %v621, 16
      %v638 = vshll.u32 %v621, 16
      %v640 = vrot.slane %v638, 1
      %v641 = vor.u32 %v636, %v640
      %v643 = vshrl.u32 %v622, 16
      %v645 = vshll.u32 %v622, 16
      %v647 = vrot.slane %v645, 1
      %v648 = vor.u32 %v643, %v647
      %v650 = vshrl.u32 %v623, 16
      %v652 = vshll.u32 %v623, 16
      %v654 = vrot.slane %v652, 1
      %v655 = vor.u32 %v650, %v654
      %v657 = vshrl.u32 %v624, 16
      %v659 = vshll.u32 %v624, 16
      %v661 = vrot.slane %v659, 1
      %v662 = vor.u32 %v657, %v661
      %v664 = vshrl.u32 %v625, 16
      %v666 = vshll.u32 %v625, 16
      %v668 = vrot.slane %v666, 1
      %v669 = vor.u32 %v664, %v668
      %v671 = vshrl.u32 %v626, 16
      %v673 = vshll.u32 %v626, 16
      %v675 = vrot.slane %v673, 1
      %v676 = vor.u32 %v671, %v675
      %v678 = vshrl.u32 %v627, 16
      %v680 = vshll.u32 %v627, 16
      %v682 = vrot.slane %v680, 1
      %v683 = vor.u32 %v678, %v682
      %v700 = vunpack.c.l.b16 %v467
      %v701 = vunpack.c.l.b16 %v484
      %v702 = vunpack.c.l.b16 %v468
      %v703 = vunpack.c.l.b16 %v485
      %v704 = vunpack.c.l.b16 %v469
      %v705 = vunpack.c.l.b16 %v486
      %v706 = vunpack.c.l.b16 %v470
      %v707 = vunpack.c.l.b16 %v487
      %v708 = vunpack.c.l.b16 %v471
      %v709 = vunpack.c.l.b16 %v488
      %v710 = vunpack.c.l.b16 %v472
      %v711 = vunpack.c.l.b16 %v489
      %v712 = vunpack.c.l.b16 %v473
      %v713 = vunpack.c.l.b16 %v490
      %v714 = vunpack.c.l.b16 %v474
      %v715 = vunpack.c.l.b16 %v491
      %v716 = vpack.c.b16 %v701, %v700
      %v717 = vpack.c.b16 %v703, %v702
      %v718 = vpack.c.b16 %v705, %v704
      %v719 = vpack.c.b16 %v707, %v706
      %v720 = vpack.c.b16 %v709, %v708
      %v721 = vpack.c.b16 %v711, %v710
      %v722 = vpack.c.b16 %v713, %v712
      %v723 = vpack.c.b16 %v715, %v714
      %v725 = vshrl.u32 %v716, 16
      %v727 = vshll.u32 %v716, 16
      %v729 = vrot.slane %v727, 1
      %v730 = vor.u32 %v725, %v729
      %v732 = vshrl.u32 %v717, 16
      %v734 = vshll.u32 %v717, 16
      %v736 = vrot.slane %v734, 1
      %v737 = vor.u32 %v732, %v736
      %v739 = vshrl.u32 %v718, 16
      %v741 = vshll.u32 %v718, 16
      %v743 = vrot.slane %v741, 1
      %v744 = vor.u32 %v739, %v743
      %v746 = vshrl.u32 %v719, 16
      %v748 = vshll.u32 %v719, 16
      %v750 = vrot.slane %v748, 1
      %v751 = vor.u32 %v746, %v750
      %v753 = vshrl.u32 %v720, 16
      %v755 = vshll.u32 %v720, 16
      %v757 = vrot.slane %v755, 1
      %v758 = vor.u32 %v753, %v757
      %v760 = vshrl.u32 %v721, 16
      %v762 = vshll.u32 %v721, 16
      %v764 = vrot.slane %v762, 1
      %v765 = vor.u32 %v760, %v764
      %v767 = vshrl.u32 %v722, 16
      %v769 = vshll.u32 %v722, 16
      %v771 = vrot.slane %v769, 1
      %v772 = vor.u32 %v767, %v771
      %v774 = vshrl.u32 %v723, 16
      %v776 = vshll.u32 %v723, 16
      %v778 = vrot.slane %v776, 1
      %v779 = vor.u32 %v774, %v778
      %v804 = vunpack.c.l.b16 %v424
      %v805 = vunpack.c.l.b16 %v538
      %v806 = vunpack.c.l.b16 %v450
      %v807 = vunpack.c.l.b16 %v634
      %v808 = vunpack.c.l.b16 %v476
      %v809 = vunpack.c.l.b16 %v730
      %v810 = vunpack.c.l.b16 %v425
      %v811 = vunpack.c.l.b16 %v545
      %v812 = vunpack.c.l.b16 %v451
      %v813 = vunpack.c.l.b16 %v641
      %v814 = vunpack.c.l.b16 %v477
      %v815 = vunpack.c.l.b16 %v737
      %v816 = vunpack.c.l.b16 %v426
      %v817 = vunpack.c.l.b16 %v552
      %v818 = vunpack.c.l.b16 %v452
      %v819 = vunpack.c.l.b16 %v648
      %v820 = vunpack.c.l.b16 %v478
      %v821 = vunpack.c.l.b16 %v744
      %v822 = vunpack.c.l.b16 %v427
      %v823 = vunpack.c.l.b16 %v559
      %v824 = vunpack.c.l.b16 %v453
      %v825 = vunpack.c.l.b16 %v655
      %v826 = vunpack.c.l.b16 %v479
      %v827 = vunpack.c.l.b16 %v751
      %v828 = vunpack.c.l.b16 %v428
      %v829 = vunpack.c.l.b16 %v566
      %v830 = vunpack.c.l.b16 %v454
      %v831 = vunpack.c.l.b16 %v662
      %v832 = vunpack.c.l.b16 %v480
      %v833 = vunpack.c.l.b16 %v758
      %v834 = vunpack.c.l.b16 %v429
      %v835 = vunpack.c.l.b16 %v573
      %v836 = vunpack.c.l.b16 %v455
      %v837 = vunpack.c.l.b16 %v669
      %v838 = vunpack.c.l.b16 %v481
      %v839 = vunpack.c.l.b16 %v765
      %v840 = vunpack.c.l.b16 %v430
      %v841 = vunpack.c.l.b16 %v580
      %v842 = vunpack.c.l.b16 %v456
      %v843 = vunpack.c.l.b16 %v676
      %v844 = vunpack.c.l.b16 %v482
      %v845 = vunpack.c.l.b16 %v772
      %v846 = vunpack.c.l.b16 %v431
      %v847 = vunpack.c.l.b16 %v587
      %v848 = vunpack.c.l.b16 %v457
      %v849 = vunpack.c.l.b16 %v683
      %v850 = vunpack.c.l.b16 %v483
      %v851 = vunpack.c.l.b16 %v779
      %v852 = vld [vmem:[%s1] sm:$0xf]
      %v853 = vld [vmem:[%s1 + $0x4] sm:$0xf]
      %v854 = vld [vmem:[%s1 + $0x8] sm:$0xf]
      %v855 = vld [vmem:[%s1 + $0xc] sm:$0xf]
      %v856 = vld [vmem:[%s1 + $0x10] sm:$0xf]
      %v857 = vld [vmem:[%s1 + $0x14] sm:$0xf]
      %v858 = vld [vmem:[%s1 + $0x18] sm:$0xf]
      %v859 = vld [vmem:[%s1 + $0x1c] sm:$0xf]
      %v860 = vld [vmem:[%s1 + $0x20] sm:$0xf]
      %v861 = vld [vmem:[%s1 + $0x24] sm:$0xf]
      %v862 = vld [vmem:[%s1 + $0x28] sm:$0xf]
      %v863 = vld [vmem:[%s1 + $0x2c] sm:$0xf]
      %v864 = vld [vmem:[%s1 + $0x30] sm:$0xf]
      %v865 = vld [vmem:[%s1 + $0x34] sm:$0xf]
      %v866 = vld [vmem:[%s1 + $0x38] sm:$0xf]
      %v867 = vld [vmem:[%s1 + $0x3c] sm:$0xf]
      %v868 = vld [vmem:[%s1 + $0x40] sm:$0xf]
      %v869 = vld [vmem:[%s1 + $0x44] sm:$0xf]
      %v870 = vld [vmem:[%s1 + $0x48] sm:$0xf]
      %v871 = vld [vmem:[%s1 + $0x4c] sm:$0xf]
      %v872 = vld [vmem:[%s1 + $0x50] sm:$0xf]
      %v873 = vld [vmem:[%s1 + $0x54] sm:$0xf]
      %v874 = vld [vmem:[%s1 + $0x58] sm:$0xf]
      %v875 = vld [vmem:[%s1 + $0x5c] sm:$0xf]
      %v876 = vld [vmem:[%s1 + $0x60] sm:$0xf]
      %v877 = vld [vmem:[%s1 + $0x64] sm:$0xf]
      %v878 = vld [vmem:[%s1 + $0x68] sm:$0xf]
      %v879 = vld [vmem:[%s1 + $0x6c] sm:$0xf]
      %v880 = vld [vmem:[%s1 + $0x70] sm:$0xf]
      %v881 = vld [vmem:[%s1 + $0x74] sm:$0xf]
      %v882 = vld [vmem:[%s1 + $0x78] sm:$0xf]
      %v883 = vld [vmem:[%s1 + $0x7c] sm:$0xf]
      %v884 = vld [vmem:[%s1 + $0x80] sm:$0xf]
      %v885 = vld [vmem:[%s1 + $0x84] sm:$0xf]
      %v886 = vld [vmem:[%s1 + $0x88] sm:$0xf]
      %v887 = vld [vmem:[%s1 + $0x8c] sm:$0xf]
      %v888 = vld [vmem:[%s1 + $0x90] sm:$0xf]
      %v889 = vld [vmem:[%s1 + $0x94] sm:$0xf]
      %v890 = vld [vmem:[%s1 + $0x98] sm:$0xf]
      %v891 = vld [vmem:[%s1 + $0x9c] sm:$0xf]
      %v892 = vld [vmem:[%s1 + $0xa0] sm:$0xf]
      %v893 = vld [vmem:[%s1 + $0xa4] sm:$0xf]
      %v894 = vld [vmem:[%s1 + $0xa8] sm:$0xf]
      %v895 = vld [vmem:[%s1 + $0xac] sm:$0xf]
      %v896 = vld [vmem:[%s1 + $0xb0] sm:$0xf]
      %v897 = vld [vmem:[%s1 + $0xb4] sm:$0xf]
      %v898 = vld [vmem:[%s1 + $0xb8] sm:$0xf]
      %v899 = vld [vmem:[%s1 + $0xbc] sm:$0xf]
      %v900 = vld [vmem:[%s1 + $0xc0] sm:$0xf]
      %v901 = vld [vmem:[%s1 + $0xc4] sm:$0xf]
      %v902 = vld [vmem:[%s1 + $0xc8] sm:$0xf]
      %v903 = vld [vmem:[%s1 + $0xcc] sm:$0xf]
      %v904 = vld [vmem:[%s1 + $0xd0] sm:$0xf]
      %v905 = vld [vmem:[%s1 + $0xd4] sm:$0xf]
      %v906 = vld [vmem:[%s1 + $0xd8] sm:$0xf]
      %v907 = vld [vmem:[%s1 + $0xdc] sm:$0xf]
      %v908 = vld [vmem:[%s1 + $0xe0] sm:$0xf]
      %v909 = vld [vmem:[%s1 + $0xe4] sm:$0xf]
      %v910 = vld [vmem:[%s1 + $0xe8] sm:$0xf]
      %v911 = vld [vmem:[%s1 + $0xec] sm:$0xf]
      %v912 = vld [vmem:[%s1 + $0xf0] sm:$0xf]
      %v913 = vld [vmem:[%s1 + $0xf4] sm:$0xf]
      %v914 = vld [vmem:[%s1 + $0xf8] sm:$0xf]
      %v915 = vld [vmem:[%s1 + $0xfc] sm:$0xf]
      %v916 = vld [vmem:[%s1 + $0x100] sm:$0xf]
      %v917 = vld [vmem:[%s1 + $0x104] sm:$0xf]
      %v918 = vld [vmem:[%s1 + $0x108] sm:$0xf]
      %v919 = vld [vmem:[%s1 + $0x10c] sm:$0xf]
      %v920 = vld [vmem:[%s1 + $0x110] sm:$0xf]
      %v921 = vld [vmem:[%s1 + $0x114] sm:$0xf]
      %v922 = vld [vmem:[%s1 + $0x118] sm:$0xf]
      %v923 = vld [vmem:[%s1 + $0x11c] sm:$0xf]
      %v924 = vld [vmem:[%s1 + $0x120] sm:$0xf]
      %v925 = vld [vmem:[%s1 + $0x124] sm:$0xf]
      %v926 = vld [vmem:[%s1 + $0x128] sm:$0xf]
      %v927 = vld [vmem:[%s1 + $0x12c] sm:$0xf]
      %v928 = vld [vmem:[%s1 + $0x130] sm:$0xf]
      %v929 = vld [vmem:[%s1 + $0x134] sm:$0xf]
      %v930 = vld [vmem:[%s1 + $0x138] sm:$0xf]
      %v931 = vld [vmem:[%s1 + $0x13c] sm:$0xf]
      %v932 = vld [vmem:[%s1 + $0x140] sm:$0xf]
      %v933 = vld [vmem:[%s1 + $0x144] sm:$0xf]
      %v934 = vld [vmem:[%s1 + $0x148] sm:$0xf]
      %v935 = vld [vmem:[%s1 + $0x14c] sm:$0xf]
      %v936 = vld [vmem:[%s1 + $0x150] sm:$0xf]
      %v937 = vld [vmem:[%s1 + $0x154] sm:$0xf]
      %v938 = vld [vmem:[%s1 + $0x158] sm:$0xf]
      %v939 = vld [vmem:[%s1 + $0x15c] sm:$0xf]
      %v940 = vld [vmem:[%s1 + $0x160] sm:$0xf]
      %v941 = vld [vmem:[%s1 + $0x164] sm:$0xf]
      %v942 = vld [vmem:[%s1 + $0x168] sm:$0xf]
      %v943 = vld [vmem:[%s1 + $0x16c] sm:$0xf]
      %v944 = vld [vmem:[%s1 + $0x170] sm:$0xf]
      %v945 = vld [vmem:[%s1 + $0x174] sm:$0xf]
      %v946 = vld [vmem:[%s1 + $0x178] sm:$0xf]
      %v947 = vld [vmem:[%s1 + $0x17c] sm:$0xf]
      %v948 = vld [vmem:[%s1 + $0x180] sm:$0xf]
      %v949 = vld [vmem:[%s1 + $0x184] sm:$0xf]
      %v950 = vld [vmem:[%s1 + $0x188] sm:$0xf]
      %v951 = vld [vmem:[%s1 + $0x18c] sm:$0xf]
      %v952 = vld [vmem:[%s1 + $0x190] sm:$0xf]
      %v953 = vld [vmem:[%s1 + $0x194] sm:$0xf]
      %v954 = vld [vmem:[%s1 + $0x198] sm:$0xf]
      %v955 = vld [vmem:[%s1 + $0x19c] sm:$0xf]
      %v956 = vld [vmem:[%s1 + $0x1a0] sm:$0xf]
      %v957 = vld [vmem:[%s1 + $0x1a4] sm:$0xf]
      %v958 = vld [vmem:[%s1 + $0x1a8] sm:$0xf]
      %v959 = vld [vmem:[%s1 + $0x1ac] sm:$0xf]
      %v960 = vld [vmem:[%s1 + $0x1b0] sm:$0xf]
      %v961 = vld [vmem:[%s1 + $0x1b4] sm:$0xf]
      %v962 = vld [vmem:[%s1 + $0x1b8] sm:$0xf]
      %v963 = vld [vmem:[%s1 + $0x1bc] sm:$0xf]
      %v964 = vld [vmem:[%s1 + $0x1c0] sm:$0xf]
      %v965 = vld [vmem:[%s1 + $0x1c4] sm:$0xf]
      %v966 = vld [vmem:[%s1 + $0x1c8] sm:$0xf]
      %v967 = vld [vmem:[%s1 + $0x1cc] sm:$0xf]
      %v968 = vld [vmem:[%s1 + $0x1d0] sm:$0xf]
      %v969 = vld [vmem:[%s1 + $0x1d4] sm:$0xf]
      %v970 = vld [vmem:[%s1 + $0x1d8] sm:$0xf]
      %v971 = vld [vmem:[%s1 + $0x1dc] sm:$0xf]
      %v972 = vld [vmem:[%s1 + $0x1e0] sm:$0xf]
      %v973 = vld [vmem:[%s1 + $0x1e4] sm:$0xf]
      %v974 = vld [vmem:[%s1 + $0x1e8] sm:$0xf]
      %v975 = vld [vmem:[%s1 + $0x1ec] sm:$0xf]
      %v976 = vld [vmem:[%s1 + $0x1f0] sm:$0xf]
      %v977 = vld [vmem:[%s1 + $0x1f4] sm:$0xf]
      %v978 = vld [vmem:[%s1 + $0x1f8] sm:$0xf]
      %v979 = vld [vmem:[%s1 + $0x1fc] sm:$0xf]
      %v980 = vld [vmem:[%s1 + $0x200] sm:$0xf]
      %v981 = vld [vmem:[%s1 + $0x204] sm:$0xf]
      %v982 = vld [vmem:[%s1 + $0x208] sm:$0xf]
      %v983 = vld [vmem:[%s1 + $0x20c] sm:$0xf]
      %v984 = vld [vmem:[%s1 + $0x210] sm:$0xf]
      %v985 = vld [vmem:[%s1 + $0x214] sm:$0xf]
      %v986 = vld [vmem:[%s1 + $0x218] sm:$0xf]
      %v987 = vld [vmem:[%s1 + $0x21c] sm:$0xf]
      %v988 = vld [vmem:[%s1 + $0x220] sm:$0xf]
      %v989 = vld [vmem:[%s1 + $0x224] sm:$0xf]
      %v990 = vld [vmem:[%s1 + $0x228] sm:$0xf]
      %v991 = vld [vmem:[%s1 + $0x22c] sm:$0xf]
      %v992 = vld [vmem:[%s1 + $0x230] sm:$0xf]
      %v993 = vld [vmem:[%s1 + $0x234] sm:$0xf]
      %v994 = vld [vmem:[%s1 + $0x238] sm:$0xf]
      %v995 = vld [vmem:[%s1 + $0x23c] sm:$0xf]
      %v996 = vld [vmem:[%s2] sm:$0x1]
      %v998 = vperm.slane %v996, 0
      %v1000 = vpack.c.b16 %v510, %v508
      %v1001 = vpack.c.b16 %v810, %v804
      %v1002 = vpack.c.b16 %v811, %v805
      %v1003 = vpack.c.b16 %v606, %v604
      %v1004 = vpack.c.b16 %v812, %v806
      %v1005 = vpack.c.b16 %v813, %v807
      %v1006 = vpack.c.b16 %v702, %v700
      %v1007 = vpack.c.b16 %v814, %v808
      %v1008 = vpack.c.b16 %v815, %v809
      %v1009 = vpack.c.b16 %v514, %v512
      %v1010 = vpack.c.b16 %v822, %v816
      %v1011 = vpack.c.b16 %v823, %v817
      %v1012 = vpack.c.b16 %v610, %v608
      %v1013 = vpack.c.b16 %v824, %v818
      %v1014 = vpack.c.b16 %v825, %v819
      %v1015 = vpack.c.b16 %v706, %v704
      %v1016 = vpack.c.b16 %v826, %v820
      %v1017 = vpack.c.b16 %v827, %v821
      %v1018 = vpack.c.b16 %v518, %v516
      %v1019 = vpack.c.b16 %v834, %v828
      %v1020 = vpack.c.b16 %v835, %v829
      %v1021 = vpack.c.b16 %v614, %v612
      %v1022 = vpack.c.b16 %v836, %v830
      %v1023 = vpack.c.b16 %v837, %v831
      %v1024 = vpack.c.b16 %v710, %v708
      %v1025 = vpack.c.b16 %v838, %v832
      %v1026 = vpack.c.b16 %v839, %v833
      %v1027 = vpack.c.b16 %v522, %v520
      %v1028 = vpack.c.b16 %v846, %v840
      %v1029 = vpack.c.b16 %v847, %v841
      %v1030 = vpack.c.b16 %v618, %v616
      %v1031 = vpack.c.b16 %v848, %v842
      %v1032 = vpack.c.b16 %v849, %v843
      %v1033 = vpack.c.b16 %v714, %v712
      %v1034 = vpack.c.b16 %v850, %v844
      %v1035 = vpack.c.b16 %v851, %v845
      %v1216 = vunpack.c.l.b16 %v852
      %v1217 = vunpack.c.l.b16 %v853
      %v1218 = vunpack.c.l.b16 %v854
      %v1219 = vunpack.c.l.b16 %v855
      %v1220 = vunpack.c.l.b16 %v856
      %v1221 = vunpack.c.l.b16 %v857
      %v1222 = vunpack.c.l.b16 %v858
      %v1223 = vunpack.c.l.b16 %v859
      %v1224 = vunpack.c.l.b16 %v860
      %v1225 = vunpack.c.l.b16 %v861
      %v1226 = vunpack.c.l.b16 %v862
      %v1227 = vunpack.c.l.b16 %v863
      %v1228 = vunpack.c.l.b16 %v864
      %v1229 = vunpack.c.l.b16 %v865
      %v1230 = vunpack.c.l.b16 %v866
      %v1231 = vunpack.c.l.b16 %v867
      %v1232 = vunpack.c.l.b16 %v868
      %v1233 = vunpack.c.l.b16 %v869
      %v1234 = vunpack.c.l.b16 %v870
      %v1235 = vunpack.c.l.b16 %v871
      %v1236 = vunpack.c.l.b16 %v872
      %v1237 = vunpack.c.l.b16 %v873
      %v1238 = vunpack.c.l.b16 %v874
      %v1239 = vunpack.c.l.b16 %v875
      %v1240 = vunpack.c.l.b16 %v876
      %v1241 = vunpack.c.l.b16 %v877
      %v1242 = vunpack.c.l.b16 %v878
      %v1243 = vunpack.c.l.b16 %v879
      %v1244 = vunpack.c.l.b16 %v880
      %v1245 = vunpack.c.l.b16 %v881
      %v1246 = vunpack.c.l.b16 %v882
      %v1247 = vunpack.c.l.b16 %v883
      %v1248 = vunpack.c.l.b16 %v884
      %v1249 = vunpack.c.l.b16 %v885
      %v1250 = vunpack.c.l.b16 %v886
      %v1251 = vunpack.c.l.b16 %v887
      %v1252 = vunpack.c.l.b16 %v888
      %v1253 = vunpack.c.l.b16 %v889
      %v1254 = vunpack.c.l.b16 %v890
      %v1255 = vunpack.c.l.b16 %v891
      %v1256 = vunpack.c.l.b16 %v892
      %v1257 = vunpack.c.l.b16 %v893
      %v1258 = vunpack.c.l.b16 %v894
      %v1259 = vunpack.c.l.b16 %v895
      %v1260 = vunpack.c.l.b16 %v896
      %v1261 = vunpack.c.l.b16 %v897
      %v1262 = vunpack.c.l.b16 %v898
      %v1263 = vunpack.c.l.b16 %v899
      %v1264 = vunpack.c.l.b16 %v900
      %v1265 = vunpack.c.l.b16 %v901
      %v1266 = vunpack.c.l.b16 %v902
      %v1267 = vunpack.c.l.b16 %v903
      %v1268 = vunpack.c.l.b16 %v904
      %v1269 = vunpack.c.l.b16 %v905
      %v1270 = vunpack.c.l.b16 %v906
      %v1271 = vunpack.c.l.b16 %v907
      %v1272 = vunpack.c.l.b16 %v908
      %v1273 = vunpack.c.l.b16 %v909
      %v1274 = vunpack.c.l.b16 %v910
      %v1275 = vunpack.c.l.b16 %v911
      %v1276 = vunpack.c.l.b16 %v912
      %v1277 = vunpack.c.l.b16 %v913
      %v1278 = vunpack.c.l.b16 %v914
      %v1279 = vunpack.c.l.b16 %v915
      %v1280 = vunpack.c.l.b16 %v916
      %v1281 = vunpack.c.l.b16 %v917
      %v1282 = vunpack.c.l.b16 %v918
      %v1283 = vunpack.c.l.b16 %v919
      %v1284 = vunpack.c.l.b16 %v920
      %v1285 = vunpack.c.l.b16 %v921
      %v1286 = vunpack.c.l.b16 %v922
      %v1287 = vunpack.c.l.b16 %v923
      %v1288 = vunpack.c.l.b16 %v924
      %v1289 = vunpack.c.l.b16 %v925
      %v1290 = vunpack.c.l.b16 %v926
      %v1291 = vunpack.c.l.b16 %v927
      %v1292 = vunpack.c.l.b16 %v928
      %v1293 = vunpack.c.l.b16 %v929
      %v1294 = vunpack.c.l.b16 %v930
      %v1295 = vunpack.c.l.b16 %v931
      %v1296 = vunpack.c.l.b16 %v932
      %v1297 = vunpack.c.l.b16 %v933
      %v1298 = vunpack.c.l.b16 %v934
      %v1299 = vunpack.c.l.b16 %v935
      %v1300 = vunpack.c.l.b16 %v936
      %v1301 = vunpack.c.l.b16 %v937
      %v1302 = vunpack.c.l.b16 %v938
      %v1303 = vunpack.c.l.b16 %v939
      %v1304 = vunpack.c.l.b16 %v940
      %v1305 = vunpack.c.l.b16 %v941
      %v1306 = vunpack.c.l.b16 %v942
      %v1307 = vunpack.c.l.b16 %v943
      %v1308 = vunpack.c.l.b16 %v944
      %v1309 = vunpack.c.l.b16 %v945
      %v1310 = vunpack.c.l.b16 %v946
      %v1311 = vunpack.c.l.b16 %v947
      %v1312 = vunpack.c.l.b16 %v948
      %v1313 = vunpack.c.l.b16 %v949
      %v1314 = vunpack.c.l.b16 %v950
      %v1315 = vunpack.c.l.b16 %v951
      %v1316 = vunpack.c.l.b16 %v952
      %v1317 = vunpack.c.l.b16 %v953
      %v1318 = vunpack.c.l.b16 %v954
      %v1319 = vunpack.c.l.b16 %v955
      %v1320 = vunpack.c.l.b16 %v956
      %v1321 = vunpack.c.l.b16 %v957
      %v1322 = vunpack.c.l.b16 %v958
      %v1323 = vunpack.c.l.b16 %v959
      %v1324 = vunpack.c.l.b16 %v960
      %v1325 = vunpack.c.l.b16 %v961
      %v1326 = vunpack.c.l.b16 %v962
      %v1327 = vunpack.c.l.b16 %v963
      %v1328 = vunpack.c.l.b16 %v964
      %v1329 = vunpack.c.l.b16 %v965
      %v1330 = vunpack.c.l.b16 %v966
      %v1331 = vunpack.c.l.b16 %v967
      %v1332 = vunpack.c.l.b16 %v968
      %v1333 = vunpack.c.l.b16 %v969
      %v1334 = vunpack.c.l.b16 %v970
      %v1335 = vunpack.c.l.b16 %v971
      %v1336 = vunpack.c.l.b16 %v972
      %v1337 = vunpack.c.l.b16 %v973
      %v1338 = vunpack.c.l.b16 %v974
      %v1339 = vunpack.c.l.b16 %v975
      %v1340 = vunpack.c.l.b16 %v976
      %v1341 = vunpack.c.l.b16 %v977
      %v1342 = vunpack.c.l.b16 %v978
      %v1343 = vunpack.c.l.b16 %v979
      %v1344 = vunpack.c.l.b16 %v980
      %v1345 = vunpack.c.l.b16 %v981
      %v1346 = vunpack.c.l.b16 %v982
      %v1347 = vunpack.c.l.b16 %v983
      %v1348 = vunpack.c.l.b16 %v984
      %v1349 = vunpack.c.l.b16 %v985
      %v1350 = vunpack.c.l.b16 %v986
      %v1351 = vunpack.c.l.b16 %v987
      %v1352 = vunpack.c.l.b16 %v988
      %v1353 = vunpack.c.l.b16 %v989
      %v1354 = vunpack.c.l.b16 %v990
      %v1355 = vunpack.c.l.b16 %v991
      %v1356 = vunpack.c.l.b16 %v992
      %v1357 = vunpack.c.l.b16 %v993
      %v1358 = vunpack.c.l.b16 %v994
      %v1359 = vunpack.c.l.b16 %v995
      %v1360 = vpack.c.b16 %v1217, %v1216
      %v1361 = vpack.c.b16 %v1219, %v1218
      %v1362 = vpack.c.b16 %v1221, %v1220
      %v1363 = vpack.c.b16 %v1223, %v1222
      %v1364 = vpack.c.b16 %v1225, %v1224
      %v1365 = vpack.c.b16 %v1227, %v1226
      %v1366 = vpack.c.b16 %v1229, %v1228
      %v1367 = vpack.c.b16 %v1231, %v1230
      %v1368 = vpack.c.b16 %v1233, %v1232
      %v1369 = vpack.c.b16 %v1235, %v1234
      %v1370 = vpack.c.b16 %v1237, %v1236
      %v1371 = vpack.c.b16 %v1239, %v1238
      %v1372 = vpack.c.b16 %v1241, %v1240
      %v1373 = vpack.c.b16 %v1243, %v1242
      %v1374 = vpack.c.b16 %v1245, %v1244
      %v1375 = vpack.c.b16 %v1247, %v1246
      %v1376 = vpack.c.b16 %v1249, %v1248
      %v1377 = vpack.c.b16 %v1251, %v1250
      %v1378 = vpack.c.b16 %v1253, %v1252
      %v1379 = vpack.c.b16 %v1255, %v1254
      %v1380 = vpack.c.b16 %v1257, %v1256
      %v1381 = vpack.c.b16 %v1259, %v1258
      %v1382 = vpack.c.b16 %v1261, %v1260
      %v1383 = vpack.c.b16 %v1263, %v1262
      %v1384 = vpack.c.b16 %v1265, %v1264
      %v1385 = vpack.c.b16 %v1267, %v1266
      %v1386 = vpack.c.b16 %v1269, %v1268
      %v1387 = vpack.c.b16 %v1271, %v1270
      %v1388 = vpack.c.b16 %v1273, %v1272
      %v1389 = vpack.c.b16 %v1275, %v1274
      %v1390 = vpack.c.b16 %v1277, %v1276
      %v1391 = vpack.c.b16 %v1279, %v1278
      %v1392 = vpack.c.b16 %v1281, %v1280
      %v1393 = vpack.c.b16 %v1283, %v1282
      %v1394 = vpack.c.b16 %v1285, %v1284
      %v1395 = vpack.c.b16 %v1287, %v1286
      %v1396 = vpack.c.b16 %v1289, %v1288
      %v1397 = vpack.c.b16 %v1291, %v1290
      %v1398 = vpack.c.b16 %v1293, %v1292
      %v1399 = vpack.c.b16 %v1295, %v1294
      %v1400 = vpack.c.b16 %v1297, %v1296
      %v1401 = vpack.c.b16 %v1299, %v1298
      %v1402 = vpack.c.b16 %v1301, %v1300
      %v1403 = vpack.c.b16 %v1303, %v1302
      %v1404 = vpack.c.b16 %v1305, %v1304
      %v1405 = vpack.c.b16 %v1307, %v1306
      %v1406 = vpack.c.b16 %v1309, %v1308
      %v1407 = vpack.c.b16 %v1311, %v1310
      %v1408 = vpack.c.b16 %v1313, %v1312
      %v1409 = vpack.c.b16 %v1315, %v1314
      %v1410 = vpack.c.b16 %v1317, %v1316
      %v1411 = vpack.c.b16 %v1319, %v1318
      %v1412 = vpack.c.b16 %v1321, %v1320
      %v1413 = vpack.c.b16 %v1323, %v1322
      %v1414 = vpack.c.b16 %v1325, %v1324
      %v1415 = vpack.c.b16 %v1327, %v1326
      %v1416 = vpack.c.b16 %v1329, %v1328
      %v1417 = vpack.c.b16 %v1331, %v1330
      %v1418 = vpack.c.b16 %v1333, %v1332
      %v1419 = vpack.c.b16 %v1335, %v1334
      %v1420 = vpack.c.b16 %v1337, %v1336
      %v1421 = vpack.c.b16 %v1339, %v1338
      %v1422 = vpack.c.b16 %v1341, %v1340
      %v1423 = vpack.c.b16 %v1343, %v1342
      %v1424 = vpack.c.b16 %v1345, %v1344
      %v1425 = vpack.c.b16 %v1347, %v1346
      %v1426 = vpack.c.b16 %v1349, %v1348
      %v1427 = vpack.c.b16 %v1351, %v1350
      %v1428 = vpack.c.b16 %v1353, %v1352
      %v1429 = vpack.c.b16 %v1355, %v1354
      %v1430 = vpack.c.b16 %v1357, %v1356
      %v1431 = vpack.c.b16 %v1359, %v1358
      %1504 = vmatpush.bf16.msra.mxu0 %v1367
      %1505 = vmatpush.bf16.msra.mxu0 %v1366
      %1506 = vmatpush.bf16.msra.mxu0 %v1365
      %1507 = vmatpush.bf16.msra.mxu0 %v1364
      %1508 = vmatpush.bf16.msra.mxu0 %v1363
      %1509 = vmatpush.bf16.msra.mxu0 %v1362
      %1510 = vmatpush.bf16.msra.mxu0 %v1361
      %1511 = vmatpush.bf16.msra.mxu0 %v1360
      %1512 = vmatmul.bf16.gmra.mxu0 %v1000
      %v1513 = vpop.f32.mrf.mxu0
      %v1514 = vadd.f32 %v998, %v1513
      %v1515 = vpop.f32.mrf.mxu0
      %v1516 = vadd.f32 %v998, %v1515
      %1517 = vmatmul.bf16.gmra.mxu0 %v1009
      %v1518 = vpop.f32.mrf.mxu0
      %v1519 = vadd.f32 %v998, %v1518
      %v1520 = vpop.f32.mrf.mxu0
      %v1521 = vadd.f32 %v998, %v1520
      %1522 = vmatmul.bf16.gmra.mxu0 %v1018
      %v1523 = vpop.f32.mrf.mxu0
      %v1524 = vadd.f32 %v998, %v1523
      %v1525 = vpop.f32.mrf.mxu0
      %v1526 = vadd.f32 %v998, %v1525
      %1527 = vmatmul.bf16.gmra.mxu0 %v1027
      %v1528 = vpop.f32.mrf.mxu0
      %v1529 = vadd.f32 %v998, %v1528
      %v1530 = vpop.f32.mrf.mxu0
      %v1531 = vadd.f32 %v998, %v1530
      %1532 = vdwg.mxu0
      %1533 = vmatpush.bf16.msra.mxu0 %v1375
      %1534 = vmatpush.bf16.msra.mxu0 %v1374
      %1535 = vmatpush.bf16.msra.mxu0 %v1373
      %1536 = vmatpush.bf16.msra.mxu0 %v1372
      %1537 = vmatpush.bf16.msra.mxu0 %v1371
      %1538 = vmatpush.bf16.msra.mxu0 %v1370
      %1539 = vmatpush.bf16.msra.mxu0 %v1369
      %1540 = vmatpush.bf16.msra.mxu0 %v1368
      %1541 = vmatmul.bf16.gmra.mxu0 %v1001
      %v1542 = vpop.f32.mrf.mxu0
      %v1543 = vadd.f32 %v1514, %v1542
      %v1544 = vpop.f32.mrf.mxu0
      %v1545 = vadd.f32 %v1516, %v1544
      %1546 = vmatmul.bf16.gmra.mxu0 %v1010
      %v1547 = vpop.f32.mrf.mxu0
      %v1548 = vadd.f32 %v1519, %v1547
      %v1549 = vpop.f32.mrf.mxu0
      %v1550 = vadd.f32 %v1521, %v1549
      %1551 = vmatmul.bf16.gmra.mxu0 %v1019
      %v1552 = vpop.f32.mrf.mxu0
      %v1553 = vadd.f32 %v1524, %v1552
      %v1554 = vpop.f32.mrf.mxu0
      %v1555 = vadd.f32 %v1526, %v1554
      %1556 = vmatmul.bf16.gmra.mxu0 %v1028
      %v1557 = vpop.f32.mrf.mxu0
      %v1558 = vadd.f32 %v1529, %v1557
      %v1559 = vpop.f32.mrf.mxu0
      %v1560 = vadd.f32 %v1531, %v1559
      %1561 = vdwg.mxu0
      %1562 = vmatpush.bf16.msra.mxu0 %v1383
      %1563 = vmatpush.bf16.msra.mxu0 %v1382
      %1564 = vmatpush.bf16.msra.mxu0 %v1381
      %1565 = vmatpush.bf16.msra.mxu0 %v1380
      %1566 = vmatpush.bf16.msra.mxu0 %v1379
      %1567 = vmatpush.bf16.msra.mxu0 %v1378
      %1568 = vmatpush.bf16.msra.mxu0 %v1377
      %1569 = vmatpush.bf16.msra.mxu0 %v1376
      %1570 = vmatmul.bf16.gmra.mxu0 %v1002
      %v1571 = vpop.f32.mrf.mxu0
      %v1572 = vadd.f32 %v1543, %v1571
      %v1573 = vpop.f32.mrf.mxu0
      %v1574 = vadd.f32 %v1545, %v1573
      %1575 = vmatmul.bf16.gmra.mxu0 %v1011
      %v1576 = vpop.f32.mrf.mxu0
      %v1577 = vadd.f32 %v1548, %v1576
      %v1578 = vpop.f32.mrf.mxu0
      %v1579 = vadd.f32 %v1550, %v1578
      %1580 = vmatmul.bf16.gmra.mxu0 %v1020
      %v1581 = vpop.f32.mrf.mxu0
      %v1582 = vadd.f32 %v1553, %v1581
      %v1583 = vpop.f32.mrf.mxu0
      %v1584 = vadd.f32 %v1555, %v1583
      %1585 = vmatmul.bf16.gmra.mxu0 %v1029
      %v1586 = vpop.f32.mrf.mxu0
      %v1587 = vadd.f32 %v1558, %v1586
      %v1588 = vpop.f32.mrf.mxu0
      %v1589 = vadd.f32 %v1560, %v1588
      %1590 = vdwg.mxu0
      %1591 = vmatpush.bf16.msra.mxu0 %v1391
      %1592 = vmatpush.bf16.msra.mxu0 %v1390
      %1593 = vmatpush.bf16.msra.mxu0 %v1389
      %1594 = vmatpush.bf16.msra.mxu0 %v1388
      %1595 = vmatpush.bf16.msra.mxu0 %v1387
      %1596 = vmatpush.bf16.msra.mxu0 %v1386
      %1597 = vmatpush.bf16.msra.mxu0 %v1385
      %1598 = vmatpush.bf16.msra.mxu0 %v1384
      %1599 = vmatmul.bf16.gmra.mxu0 %v1003
      %v1600 = vpop.f32.mrf.mxu0
      %v1601 = vadd.f32 %v1572, %v1600
      %v1602 = vpop.f32.mrf.mxu0
      %v1603 = vadd.f32 %v1574, %v1602
      %1604 = vmatmul.bf16.gmra.mxu0 %v1012
      %v1605 = vpop.f32.mrf.mxu0
      %v1606 = vadd.f32 %v1577, %v1605
      %v1607 = vpop.f32.mrf.mxu0
      %v1608 = vadd.f32 %v1579, %v1607
      %1609 = vmatmul.bf16.gmra.mxu0 %v1021
      %v1610 = vpop.f32.mrf.mxu0
      %v1611 = vadd.f32 %v1582, %v1610
      %v1612 = vpop.f32.mrf.mxu0
      %v1613 = vadd.f32 %v1584, %v1612
      %1614 = vmatmul.bf16.gmra.mxu0 %v1030
      %v1615 = vpop.f32.mrf.mxu0
      %v1616 = vadd.f32 %v1587, %v1615
      %v1617 = vpop.f32.mrf.mxu0
      %v1618 = vadd.f32 %v1589, %v1617
      %1619 = vdwg.mxu0
      %1620 = vmatpush.bf16.msra.mxu0 %v1399
      %1621 = vmatpush.bf16.msra.mxu0 %v1398
      %1622 = vmatpush.bf16.msra.mxu0 %v1397
      %1623 = vmatpush.bf16.msra.mxu0 %v1396
      %1624 = vmatpush.bf16.msra.mxu0 %v1395
      %1625 = vmatpush.bf16.msra.mxu0 %v1394
      %1626 = vmatpush.bf16.msra.mxu0 %v1393
      %1627 = vmatpush.bf16.msra.mxu0 %v1392
      %1628 = vmatmul.bf16.gmra.mxu0 %v1004
      %v1629 = vpop.f32.mrf.mxu0
      %v1630 = vadd.f32 %v1601, %v1629
      %v1631 = vpop.f32.mrf.mxu0
      %v1632 = vadd.f32 %v1603, %v1631
      %1633 = vmatmul.bf16.gmra.mxu0 %v1013
      %v1634 = vpop.f32.mrf.mxu0
      %v1635 = vadd.f32 %v1606, %v1634
      %v1636 = vpop.f32.mrf.mxu0
      %v1637 = vadd.f32 %v1608, %v1636
      %1638 = vmatmul.bf16.gmra.mxu0 %v1022
      %v1639 = vpop.f32.mrf.mxu0
      %v1640 = vadd.f32 %v1611, %v1639
      %v1641 = vpop.f32.mrf.mxu0
      %v1642 = vadd.f32 %v1613, %v1641
      %1643 = vmatmul.bf16.gmra.mxu0 %v1031
      %v1644 = vpop.f32.mrf.mxu0
      %v1645 = vadd.f32 %v1616, %v1644
      %v1646 = vpop.f32.mrf.mxu0
      %v1647 = vadd.f32 %v1618, %v1646
      %1648 = vdwg.mxu0
      %1649 = vmatpush.bf16.msra.mxu0 %v1407
      %1650 = vmatpush.bf16.msra.mxu0 %v1406
      %1651 = vmatpush.bf16.msra.mxu0 %v1405
      %1652 = vmatpush.bf16.msra.mxu0 %v1404
      %1653 = vmatpush.bf16.msra.mxu0 %v1403
      %1654 = vmatpush.bf16.msra.mxu0 %v1402
      %1655 = vmatpush.bf16.msra.mxu0 %v1401
      %1656 = vmatpush.bf16.msra.mxu0 %v1400
      %1657 = vmatmul.bf16.gmra.mxu0 %v1005
      %v1658 = vpop.f32.mrf.mxu0
      %v1659 = vadd.f32 %v1630, %v1658
      %v1660 = vpop.f32.mrf.mxu0
      %v1661 = vadd.f32 %v1632, %v1660
      %1662 = vmatmul.bf16.gmra.mxu0 %v1014
      %v1663 = vpop.f32.mrf.mxu0
      %v1664 = vadd.f32 %v1635, %v1663
      %v1665 = vpop.f32.mrf.mxu0
      %v1666 = vadd.f32 %v1637, %v1665
      %1667 = vmatmul.bf16.gmra.mxu0 %v1023
      %v1668 = vpop.f32.mrf.mxu0
      %v1669 = vadd.f32 %v1640, %v1668
      %v1670 = vpop.f32.mrf.mxu0
      %v1671 = vadd.f32 %v1642, %v1670
      %1672 = vmatmul.bf16.gmra.mxu0 %v1032
      %v1673 = vpop.f32.mrf.mxu0
      %v1674 = vadd.f32 %v1645, %v1673
      %v1675 = vpop.f32.mrf.mxu0
      %v1676 = vadd.f32 %v1647, %v1675
      %1677 = vdwg.mxu0
      %1678 = vmatpush.bf16.msra.mxu0 %v1415
      %1679 = vmatpush.bf16.msra.mxu0 %v1414
      %1680 = vmatpush.bf16.msra.mxu0 %v1413
      %1681 = vmatpush.bf16.msra.mxu0 %v1412
      %1682 = vmatpush.bf16.msra.mxu0 %v1411
      %1683 = vmatpush.bf16.msra.mxu0 %v1410
      %1684 = vmatpush.bf16.msra.mxu0 %v1409
      %1685 = vmatpush.bf16.msra.mxu0 %v1408
      %1686 = vmatmul.bf16.gmra.mxu0 %v1006
      %v1687 = vpop.f32.mrf.mxu0
      %v1688 = vadd.f32 %v1659, %v1687
      %v1689 = vpop.f32.mrf.mxu0
      %v1690 = vadd.f32 %v1661, %v1689
      %1691 = vmatmul.bf16.gmra.mxu0 %v1015
      %v1692 = vpop.f32.mrf.mxu0
      %v1693 = vadd.f32 %v1664, %v1692
      %v1694 = vpop.f32.mrf.mxu0
      %v1695 = vadd.f32 %v1666, %v1694
      %1696 = vmatmul.bf16.gmra.mxu0 %v1024
      %v1697 = vpop.f32.mrf.mxu0
      %v1698 = vadd.f32 %v1669, %v1697
      %v1699 = vpop.f32.mrf.mxu0
      %v1700 = vadd.f32 %v1671, %v1699
      %1701 = vmatmul.bf16.gmra.mxu0 %v1033
      %v1702 = vpop.f32.mrf.mxu0
      %v1703 = vadd.f32 %v1674, %v1702
      %v1704 = vpop.f32.mrf.mxu0
      %v1705 = vadd.f32 %v1676, %v1704
      %1706 = vdwg.mxu0
      %1707 = vmatpush.bf16.msra.mxu0 %v1423
      %1708 = vmatpush.bf16.msra.mxu0 %v1422
      %1709 = vmatpush.bf16.msra.mxu0 %v1421
      %1710 = vmatpush.bf16.msra.mxu0 %v1420
      %1711 = vmatpush.bf16.msra.mxu0 %v1419
      %1712 = vmatpush.bf16.msra.mxu0 %v1418
      %1713 = vmatpush.bf16.msra.mxu0 %v1417
      %1714 = vmatpush.bf16.msra.mxu0 %v1416
      %1715 = vmatmul.bf16.gmra.mxu0 %v1007
      %v1716 = vpop.f32.mrf.mxu0
      %v1717 = vadd.f32 %v1688, %v1716
      %v1718 = vpop.f32.mrf.mxu0
      %v1719 = vadd.f32 %v1690, %v1718
      %1720 = vmatmul.bf16.gmra.mxu0 %v1016
      %v1721 = vpop.f32.mrf.mxu0
      %v1722 = vadd.f32 %v1693, %v1721
      %v1723 = vpop.f32.mrf.mxu0
      %v1724 = vadd.f32 %v1695, %v1723
      %1725 = vmatmul.bf16.gmra.mxu0 %v1025
      %v1726 = vpop.f32.mrf.mxu0
      %v1727 = vadd.f32 %v1698, %v1726
      %v1728 = vpop.f32.mrf.mxu0
      %v1729 = vadd.f32 %v1700, %v1728
      %1730 = vmatmul.bf16.gmra.mxu0 %v1034
      %v1731 = vpop.f32.mrf.mxu0
      %v1732 = vadd.f32 %v1703, %v1731
      %v1733 = vpop.f32.mrf.mxu0
      %v1734 = vadd.f32 %v1705, %v1733
      %1735 = vdwg.mxu0
      %1736 = vmatpush.bf16.msra.mxu0 %v1431
      %1737 = vmatpush.bf16.msra.mxu0 %v1430
      %1738 = vmatpush.bf16.msra.mxu0 %v1429
      %1739 = vmatpush.bf16.msra.mxu0 %v1428
      %1740 = vmatpush.bf16.msra.mxu0 %v1427
      %1741 = vmatpush.bf16.msra.mxu0 %v1426
      %1742 = vmatpush.bf16.msra.mxu0 %v1425
      %1743 = vmatpush.bf16.msra.mxu0 %v1424
      %1744 = vmatmul.bf16.gmra.mxu0 %v1008
      %v1745 = vpop.f32.mrf.mxu0
      %v1746 = vadd.f32 %v1717, %v1745
      %v1747 = vpop.f32.mrf.mxu0
      %v1748 = vadd.f32 %v1719, %v1747
      %1749 = vmatmul.bf16.gmra.mxu0 %v1017
      %v1750 = vpop.f32.mrf.mxu0
      %v1751 = vadd.f32 %v1722, %v1750
      %v1752 = vpop.f32.mrf.mxu0
      %v1753 = vadd.f32 %v1724, %v1752
      %1754 = vmatmul.bf16.gmra.mxu0 %v1026
      %v1755 = vpop.f32.mrf.mxu0
      %v1756 = vadd.f32 %v1727, %v1755
      %v1757 = vpop.f32.mrf.mxu0
      %v1758 = vadd.f32 %v1729, %v1757
      %1759 = vmatmul.bf16.gmra.mxu0 %v1035
      %v1760 = vpop.f32.mrf.mxu0
      %v1761 = vadd.f32 %v1732, %v1760
      %v1762 = vpop.f32.mrf.mxu0
      %v1763 = vadd.f32 %v1734, %v1762
      %1764 = vdwg.mxu0
      %v1765 = vmax.f32 %v1746, 0.0
      %v1766 = vmax.f32 %v1748, 0.0
      %v1767 = vmax.f32 %v1751, 0.0
      %v1768 = vmax.f32 %v1753, 0.0
      %v1769 = vmax.f32 %v1756, 0.0
      %v1770 = vmax.f32 %v1758, 0.0
      %v1771 = vmax.f32 %v1761, 0.0
      %v1772 = vmax.f32 %v1763, 0.0
      %v1773 = vpack.c.bf16 %v1765, %v1765
      %v1774 = vpack.c.bf16 %v1766, %v1766
      %v1775 = vpack.c.bf16 %v1767, %v1767
      %v1776 = vpack.c.bf16 %v1768, %v1768
      %v1777 = vpack.c.bf16 %v1769, %v1769
      %v1778 = vpack.c.bf16 %v1770, %v1770
      %v1779 = vpack.c.bf16 %v1771, %v1771
      %v1780 = vpack.c.bf16 %v1772, %v1772
      %v1782 = vshrl.u32 %v1773, 16
      %v1784 = vrot.slane %v1782, 7
      %v1785 = vshll.u32 %v1773, 16
      %v1787 = vor.u32 %v1784, %v1785
      %v1788 = vrot.slane %v1784, 4
      %v1790 = vshrl.u32 %v1774, 16
      %v1792 = vrot.slane %v1790, 7
      %v1793 = vshll.u32 %v1774, 16
      %v1795 = vor.u32 %v1792, %v1793
      %v1796 = vrot.slane %v1792, 4
      %v1798 = vshrl.u32 %v1775, 16
      %v1800 = vrot.slane %v1798, 7
      %v1801 = vshll.u32 %v1775, 16
      %v1803 = vor.u32 %v1800, %v1801
      %v1804 = vrot.slane %v1800, 4
      %v1806 = vshrl.u32 %v1776, 16
      %v1808 = vrot.slane %v1806, 7
      %v1809 = vshll.u32 %v1776, 16
      %v1811 = vor.u32 %v1808, %v1809
      %v1812 = vrot.slane %v1808, 4
      %v1814 = vshrl.u32 %v1777, 16
      %v1816 = vrot.slane %v1814, 7
      %v1817 = vshll.u32 %v1777, 16
      %v1819 = vor.u32 %v1816, %v1817
      %v1820 = vrot.slane %v1816, 4
      %v1822 = vshrl.u32 %v1778, 16
      %v1824 = vrot.slane %v1822, 7
      %v1825 = vshll.u32 %v1778, 16
      %v1827 = vor.u32 %v1824, %v1825
      %v1828 = vrot.slane %v1824, 4
      %v1830 = vshrl.u32 %v1779, 16
      %v1832 = vrot.slane %v1830, 7
      %v1833 = vshll.u32 %v1779, 16
      %v1835 = vor.u32 %v1832, %v1833
      %v1836 = vrot.slane %v1832, 4
      %v1838 = vshrl.u32 %v1780, 16
      %v1840 = vrot.slane %v1838, 7
      %v1841 = vshll.u32 %v1780, 16
      %v1843 = vor.u32 %v1840, %v1841
      %v1844 = vrot.slane %v1840, 4
      %s1861 = scalar_lea.vmem [#allocation3], 8
      %vm1862 = vcmask 1043456
      %vm1863 = vmand %vm1862, %vm318
      %v1864 = vld [vmem:[%s1861] sm:$0xf]
      %v1865 = vsel %vm1863, %v1787, %v1864
      %1866 = vst [vmem:[%s1861] sm:$0xf] %v1865
      %v1867 = vld [vmem:[%s1861 + $0x4] sm:$0x1]
      %v1868 = vsel %vm287, %v1788, %v1867
      %1869 = vst [vmem:[%s1861 + $0x4] sm:$0x1] %v1868
      %v1870 = vld [vmem:[%s1861 + $0x8] sm:$0xf]
      %v1871 = vsel %vm1863, %v1795, %v1870
      %1872 = vst [vmem:[%s1861 + $0x8] sm:$0xf] %v1871
      %v1873 = vld [vmem:[%s1861 + $0xc] sm:$0x1]
      %v1874 = vsel %vm287, %v1796, %v1873
      %1875 = vst [vmem:[%s1861 + $0xc] sm:$0x1] %v1874
      %v1876 = vld [vmem:[%s1861 + $0x10] sm:$0xf]
      %v1877 = vsel %vm1863, %v1803, %v1876
      %1878 = vst [vmem:[%s1861 + $0x10] sm:$0xf] %v1877
      %v1879 = vld [vmem:[%s1861 + $0x14] sm:$0x1]
      %v1880 = vsel %vm287, %v1804, %v1879
      %1881 = vst [vmem:[%s1861 + $0x14] sm:$0x1] %v1880
      %v1882 = vld [vmem:[%s1861 + $0x18] sm:$0xf]
      %v1883 = vsel %vm1863, %v1811, %v1882
      %1884 = vst [vmem:[%s1861 + $0x18] sm:$0xf] %v1883
      %v1885 = vld [vmem:[%s1861 + $0x1c] sm:$0x1]
      %v1886 = vsel %vm287, %v1812, %v1885
      %1887 = vst [vmem:[%s1861 + $0x1c] sm:$0x1] %v1886
      %v1888 = vld [vmem:[%s1861 + $0x20] sm:$0xf]
      %v1889 = vsel %vm1863, %v1819, %v1888
      %1890 = vst [vmem:[%s1861 + $0x20] sm:$0xf] %v1889
      %v1891 = vld [vmem:[%s1861 + $0x24] sm:$0x1]
      %v1892 = vsel %vm287, %v1820, %v1891
      %1893 = vst [vmem:[%s1861 + $0x24] sm:$0x1] %v1892
      %v1894 = vld [vmem:[%s1861 + $0x28] sm:$0xf]
      %v1895 = vsel %vm1863, %v1827, %v1894
      %1896 = vst [vmem:[%s1861 + $0x28] sm:$0xf] %v1895
      %v1897 = vld [vmem:[%s1861 + $0x2c] sm:$0x1]
      %v1898 = vsel %vm287, %v1828, %v1897
      %1899 = vst [vmem:[%s1861 + $0x2c] sm:$0x1] %v1898
      %v1900 = vld [vmem:[%s1861 + $0x30] sm:$0xf]
      %v1901 = vsel %vm1863, %v1835, %v1900
      %1902 = vst [vmem:[%s1861 + $0x30] sm:$0xf] %v1901
      %v1903 = vld [vmem:[%s1861 + $0x34] sm:$0x1]
      %v1904 = vsel %vm287, %v1836, %v1903
      %1905 = vst [vmem:[%s1861 + $0x34] sm:$0x1] %v1904
      %v1906 = vld [vmem:[%s1861 + $0x38] sm:$0xf]
      %v1907 = vsel %vm1863, %v1843, %v1906
      %1908 = vst [vmem:[%s1861 + $0x38] sm:$0xf] %v1907
      %v1909 = vld [vmem:[%s1861 + $0x3c] sm:$0x1]
      %v1910 = vsel %vm287, %v1844, %v1909
      %1911 = vst [vmem:[%s1861 + $0x3c] sm:$0x1] %v1910
      %v1912 = vld [vmem:[%s449] sm:$0xf]
      %v1913 = vld [vmem:[%s449 + $0x8] sm:$0xf]
      %v1914 = vld [vmem:[%s449 + $0x10] sm:$0xf]
      %v1915 = vld [vmem:[%s449 + $0x18] sm:$0xf]
      %v1916 = vld [vmem:[%s449 + $0x20] sm:$0xf]
      %v1917 = vld [vmem:[%s449 + $0x28] sm:$0xf]
      %v1918 = vld [vmem:[%s449 + $0x30] sm:$0xf]
      %v1919 = vld [vmem:[%s449 + $0x38] sm:$0xf]
      %v1920 = vld [vmem:[%s5] sm:$0xf]
      %v1921 = vld [vmem:[%s5 + $0x4] sm:$0xf]
      %v1922 = vld [vmem:[%s5 + $0x8] sm:$0xf]
      %v1923 = vld [vmem:[%s5 + $0xc] sm:$0xf]
      %v1924 = vld [vmem:[%s5 + $0x10] sm:$0xf]
      %v1925 = vld [vmem:[%s5 + $0x14] sm:$0xf]
      %v1926 = vld [vmem:[%s5 + $0x18] sm:$0xf]
      %v1927 = vld [vmem:[%s5 + $0x1c] sm:$0xf]
      %v1928 = vld [vmem:[%s5 + $0x20] sm:$0xf]
      %v1929 = vld [vmem:[%s5 + $0x24] sm:$0xf]
      %v1930 = vld [vmem:[%s5 + $0x28] sm:$0xf]
      %v1931 = vld [vmem:[%s5 + $0x2c] sm:$0xf]
      %v1932 = vld [vmem:[%s5 + $0x30] sm:$0xf]
      %v1933 = vld [vmem:[%s5 + $0x34] sm:$0xf]
      %v1934 = vld [vmem:[%s5 + $0x38] sm:$0xf]
      %v1935 = vld [vmem:[%s5 + $0x3c] sm:$0xf]
      %v1936 = vld [vmem:[%s6] sm:$0x1]
      %v1938 = vperm.slane %v1936, 0
      %v1948 = vunpack.c.l.b16 %v1912
      %v1949 = vunpack.c.l.b16 %v1913
      %v1950 = vunpack.c.l.b16 %v1914
      %v1951 = vunpack.c.l.b16 %v1915
      %v1952 = vunpack.c.l.b16 %v1916
      %v1953 = vunpack.c.l.b16 %v1917
      %v1954 = vunpack.c.l.b16 %v1918
      %v1955 = vunpack.c.l.b16 %v1919
      %v1956 = vpack.c.b16 %v1949, %v1948
      %v1957 = vpack.c.b16 %v1951, %v1950
      %v1958 = vpack.c.b16 %v1953, %v1952
      %v1959 = vpack.c.b16 %v1955, %v1954
      %v1980 = vunpack.c.l.b16 %v1920
      %v1981 = vunpack.c.l.b16 %v1921
      %v1982 = vunpack.c.l.b16 %v1922
      %v1983 = vunpack.c.l.b16 %v1923
      %v1984 = vunpack.c.l.b16 %v1924
      %v1985 = vunpack.c.l.b16 %v1925
      %v1986 = vunpack.c.l.b16 %v1926
      %v1987 = vunpack.c.l.b16 %v1927
      %v1988 = vunpack.c.l.b16 %v1928
      %v1989 = vunpack.c.l.b16 %v1929
      %v1990 = vunpack.c.l.b16 %v1930
      %v1991 = vunpack.c.l.b16 %v1931
      %v1992 = vunpack.c.l.b16 %v1932
      %v1993 = vunpack.c.l.b16 %v1933
      %v1994 = vunpack.c.l.b16 %v1934
      %v1995 = vunpack.c.l.b16 %v1935
      %v1996 = vpack.c.b16 %v1981, %v1980
      %v1997 = vpack.c.b16 %v1983, %v1982
      %v1998 = vpack.c.b16 %v1985, %v1984
      %v1999 = vpack.c.b16 %v1987, %v1986
      %v2000 = vpack.c.b16 %v1989, %v1988
      %v2001 = vpack.c.b16 %v1991, %v1990
      %v2002 = vpack.c.b16 %v1993, %v1992
      %v2003 = vpack.c.b16 %v1995, %v1994
      %2012 = vmatpush.bf16.msra.mxu0 %v2003
      %2013 = vmatpush.bf16.msra.mxu0 %v2002
      %2014 = vmatpush.bf16.msra.mxu0 %v2001
      %2015 = vmatpush.bf16.msra.mxu0 %v2000
      %2016 = vmatpush.bf16.msra.mxu0 %v1999
      %2017 = vmatpush.bf16.msra.mxu0 %v1998
      %2018 = vmatpush.bf16.msra.mxu0 %v1997
      %2019 = vmatpush.bf16.msra.mxu0 %v1996
      %2020 = vmatmul.bf16.gmra.mxu0 %v1956
      %v2021 = vpop.f32.mrf.mxu0
      %v2022 = vadd.f32 %v1938, %v2021
      %v2023 = vpop.f32.mrf.mxu0
      %v2024 = vadd.f32 %v1938, %v2023
      %2025 = vmatmul.bf16.gmra.mxu0 %v1957
      %v2026 = vpop.f32.mrf.mxu0
      %v2027 = vadd.f32 %v1938, %v2026
      %v2028 = vpop.f32.mrf.mxu0
      %v2029 = vadd.f32 %v1938, %v2028
      %2030 = vmatmul.bf16.gmra.mxu0 %v1958
      %v2031 = vpop.f32.mrf.mxu0
      %v2032 = vadd.f32 %v1938, %v2031
      %v2033 = vpop.f32.mrf.mxu0
      %v2034 = vadd.f32 %v1938, %v2033
      %2035 = vmatmul.bf16.gmra.mxu0 %v1959
      %v2036 = vpop.f32.mrf.mxu0
      %v2037 = vadd.f32 %v1938, %v2036
      %v2038 = vpop.f32.mrf.mxu0
      %v2039 = vadd.f32 %v1938, %v2038
      %2040 = vdwg.mxu0
      %v2041 = vld [vmem:[#allocation3] sm:$0xf]
      %v2042 = vld [vmem:[#allocation3 + $0x8] sm:$0xf]
      %v2043 = vld [vmem:[#allocation3 + $0x10] sm:$0xf]
      %v2044 = vld [vmem:[#allocation3 + $0x18] sm:$0xf]
      %v2045 = vld [vmem:[#allocation3 + $0x20] sm:$0xf]
      %v2046 = vld [vmem:[#allocation3 + $0x28] sm:$0xf]
      %v2047 = vld [vmem:[#allocation3 + $0x30] sm:$0xf]
      %v2048 = vld [vmem:[#allocation3 + $0x38] sm:$0xf]
      %v2049 = vld [vmem:[#allocation3 + $0x4] sm:$0x1]
      %v2050 = vld [vmem:[#allocation3 + $0xc] sm:$0x1]
      %v2051 = vld [vmem:[#allocation3 + $0x14] sm:$0x1]
      %v2052 = vld [vmem:[#allocation3 + $0x1c] sm:$0x1]
      %v2053 = vld [vmem:[#allocation3 + $0x24] sm:$0x1]
      %v2054 = vld [vmem:[#allocation3 + $0x2c] sm:$0x1]
      %v2055 = vld [vmem:[#allocation3 + $0x34] sm:$0x1]
      %v2056 = vld [vmem:[#allocation3 + $0x3c] sm:$0x1]
      %v2057 = vld [vmem:[#allocation3] sm:$0xe]
      %v2058 = vld [vmem:[#allocation3 + $0x8] sm:$0xe]
      %v2059 = vld [vmem:[#allocation3 + $0x10] sm:$0xe]
      %v2060 = vld [vmem:[#allocation3 + $0x18] sm:$0xe]
      %v2061 = vld [vmem:[#allocation3 + $0x20] sm:$0xe]
      %v2062 = vld [vmem:[#allocation3 + $0x28] sm:$0xe]
      %v2063 = vld [vmem:[#allocation3 + $0x30] sm:$0xe]
      %v2064 = vld [vmem:[#allocation3 + $0x38] sm:$0xe]
      %v2065 = vld [vmem:[%s1861] sm:$0xf]
      %v2066 = vld [vmem:[%s1861 + $0x8] sm:$0xf]
      %v2067 = vld [vmem:[%s1861 + $0x10] sm:$0xf]
      %v2068 = vld [vmem:[%s1861 + $0x18] sm:$0xf]
      %v2069 = vld [vmem:[%s1861 + $0x20] sm:$0xf]
      %v2070 = vld [vmem:[%s1861 + $0x28] sm:$0xf]
      %v2071 = vld [vmem:[%s1861 + $0x30] sm:$0xf]
      %v2072 = vld [vmem:[%s1861 + $0x38] sm:$0xf]
      %v2073 = vld [vmem:[%s1861 + $0x4] sm:$0x1]
      %v2074 = vld [vmem:[%s1861 + $0xc] sm:$0x1]
      %v2075 = vld [vmem:[%s1861 + $0x14] sm:$0x1]
      %v2076 = vld [vmem:[%s1861 + $0x1c] sm:$0x1]
      %v2077 = vld [vmem:[%s1861 + $0x24] sm:$0x1]
      %v2078 = vld [vmem:[%s1861 + $0x2c] sm:$0x1]
      %v2079 = vld [vmem:[%s1861 + $0x34] sm:$0x1]
      %v2080 = vld [vmem:[%s1861 + $0x3c] sm:$0x1]
      %v2081 = vld [vmem:[%s1861] sm:$0xe]
      %v2082 = vld [vmem:[%s1861 + $0x8] sm:$0xe]
      %v2083 = vld [vmem:[%s1861 + $0x10] sm:$0xe]
      %v2084 = vld [vmem:[%s1861 + $0x18] sm:$0xe]
      %v2085 = vld [vmem:[%s1861 + $0x20] sm:$0xe]
      %v2086 = vld [vmem:[%s1861 + $0x28] sm:$0xe]
      %v2087 = vld [vmem:[%s1861 + $0x30] sm:$0xe]
      %v2088 = vld [vmem:[%s1861 + $0x38] sm:$0xe]
      %s2089 = scalar_lea.vmem [#allocation3], 16
      %v2090 = vld [vmem:[%s2089] sm:$0xf]
      %v2091 = vld [vmem:[%s2089 + $0x8] sm:$0xf]
      %v2092 = vld [vmem:[%s2089 + $0x10] sm:$0xf]
      %v2093 = vld [vmem:[%s2089 + $0x18] sm:$0xf]
      %v2094 = vld [vmem:[%s2089 + $0x20] sm:$0xf]
      %v2095 = vld [vmem:[%s2089 + $0x28] sm:$0xf]
      %v2096 = vld [vmem:[%s2089 + $0x30] sm:$0xf]
      %v2097 = vld [vmem:[%s2089 + $0x38] sm:$0xf]
      %v2098 = vld [vmem:[%s2089 + $0x4] sm:$0x1]
      %v2099 = vld [vmem:[%s2089 + $0xc] sm:$0x1]
      %v2100 = vld [vmem:[%s2089 + $0x14] sm:$0x1]
      %v2101 = vld [vmem:[%s2089 + $0x1c] sm:$0x1]
      %v2102 = vld [vmem:[%s2089 + $0x24] sm:$0x1]
      %v2103 = vld [vmem:[%s2089 + $0x2c] sm:$0x1]
      %v2104 = vld [vmem:[%s2089 + $0x34] sm:$0x1]
      %v2105 = vld [vmem:[%s2089 + $0x3c] sm:$0x1]
      %v2106 = vld [vmem:[%s2089] sm:$0xe]
      %v2107 = vld [vmem:[%s2089 + $0x8] sm:$0xe]
      %v2108 = vld [vmem:[%s2089 + $0x10] sm:$0xe]
      %v2109 = vld [vmem:[%s2089 + $0x18] sm:$0xe]
      %v2110 = vld [vmem:[%s2089 + $0x20] sm:$0xe]
      %v2111 = vld [vmem:[%s2089 + $0x28] sm:$0xe]
      %v2112 = vld [vmem:[%s2089 + $0x30] sm:$0xe]
      %v2113 = vld [vmem:[%s2089 + $0x38] sm:$0xe]
      %v2130 = vunpack.c.l.b16 %v2041
      %v2131 = vunpack.c.l.b16 %v2049
      %v2132 = vunpack.c.l.b16 %v2042
      %v2133 = vunpack.c.l.b16 %v2050
      %v2134 = vunpack.c.l.b16 %v2043
      %v2135 = vunpack.c.l.b16 %v2051
      %v2136 = vunpack.c.l.b16 %v2044
      %v2137 = vunpack.c.l.b16 %v2052
      %v2138 = vunpack.c.l.b16 %v2045
      %v2139 = vunpack.c.l.b16 %v2053
      %v2140 = vunpack.c.l.b16 %v2046
      %v2141 = vunpack.c.l.b16 %v2054
      %v2142 = vunpack.c.l.b16 %v2047
      %v2143 = vunpack.c.l.b16 %v2055
      %v2144 = vunpack.c.l.b16 %v2048
      %v2145 = vunpack.c.l.b16 %v2056
      %v2146 = vpack.c.b16 %v2131, %v2130
      %v2147 = vpack.c.b16 %v2133, %v2132
      %v2148 = vpack.c.b16 %v2135, %v2134
      %v2149 = vpack.c.b16 %v2137, %v2136
      %v2150 = vpack.c.b16 %v2139, %v2138
      %v2151 = vpack.c.b16 %v2141, %v2140
      %v2152 = vpack.c.b16 %v2143, %v2142
      %v2153 = vpack.c.b16 %v2145, %v2144
      %v2155 = vshrl.u32 %v2146, 16
      %v2157 = vshll.u32 %v2146, 16
      %v2159 = vrot.slane %v2157, 1
      %v2160 = vor.u32 %v2155, %v2159
      %v2162 = vshrl.u32 %v2147, 16
      %v2164 = vshll.u32 %v2147, 16
      %v2166 = vrot.slane %v2164, 1
      %v2167 = vor.u32 %v2162, %v2166
      %v2169 = vshrl.u32 %v2148, 16
      %v2171 = vshll.u32 %v2148, 16
      %v2173 = vrot.slane %v2171, 1
      %v2174 = vor.u32 %v2169, %v2173
      %v2176 = vshrl.u32 %v2149, 16
      %v2178 = vshll.u32 %v2149, 16
      %v2180 = vrot.slane %v2178, 1
      %v2181 = vor.u32 %v2176, %v2180
      %v2183 = vshrl.u32 %v2150, 16
      %v2185 = vshll.u32 %v2150, 16
      %v2187 = vrot.slane %v2185, 1
      %v2188 = vor.u32 %v2183, %v2187
      %v2190 = vshrl.u32 %v2151, 16
      %v2192 = vshll.u32 %v2151, 16
      %v2194 = vrot.slane %v2192, 1
      %v2195 = vor.u32 %v2190, %v2194
      %v2197 = vshrl.u32 %v2152, 16
      %v2199 = vshll.u32 %v2152, 16
      %v2201 = vrot.slane %v2199, 1
      %v2202 = vor.u32 %v2197, %v2201
      %v2204 = vshrl.u32 %v2153, 16
      %v2206 = vshll.u32 %v2153, 16
      %v2208 = vrot.slane %v2206, 1
      %v2209 = vor.u32 %v2204, %v2208
      %v2218 = vunpack.c.l.b16 %v2057
      %v2219 = vunpack.c.l.b16 %v2058
      %v2220 = vunpack.c.l.b16 %v2059
      %v2221 = vunpack.c.l.b16 %v2060
      %v2222 = vunpack.c.l.b16 %v2061
      %v2223 = vunpack.c.l.b16 %v2062
      %v2224 = vunpack.c.l.b16 %v2063
      %v2225 = vunpack.c.l.b16 %v2064
      %v2226 = vpack.c.b16 %v2131, %v2218
      %v2227 = vpack.c.b16 %v2133, %v2219
      %v2228 = vpack.c.b16 %v2135, %v2220
      %v2229 = vpack.c.b16 %v2137, %v2221
      %v2230 = vpack.c.b16 %v2139, %v2222
      %v2231 = vpack.c.b16 %v2141, %v2223
      %v2232 = vpack.c.b16 %v2143, %v2224
      %v2233 = vpack.c.b16 %v2145, %v2225
      %v2234 = vrot.slane %v2226, 1
      %v2235 = vrot.slane %v2227, 1
      %v2236 = vrot.slane %v2228, 1
      %v2237 = vrot.slane %v2229, 1
      %v2238 = vrot.slane %v2230, 1
      %v2239 = vrot.slane %v2231, 1
      %v2240 = vrot.slane %v2232, 1
      %v2241 = vrot.slane %v2233, 1
      %v2258 = vunpack.c.l.b16 %v2065
      %v2259 = vunpack.c.l.b16 %v2073
      %v2260 = vunpack.c.l.b16 %v2066
      %v2261 = vunpack.c.l.b16 %v2074
      %v2262 = vunpack.c.l.b16 %v2067
      %v2263 = vunpack.c.l.b16 %v2075
      %v2264 = vunpack.c.l.b16 %v2068
      %v2265 = vunpack.c.l.b16 %v2076
      %v2266 = vunpack.c.l.b16 %v2069
      %v2267 = vunpack.c.l.b16 %v2077
      %v2268 = vunpack.c.l.b16 %v2070
      %v2269 = vunpack.c.l.b16 %v2078
      %v2270 = vunpack.c.l.b16 %v2071
      %v2271 = vunpack.c.l.b16 %v2079
      %v2272 = vunpack.c.l.b16 %v2072
      %v2273 = vunpack.c.l.b16 %v2080
      %v2274 = vpack.c.b16 %v2259, %v2258
      %v2275 = vpack.c.b16 %v2261, %v2260
      %v2276 = vpack.c.b16 %v2263, %v2262
      %v2277 = vpack.c.b16 %v2265, %v2264
      %v2278 = vpack.c.b16 %v2267, %v2266
      %v2279 = vpack.c.b16 %v2269, %v2268
      %v2280 = vpack.c.b16 %v2271, %v2270
      %v2281 = vpack.c.b16 %v2273, %v2272
      %v2283 = vshrl.u32 %v2274, 16
      %v2285 = vshll.u32 %v2274, 16
      %v2287 = vrot.slane %v2285, 1
      %v2288 = vor.u32 %v2283, %v2287
      %v2290 = vshrl.u32 %v2275, 16
      %v2292 = vshll.u32 %v2275, 16
      %v2294 = vrot.slane %v2292, 1
      %v2295 = vor.u32 %v2290, %v2294
      %v2297 = vshrl.u32 %v2276, 16
      %v2299 = vshll.u32 %v2276, 16
      %v2301 = vrot.slane %v2299, 1
      %v2302 = vor.u32 %v2297, %v2301
      %v2304 = vshrl.u32 %v2277, 16
      %v2306 = vshll.u32 %v2277, 16
      %v2308 = vrot.slane %v2306, 1
      %v2309 = vor.u32 %v2304, %v2308
      %v2311 = vshrl.u32 %v2278, 16
      %v2313 = vshll.u32 %v2278, 16
      %v2315 = vrot.slane %v2313, 1
      %v2316 = vor.u32 %v2311, %v2315
      %v2318 = vshrl.u32 %v2279, 16
      %v2320 = vshll.u32 %v2279, 16
      %v2322 = vrot.slane %v2320, 1
      %v2323 = vor.u32 %v2318, %v2322
      %v2325 = vshrl.u32 %v2280, 16
      %v2327 = vshll.u32 %v2280, 16
      %v2329 = vrot.slane %v2327, 1
      %v2330 = vor.u32 %v2325, %v2329
      %v2332 = vshrl.u32 %v2281, 16
      %v2334 = vshll.u32 %v2281, 16
      %v2336 = vrot.slane %v2334, 1
      %v2337 = vor.u32 %v2332, %v2336
      %v2346 = vunpack.c.l.b16 %v2081
      %v2347 = vunpack.c.l.b16 %v2082
      %v2348 = vunpack.c.l.b16 %v2083
      %v2349 = vunpack.c.l.b16 %v2084
      %v2350 = vunpack.c.l.b16 %v2085
      %v2351 = vunpack.c.l.b16 %v2086
      %v2352 = vunpack.c.l.b16 %v2087
      %v2353 = vunpack.c.l.b16 %v2088
      %v2354 = vpack.c.b16 %v2259, %v2346
      %v2355 = vpack.c.b16 %v2261, %v2347
      %v2356 = vpack.c.b16 %v2263, %v2348
      %v2357 = vpack.c.b16 %v2265, %v2349
      %v2358 = vpack.c.b16 %v2267, %v2350
      %v2359 = vpack.c.b16 %v2269, %v2351
      %v2360 = vpack.c.b16 %v2271, %v2352
      %v2361 = vpack.c.b16 %v2273, %v2353
      %v2362 = vrot.slane %v2354, 1
      %v2363 = vrot.slane %v2355, 1
      %v2364 = vrot.slane %v2356, 1
      %v2365 = vrot.slane %v2357, 1
      %v2366 = vrot.slane %v2358, 1
      %v2367 = vrot.slane %v2359, 1
      %v2368 = vrot.slane %v2360, 1
      %v2369 = vrot.slane %v2361, 1
      %v2386 = vunpack.c.l.b16 %v2090
      %v2387 = vunpack.c.l.b16 %v2098
      %v2388 = vunpack.c.l.b16 %v2091
      %v2389 = vunpack.c.l.b16 %v2099
      %v2390 = vunpack.c.l.b16 %v2092
      %v2391 = vunpack.c.l.b16 %v2100
      %v2392 = vunpack.c.l.b16 %v2093
      %v2393 = vunpack.c.l.b16 %v2101
      %v2394 = vunpack.c.l.b16 %v2094
      %v2395 = vunpack.c.l.b16 %v2102
      %v2396 = vunpack.c.l.b16 %v2095
      %v2397 = vunpack.c.l.b16 %v2103
      %v2398 = vunpack.c.l.b16 %v2096
      %v2399 = vunpack.c.l.b16 %v2104
      %v2400 = vunpack.c.l.b16 %v2097
      %v2401 = vunpack.c.l.b16 %v2105
      %v2402 = vpack.c.b16 %v2387, %v2386
      %v2403 = vpack.c.b16 %v2389, %v2388
      %v2404 = vpack.c.b16 %v2391, %v2390
      %v2405 = vpack.c.b16 %v2393, %v2392
      %v2406 = vpack.c.b16 %v2395, %v2394
      %v2407 = vpack.c.b16 %v2397, %v2396
      %v2408 = vpack.c.b16 %v2399, %v2398
      %v2409 = vpack.c.b16 %v2401, %v2400
      %v2411 = vshrl.u32 %v2402, 16
      %v2413 = vshll.u32 %v2402, 16
      %v2415 = vrot.slane %v2413, 1
      %v2416 = vor.u32 %v2411, %v2415
      %v2418 = vshrl.u32 %v2403, 16
      %v2420 = vshll.u32 %v2403, 16
      %v2422 = vrot.slane %v2420, 1
      %v2423 = vor.u32 %v2418, %v2422
      %v2425 = vshrl.u32 %v2404, 16
      %v2427 = vshll.u32 %v2404, 16
      %v2429 = vrot.slane %v2427, 1
      %v2430 = vor.u32 %v2425, %v2429
      %v2432 = vshrl.u32 %v2405, 16
      %v2434 = vshll.u32 %v2405, 16
      %v2436 = vrot.slane %v2434, 1
      %v2437 = vor.u32 %v2432, %v2436
      %v2439 = vshrl.u32 %v2406, 16
      %v2441 = vshll.u32 %v2406, 16
      %v2443 = vrot.slane %v2441, 1
      %v2444 = vor.u32 %v2439, %v2443
      %v2446 = vshrl.u32 %v2407, 16
      %v2448 = vshll.u32 %v2407, 16
      %v2450 = vrot.slane %v2448, 1
      %v2451 = vor.u32 %v2446, %v2450
      %v2453 = vshrl.u32 %v2408, 16
      %v2455 = vshll.u32 %v2408, 16
      %v2457 = vrot.slane %v2455, 1
      %v2458 = vor.u32 %v2453, %v2457
      %v2460 = vshrl.u32 %v2409, 16
      %v2462 = vshll.u32 %v2409, 16
      %v2464 = vrot.slane %v2462, 1
      %v2465 = vor.u32 %v2460, %v2464
      %v2474 = vunpack.c.l.b16 %v2106
      %v2475 = vunpack.c.l.b16 %v2107
      %v2476 = vunpack.c.l.b16 %v2108
      %v2477 = vunpack.c.l.b16 %v2109
      %v2478 = vunpack.c.l.b16 %v2110
      %v2479 = vunpack.c.l.b16 %v2111
      %v2480 = vunpack.c.l.b16 %v2112
      %v2481 = vunpack.c.l.b16 %v2113
      %v2482 = vpack.c.b16 %v2387, %v2474
      %v2483 = vpack.c.b16 %v2389, %v2475
      %v2484 = vpack.c.b16 %v2391, %v2476
      %v2485 = vpack.c.b16 %v2393, %v2477
      %v2486 = vpack.c.b16 %v2395, %v2478
      %v2487 = vpack.c.b16 %v2397, %v2479
      %v2488 = vpack.c.b16 %v2399, %v2480
      %v2489 = vpack.c.b16 %v2401, %v2481
      %v2490 = vrot.slane %v2482, 1
      %v2491 = vrot.slane %v2483, 1
      %v2492 = vrot.slane %v2484, 1
      %v2493 = vrot.slane %v2485, 1
      %v2494 = vrot.slane %v2486, 1
      %v2495 = vrot.slane %v2487, 1
      %v2496 = vrot.slane %v2488, 1
      %v2497 = vrot.slane %v2489, 1
      %v2498 = vunpack.c.l.b16 %v2160
      %v2499 = vunpack.c.l.b16 %v2234
      %v2500 = vunpack.c.l.b16 %v2288
      %v2501 = vunpack.c.l.b16 %v2362
      %v2502 = vunpack.c.l.b16 %v2416
      %v2503 = vunpack.c.l.b16 %v2490
      %v2504 = vunpack.c.l.b16 %v2167
      %v2505 = vunpack.c.l.b16 %v2235
      %v2506 = vunpack.c.l.b16 %v2295
      %v2507 = vunpack.c.l.b16 %v2363
      %v2508 = vunpack.c.l.b16 %v2423
      %v2509 = vunpack.c.l.b16 %v2491
      %v2510 = vunpack.c.l.b16 %v2174
      %v2511 = vunpack.c.l.b16 %v2236
      %v2512 = vunpack.c.l.b16 %v2302
      %v2513 = vunpack.c.l.b16 %v2364
      %v2514 = vunpack.c.l.b16 %v2430
      %v2515 = vunpack.c.l.b16 %v2492
      %v2516 = vunpack.c.l.b16 %v2181
      %v2517 = vunpack.c.l.b16 %v2237
      %v2518 = vunpack.c.l.b16 %v2309
      %v2519 = vunpack.c.l.b16 %v2365
      %v2520 = vunpack.c.l.b16 %v2437
      %v2521 = vunpack.c.l.b16 %v2493
      %v2522 = vunpack.c.l.b16 %v2188
      %v2523 = vunpack.c.l.b16 %v2238
      %v2524 = vunpack.c.l.b16 %v2316
      %v2525 = vunpack.c.l.b16 %v2366
      %v2526 = vunpack.c.l.b16 %v2444
      %v2527 = vunpack.c.l.b16 %v2494
      %v2528 = vunpack.c.l.b16 %v2195
      %v2529 = vunpack.c.l.b16 %v2239
      %v2530 = vunpack.c.l.b16 %v2323
      %v2531 = vunpack.c.l.b16 %v2367
      %v2532 = vunpack.c.l.b16 %v2451
      %v2533 = vunpack.c.l.b16 %v2495
      %v2534 = vunpack.c.l.b16 %v2202
      %v2535 = vunpack.c.l.b16 %v2240
      %v2536 = vunpack.c.l.b16 %v2330
      %v2537 = vunpack.c.l.b16 %v2368
      %v2538 = vunpack.c.l.b16 %v2458
      %v2539 = vunpack.c.l.b16 %v2496
      %v2540 = vunpack.c.l.b16 %v2209
      %v2541 = vunpack.c.l.b16 %v2241
      %v2542 = vunpack.c.l.b16 %v2337
      %v2543 = vunpack.c.l.b16 %v2369
      %v2544 = vunpack.c.l.b16 %v2465
      %v2545 = vunpack.c.l.b16 %v2497
      %v2546 = vld [vmem:[%s3] sm:$0xf]
      %v2547 = vld [vmem:[%s3 + $0x4] sm:$0xf]
      %v2548 = vld [vmem:[%s3 + $0x8] sm:$0xf]
      %v2549 = vld [vmem:[%s3 + $0xc] sm:$0xf]
      %v2550 = vld [vmem:[%s3 + $0x10] sm:$0xf]
      %v2551 = vld [vmem:[%s3 + $0x14] sm:$0xf]
      %v2552 = vld [vmem:[%s3 + $0x18] sm:$0xf]
      %v2553 = vld [vmem:[%s3 + $0x1c] sm:$0xf]
      %v2554 = vld [vmem:[%s3 + $0x20] sm:$0xf]
      %v2555 = vld [vmem:[%s3 + $0x24] sm:$0xf]
      %v2556 = vld [vmem:[%s3 + $0x28] sm:$0xf]
      %v2557 = vld [vmem:[%s3 + $0x2c] sm:$0xf]
      %v2558 = vld [vmem:[%s3 + $0x30] sm:$0xf]
      %v2559 = vld [vmem:[%s3 + $0x34] sm:$0xf]
      %v2560 = vld [vmem:[%s3 + $0x38] sm:$0xf]
      %v2561 = vld [vmem:[%s3 + $0x3c] sm:$0xf]
      %v2562 = vld [vmem:[%s3 + $0x40] sm:$0xf]
      %v2563 = vld [vmem:[%s3 + $0x44] sm:$0xf]
      %v2564 = vld [vmem:[%s3 + $0x48] sm:$0xf]
      %v2565 = vld [vmem:[%s3 + $0x4c] sm:$0xf]
      %v2566 = vld [vmem:[%s3 + $0x50] sm:$0xf]
      %v2567 = vld [vmem:[%s3 + $0x54] sm:$0xf]
      %v2568 = vld [vmem:[%s3 + $0x58] sm:$0xf]
      %v2569 = vld [vmem:[%s3 + $0x5c] sm:$0xf]
      %v2570 = vld [vmem:[%s3 + $0x60] sm:$0xf]
      %v2571 = vld [vmem:[%s3 + $0x64] sm:$0xf]
      %v2572 = vld [vmem:[%s3 + $0x68] sm:$0xf]
      %v2573 = vld [vmem:[%s3 + $0x6c] sm:$0xf]
      %v2574 = vld [vmem:[%s3 + $0x70] sm:$0xf]
      %v2575 = vld [vmem:[%s3 + $0x74] sm:$0xf]
      %v2576 = vld [vmem:[%s3 + $0x78] sm:$0xf]
      %v2577 = vld [vmem:[%s3 + $0x7c] sm:$0xf]
      %v2578 = vld [vmem:[%s3 + $0x80] sm:$0xf]
      %v2579 = vld [vmem:[%s3 + $0x84] sm:$0xf]
      %v2580 = vld [vmem:[%s3 + $0x88] sm:$0xf]
      %v2581 = vld [vmem:[%s3 + $0x8c] sm:$0xf]
      %v2582 = vld [vmem:[%s3 + $0x90] sm:$0xf]
      %v2583 = vld [vmem:[%s3 + $0x94] sm:$0xf]
      %v2584 = vld [vmem:[%s3 + $0x98] sm:$0xf]
      %v2585 = vld [vmem:[%s3 + $0x9c] sm:$0xf]
      %v2586 = vld [vmem:[%s3 + $0xa0] sm:$0xf]
      %v2587 = vld [vmem:[%s3 + $0xa4] sm:$0xf]
      %v2588 = vld [vmem:[%s3 + $0xa8] sm:$0xf]
      %v2589 = vld [vmem:[%s3 + $0xac] sm:$0xf]
      %v2590 = vld [vmem:[%s3 + $0xb0] sm:$0xf]
      %v2591 = vld [vmem:[%s3 + $0xb4] sm:$0xf]
      %v2592 = vld [vmem:[%s3 + $0xb8] sm:$0xf]
      %v2593 = vld [vmem:[%s3 + $0xbc] sm:$0xf]
      %v2594 = vld [vmem:[%s3 + $0xc0] sm:$0xf]
      %v2595 = vld [vmem:[%s3 + $0xc4] sm:$0xf]
      %v2596 = vld [vmem:[%s3 + $0xc8] sm:$0xf]
      %v2597 = vld [vmem:[%s3 + $0xcc] sm:$0xf]
      %v2598 = vld [vmem:[%s3 + $0xd0] sm:$0xf]
      %v2599 = vld [vmem:[%s3 + $0xd4] sm:$0xf]
      %v2600 = vld [vmem:[%s3 + $0xd8] sm:$0xf]
      %v2601 = vld [vmem:[%s3 + $0xdc] sm:$0xf]
      %v2602 = vld [vmem:[%s3 + $0xe0] sm:$0xf]
      %v2603 = vld [vmem:[%s3 + $0xe4] sm:$0xf]
      %v2604 = vld [vmem:[%s3 + $0xe8] sm:$0xf]
      %v2605 = vld [vmem:[%s3 + $0xec] sm:$0xf]
      %v2606 = vld [vmem:[%s3 + $0xf0] sm:$0xf]
      %v2607 = vld [vmem:[%s3 + $0xf4] sm:$0xf]
      %v2608 = vld [vmem:[%s3 + $0xf8] sm:$0xf]
      %v2609 = vld [vmem:[%s3 + $0xfc] sm:$0xf]
      %v2610 = vld [vmem:[%s3 + $0x100] sm:$0xf]
      %v2611 = vld [vmem:[%s3 + $0x104] sm:$0xf]
      %v2612 = vld [vmem:[%s3 + $0x108] sm:$0xf]
      %v2613 = vld [vmem:[%s3 + $0x10c] sm:$0xf]
      %v2614 = vld [vmem:[%s3 + $0x110] sm:$0xf]
      %v2615 = vld [vmem:[%s3 + $0x114] sm:$0xf]
      %v2616 = vld [vmem:[%s3 + $0x118] sm:$0xf]
      %v2617 = vld [vmem:[%s3 + $0x11c] sm:$0xf]
      %v2618 = vld [vmem:[%s3 + $0x120] sm:$0xf]
      %v2619 = vld [vmem:[%s3 + $0x124] sm:$0xf]
      %v2620 = vld [vmem:[%s3 + $0x128] sm:$0xf]
      %v2621 = vld [vmem:[%s3 + $0x12c] sm:$0xf]
      %v2622 = vld [vmem:[%s3 + $0x130] sm:$0xf]
      %v2623 = vld [vmem:[%s3 + $0x134] sm:$0xf]
      %v2624 = vld [vmem:[%s3 + $0x138] sm:$0xf]
      %v2625 = vld [vmem:[%s3 + $0x13c] sm:$0xf]
      %v2626 = vld [vmem:[%s3 + $0x140] sm:$0xf]
      %v2627 = vld [vmem:[%s3 + $0x144] sm:$0xf]
      %v2628 = vld [vmem:[%s3 + $0x148] sm:$0xf]
      %v2629 = vld [vmem:[%s3 + $0x14c] sm:$0xf]
      %v2630 = vld [vmem:[%s3 + $0x150] sm:$0xf]
      %v2631 = vld [vmem:[%s3 + $0x154] sm:$0xf]
      %v2632 = vld [vmem:[%s3 + $0x158] sm:$0xf]
      %v2633 = vld [vmem:[%s3 + $0x15c] sm:$0xf]
      %v2634 = vld [vmem:[%s3 + $0x160] sm:$0xf]
      %v2635 = vld [vmem:[%s3 + $0x164] sm:$0xf]
      %v2636 = vld [vmem:[%s3 + $0x168] sm:$0xf]
      %v2637 = vld [vmem:[%s3 + $0x16c] sm:$0xf]
      %v2638 = vld [vmem:[%s3 + $0x170] sm:$0xf]
      %v2639 = vld [vmem:[%s3 + $0x174] sm:$0xf]
      %v2640 = vld [vmem:[%s3 + $0x178] sm:$0xf]
      %v2641 = vld [vmem:[%s3 + $0x17c] sm:$0xf]
      %v2642 = vld [vmem:[%s3 + $0x180] sm:$0xf]
      %v2643 = vld [vmem:[%s3 + $0x184] sm:$0xf]
      %v2644 = vld [vmem:[%s3 + $0x188] sm:$0xf]
      %v2645 = vld [vmem:[%s3 + $0x18c] sm:$0xf]
      %v2646 = vld [vmem:[%s3 + $0x190] sm:$0xf]
      %v2647 = vld [vmem:[%s3 + $0x194] sm:$0xf]
      %v2648 = vld [vmem:[%s3 + $0x198] sm:$0xf]
      %v2649 = vld [vmem:[%s3 + $0x19c] sm:$0xf]
      %v2650 = vld [vmem:[%s3 + $0x1a0] sm:$0xf]
      %v2651 = vld [vmem:[%s3 + $0x1a4] sm:$0xf]
      %v2652 = vld [vmem:[%s3 + $0x1a8] sm:$0xf]
      %v2653 = vld [vmem:[%s3 + $0x1ac] sm:$0xf]
      %v2654 = vld [vmem:[%s3 + $0x1b0] sm:$0xf]
      %v2655 = vld [vmem:[%s3 + $0x1b4] sm:$0xf]
      %v2656 = vld [vmem:[%s3 + $0x1b8] sm:$0xf]
      %v2657 = vld [vmem:[%s3 + $0x1bc] sm:$0xf]
      %v2658 = vld [vmem:[%s3 + $0x1c0] sm:$0xf]
      %v2659 = vld [vmem:[%s3 + $0x1c4] sm:$0xf]
      %v2660 = vld [vmem:[%s3 + $0x1c8] sm:$0xf]
      %v2661 = vld [vmem:[%s3 + $0x1cc] sm:$0xf]
      %v2662 = vld [vmem:[%s3 + $0x1d0] sm:$0xf]
      %v2663 = vld [vmem:[%s3 + $0x1d4] sm:$0xf]
      %v2664 = vld [vmem:[%s3 + $0x1d8] sm:$0xf]
      %v2665 = vld [vmem:[%s3 + $0x1dc] sm:$0xf]
      %v2666 = vld [vmem:[%s3 + $0x1e0] sm:$0xf]
      %v2667 = vld [vmem:[%s3 + $0x1e4] sm:$0xf]
      %v2668 = vld [vmem:[%s3 + $0x1e8] sm:$0xf]
      %v2669 = vld [vmem:[%s3 + $0x1ec] sm:$0xf]
      %v2670 = vld [vmem:[%s3 + $0x1f0] sm:$0xf]
      %v2671 = vld [vmem:[%s3 + $0x1f4] sm:$0xf]
      %v2672 = vld [vmem:[%s3 + $0x1f8] sm:$0xf]
      %v2673 = vld [vmem:[%s3 + $0x1fc] sm:$0xf]
      %v2674 = vld [vmem:[%s3 + $0x200] sm:$0xf]
      %v2675 = vld [vmem:[%s3 + $0x204] sm:$0xf]
      %v2676 = vld [vmem:[%s3 + $0x208] sm:$0xf]
      %v2677 = vld [vmem:[%s3 + $0x20c] sm:$0xf]
      %v2678 = vld [vmem:[%s3 + $0x210] sm:$0xf]
      %v2679 = vld [vmem:[%s3 + $0x214] sm:$0xf]
      %v2680 = vld [vmem:[%s3 + $0x218] sm:$0xf]
      %v2681 = vld [vmem:[%s3 + $0x21c] sm:$0xf]
      %v2682 = vld [vmem:[%s3 + $0x220] sm:$0xf]
      %v2683 = vld [vmem:[%s3 + $0x224] sm:$0xf]
      %v2684 = vld [vmem:[%s3 + $0x228] sm:$0xf]
      %v2685 = vld [vmem:[%s3 + $0x22c] sm:$0xf]
      %v2686 = vld [vmem:[%s3 + $0x230] sm:$0xf]
      %v2687 = vld [vmem:[%s3 + $0x234] sm:$0xf]
      %v2688 = vld [vmem:[%s3 + $0x238] sm:$0xf]
      %v2689 = vld [vmem:[%s3 + $0x23c] sm:$0xf]
      %v2690 = vld [vmem:[%s4] sm:$0x1]
      %v2692 = vperm.slane %v2690, 0
      %v2694 = vpack.c.b16 %v2132, %v2130
      %v2695 = vpack.c.b16 %v2504, %v2498
      %v2696 = vpack.c.b16 %v2505, %v2499
      %v2697 = vpack.c.b16 %v2260, %v2258
      %v2698 = vpack.c.b16 %v2506, %v2500
      %v2699 = vpack.c.b16 %v2507, %v2501
      %v2700 = vpack.c.b16 %v2388, %v2386
      %v2701 = vpack.c.b16 %v2508, %v2502
      %v2702 = vpack.c.b16 %v2509, %v2503
      %v2703 = vpack.c.b16 %v2136, %v2134
      %v2704 = vpack.c.b16 %v2516, %v2510
      %v2705 = vpack.c.b16 %v2517, %v2511
      %v2706 = vpack.c.b16 %v2264, %v2262
      %v2707 = vpack.c.b16 %v2518, %v2512
      %v2708 = vpack.c.b16 %v2519, %v2513
      %v2709 = vpack.c.b16 %v2392, %v2390
      %v2710 = vpack.c.b16 %v2520, %v2514
      %v2711 = vpack.c.b16 %v2521, %v2515
      %v2712 = vpack.c.b16 %v2140, %v2138
      %v2713 = vpack.c.b16 %v2528, %v2522
      %v2714 = vpack.c.b16 %v2529, %v2523
      %v2715 = vpack.c.b16 %v2268, %v2266
      %v2716 = vpack.c.b16 %v2530, %v2524
      %v2717 = vpack.c.b16 %v2531, %v2525
      %v2718 = vpack.c.b16 %v2396, %v2394
      %v2719 = vpack.c.b16 %v2532, %v2526
      %v2720 = vpack.c.b16 %v2533, %v2527
      %v2721 = vpack.c.b16 %v2144, %v2142
      %v2722 = vpack.c.b16 %v2540, %v2534
      %v2723 = vpack.c.b16 %v2541, %v2535
      %v2724 = vpack.c.b16 %v2272, %v2270
      %v2725 = vpack.c.b16 %v2542, %v2536
      %v2726 = vpack.c.b16 %v2543, %v2537
      %v2727 = vpack.c.b16 %v2400, %v2398
      %v2728 = vpack.c.b16 %v2544, %v2538
      %v2729 = vpack.c.b16 %v2545, %v2539
      %v2910 = vunpack.c.l.b16 %v2546
      %v2911 = vunpack.c.l.b16 %v2547
      %v2912 = vunpack.c.l.b16 %v2548
      %v2913 = vunpack.c.l.b16 %v2549
      %v2914 = vunpack.c.l.b16 %v2550
      %v2915 = vunpack.c.l.b16 %v2551
      %v2916 = vunpack.c.l.b16 %v2552
      %v2917 = vunpack.c.l.b16 %v2553
      %v2918 = vunpack.c.l.b16 %v2554
      %v2919 = vunpack.c.l.b16 %v2555
      %v2920 = vunpack.c.l.b16 %v2556
      %v2921 = vunpack.c.l.b16 %v2557
      %v2922 = vunpack.c.l.b16 %v2558
      %v2923 = vunpack.c.l.b16 %v2559
      %v2924 = vunpack.c.l.b16 %v2560
      %v2925 = vunpack.c.l.b16 %v2561
      %v2926 = vunpack.c.l.b16 %v2562
      %v2927 = vunpack.c.l.b16 %v2563
      %v2928 = vunpack.c.l.b16 %v2564
      %v2929 = vunpack.c.l.b16 %v2565
      %v2930 = vunpack.c.l.b16 %v2566
      %v2931 = vunpack.c.l.b16 %v2567
      %v2932 = vunpack.c.l.b16 %v2568
      %v2933 = vunpack.c.l.b16 %v2569
      %v2934 = vunpack.c.l.b16 %v2570
      %v2935 = vunpack.c.l.b16 %v2571
      %v2936 = vunpack.c.l.b16 %v2572
      %v2937 = vunpack.c.l.b16 %v2573
      %v2938 = vunpack.c.l.b16 %v2574
      %v2939 = vunpack.c.l.b16 %v2575
      %v2940 = vunpack.c.l.b16 %v2576
      %v2941 = vunpack.c.l.b16 %v2577
      %v2942 = vunpack.c.l.b16 %v2578
      %v2943 = vunpack.c.l.b16 %v2579
      %v2944 = vunpack.c.l.b16 %v2580
      %v2945 = vunpack.c.l.b16 %v2581
      %v2946 = vunpack.c.l.b16 %v2582
      %v2947 = vunpack.c.l.b16 %v2583
      %v2948 = vunpack.c.l.b16 %v2584
      %v2949 = vunpack.c.l.b16 %v2585
      %v2950 = vunpack.c.l.b16 %v2586
      %v2951 = vunpack.c.l.b16 %v2587
      %v2952 = vunpack.c.l.b16 %v2588
      %v2953 = vunpack.c.l.b16 %v2589
      %v2954 = vunpack.c.l.b16 %v2590
      %v2955 = vunpack.c.l.b16 %v2591
      %v2956 = vunpack.c.l.b16 %v2592
      %v2957 = vunpack.c.l.b16 %v2593
      %v2958 = vunpack.c.l.b16 %v2594
      %v2959 = vunpack.c.l.b16 %v2595
      %v2960 = vunpack.c.l.b16 %v2596
      %v2961 = vunpack.c.l.b16 %v2597
      %v2962 = vunpack.c.l.b16 %v2598
      %v2963 = vunpack.c.l.b16 %v2599
      %v2964 = vunpack.c.l.b16 %v2600
      %v2965 = vunpack.c.l.b16 %v2601
      %v2966 = vunpack.c.l.b16 %v2602
      %v2967 = vunpack.c.l.b16 %v2603
      %v2968 = vunpack.c.l.b16 %v2604
      %v2969 = vunpack.c.l.b16 %v2605
      %v2970 = vunpack.c.l.b16 %v2606
      %v2971 = vunpack.c.l.b16 %v2607
      %v2972 = vunpack.c.l.b16 %v2608
      %v2973 = vunpack.c.l.b16 %v2609
      %v2974 = vunpack.c.l.b16 %v2610
      %v2975 = vunpack.c.l.b16 %v2611
      %v2976 = vunpack.c.l.b16 %v2612
      %v2977 = vunpack.c.l.b16 %v2613
      %v2978 = vunpack.c.l.b16 %v2614
      %v2979 = vunpack.c.l.b16 %v2615
      %v2980 = vunpack.c.l.b16 %v2616
      %v2981 = vunpack.c.l.b16 %v2617
      %v2982 = vunpack.c.l.b16 %v2618
      %v2983 = vunpack.c.l.b16 %v2619
      %v2984 = vunpack.c.l.b16 %v2620
      %v2985 = vunpack.c.l.b16 %v2621
      %v2986 = vunpack.c.l.b16 %v2622
      %v2987 = vunpack.c.l.b16 %v2623
      %v2988 = vunpack.c.l.b16 %v2624
      %v2989 = vunpack.c.l.b16 %v2625
      %v2990 = vunpack.c.l.b16 %v2626
      %v2991 = vunpack.c.l.b16 %v2627
      %v2992 = vunpack.c.l.b16 %v2628
      %v2993 = vunpack.c.l.b16 %v2629
      %v2994 = vunpack.c.l.b16 %v2630
      %v2995 = vunpack.c.l.b16 %v2631
      %v2996 = vunpack.c.l.b16 %v2632
      %v2997 = vunpack.c.l.b16 %v2633
      %v2998 = vunpack.c.l.b16 %v2634
      %v2999 = vunpack.c.l.b16 %v2635
      %v3000 = vunpack.c.l.b16 %v2636
      %v3001 = vunpack.c.l.b16 %v2637
      %v3002 = vunpack.c.l.b16 %v2638
      %v3003 = vunpack.c.l.b16 %v2639
      %v3004 = vunpack.c.l.b16 %v2640
      %v3005 = vunpack.c.l.b16 %v2641
      %v3006 = vunpack.c.l.b16 %v2642
      %v3007 = vunpack.c.l.b16 %v2643
      %v3008 = vunpack.c.l.b16 %v2644
      %v3009 = vunpack.c.l.b16 %v2645
      %v3010 = vunpack.c.l.b16 %v2646
      %v3011 = vunpack.c.l.b16 %v2647
      %v3012 = vunpack.c.l.b16 %v2648
      %v3013 = vunpack.c.l.b16 %v2649
      %v3014 = vunpack.c.l.b16 %v2650
      %v3015 = vunpack.c.l.b16 %v2651
      %v3016 = vunpack.c.l.b16 %v2652
      %v3017 = vunpack.c.l.b16 %v2653
      %v3018 = vunpack.c.l.b16 %v2654
      %v3019 = vunpack.c.l.b16 %v2655
      %v3020 = vunpack.c.l.b16 %v2656
      %v3021 = vunpack.c.l.b16 %v2657
      %v3022 = vunpack.c.l.b16 %v2658
      %v3023 = vunpack.c.l.b16 %v2659
      %v3024 = vunpack.c.l.b16 %v2660
      %v3025 = vunpack.c.l.b16 %v2661
      %v3026 = vunpack.c.l.b16 %v2662
      %v3027 = vunpack.c.l.b16 %v2663
      %v3028 = vunpack.c.l.b16 %v2664
      %v3029 = vunpack.c.l.b16 %v2665
      %v3030 = vunpack.c.l.b16 %v2666
      %v3031 = vunpack.c.l.b16 %v2667
      %v3032 = vunpack.c.l.b16 %v2668
      %v3033 = vunpack.c.l.b16 %v2669
      %v3034 = vunpack.c.l.b16 %v2670
      %v3035 = vunpack.c.l.b16 %v2671
      %v3036 = vunpack.c.l.b16 %v2672
      %v3037 = vunpack.c.l.b16 %v2673
      %v3038 = vunpack.c.l.b16 %v2674
      %v3039 = vunpack.c.l.b16 %v2675
      %v3040 = vunpack.c.l.b16 %v2676
      %v3041 = vunpack.c.l.b16 %v2677
      %v3042 = vunpack.c.l.b16 %v2678
      %v3043 = vunpack.c.l.b16 %v2679
      %v3044 = vunpack.c.l.b16 %v2680
      %v3045 = vunpack.c.l.b16 %v2681
      %v3046 = vunpack.c.l.b16 %v2682
      %v3047 = vunpack.c.l.b16 %v2683
      %v3048 = vunpack.c.l.b16 %v2684
      %v3049 = vunpack.c.l.b16 %v2685
      %v3050 = vunpack.c.l.b16 %v2686
      %v3051 = vunpack.c.l.b16 %v2687
      %v3052 = vunpack.c.l.b16 %v2688
      %v3053 = vunpack.c.l.b16 %v2689
      %v3054 = vpack.c.b16 %v2911, %v2910
      %v3055 = vpack.c.b16 %v2913, %v2912
      %v3056 = vpack.c.b16 %v2915, %v2914
      %v3057 = vpack.c.b16 %v2917, %v2916
      %v3058 = vpack.c.b16 %v2919, %v2918
      %v3059 = vpack.c.b16 %v2921, %v2920
      %v3060 = vpack.c.b16 %v2923, %v2922
      %v3061 = vpack.c.b16 %v2925, %v2924
      %v3062 = vpack.c.b16 %v2927, %v2926
      %v3063 = vpack.c.b16 %v2929, %v2928
      %v3064 = vpack.c.b16 %v2931, %v2930
      %v3065 = vpack.c.b16 %v2933, %v2932
      %v3066 = vpack.c.b16 %v2935, %v2934
      %v3067 = vpack.c.b16 %v2937, %v2936
      %v3068 = vpack.c.b16 %v2939, %v2938
      %v3069 = vpack.c.b16 %v2941, %v2940
      %v3070 = vpack.c.b16 %v2943, %v2942
      %v3071 = vpack.c.b16 %v2945, %v2944
      %v3072 = vpack.c.b16 %v2947, %v2946
      %v3073 = vpack.c.b16 %v2949, %v2948
      %v3074 = vpack.c.b16 %v2951, %v2950
      %v3075 = vpack.c.b16 %v2953, %v2952
      %v3076 = vpack.c.b16 %v2955, %v2954
      %v3077 = vpack.c.b16 %v2957, %v2956
      %v3078 = vpack.c.b16 %v2959, %v2958
      %v3079 = vpack.c.b16 %v2961, %v2960
      %v3080 = vpack.c.b16 %v2963, %v2962
      %v3081 = vpack.c.b16 %v2965, %v2964
      %v3082 = vpack.c.b16 %v2967, %v2966
      %v3083 = vpack.c.b16 %v2969, %v2968
      %v3084 = vpack.c.b16 %v2971, %v2970
      %v3085 = vpack.c.b16 %v2973, %v2972
      %v3086 = vpack.c.b16 %v2975, %v2974
      %v3087 = vpack.c.b16 %v2977, %v2976
      %v3088 = vpack.c.b16 %v2979, %v2978
      %v3089 = vpack.c.b16 %v2981, %v2980
      %v3090 = vpack.c.b16 %v2983, %v2982
      %v3091 = vpack.c.b16 %v2985, %v2984
      %v3092 = vpack.c.b16 %v2987, %v2986
      %v3093 = vpack.c.b16 %v2989, %v2988
      %v3094 = vpack.c.b16 %v2991, %v2990
      %v3095 = vpack.c.b16 %v2993, %v2992
      %v3096 = vpack.c.b16 %v2995, %v2994
      %v3097 = vpack.c.b16 %v2997, %v2996
      %v3098 = vpack.c.b16 %v2999, %v2998
      %v3099 = vpack.c.b16 %v3001, %v3000
      %v3100 = vpack.c.b16 %v3003, %v3002
      %v3101 = vpack.c.b16 %v3005, %v3004
      %v3102 = vpack.c.b16 %v3007, %v3006
      %v3103 = vpack.c.b16 %v3009, %v3008
      %v3104 = vpack.c.b16 %v3011, %v3010
      %v3105 = vpack.c.b16 %v3013, %v3012
      %v3106 = vpack.c.b16 %v3015, %v3014
      %v3107 = vpack.c.b16 %v3017, %v3016
      %v3108 = vpack.c.b16 %v3019, %v3018
      %v3109 = vpack.c.b16 %v3021, %v3020
      %v3110 = vpack.c.b16 %v3023, %v3022
      %v3111 = vpack.c.b16 %v3025, %v3024
      %v3112 = vpack.c.b16 %v3027, %v3026
      %v3113 = vpack.c.b16 %v3029, %v3028
      %v3114 = vpack.c.b16 %v3031, %v3030
      %v3115 = vpack.c.b16 %v3033, %v3032
      %v3116 = vpack.c.b16 %v3035, %v3034
      %v3117 = vpack.c.b16 %v3037, %v3036
      %v3118 = vpack.c.b16 %v3039, %v3038
      %v3119 = vpack.c.b16 %v3041, %v3040
      %v3120 = vpack.c.b16 %v3043, %v3042
      %v3121 = vpack.c.b16 %v3045, %v3044
      %v3122 = vpack.c.b16 %v3047, %v3046
      %v3123 = vpack.c.b16 %v3049, %v3048
      %v3124 = vpack.c.b16 %v3051, %v3050
      %v3125 = vpack.c.b16 %v3053, %v3052
      %3198 = vmatpush.bf16.msra.mxu0 %v3061
      %3199 = vmatpush.bf16.msra.mxu0 %v3060
      %3200 = vmatpush.bf16.msra.mxu0 %v3059
      %3201 = vmatpush.bf16.msra.mxu0 %v3058
      %3202 = vmatpush.bf16.msra.mxu0 %v3057
      %3203 = vmatpush.bf16.msra.mxu0 %v3056
      %3204 = vmatpush.bf16.msra.mxu0 %v3055
      %3205 = vmatpush.bf16.msra.mxu0 %v3054
      %3206 = vmatmul.bf16.gmra.mxu0 %v2694
      %v3207 = vpop.f32.mrf.mxu0
      %v3208 = vadd.f32 %v2692, %v3207
      %v3209 = vpop.f32.mrf.mxu0
      %v3210 = vadd.f32 %v2692, %v3209
      %3211 = vmatmul.bf16.gmra.mxu0 %v2703
      %v3212 = vpop.f32.mrf.mxu0
      %v3213 = vadd.f32 %v2692, %v3212
      %v3214 = vpop.f32.mrf.mxu0
      %v3215 = vadd.f32 %v2692, %v3214
      %3216 = vmatmul.bf16.gmra.mxu0 %v2712
      %v3217 = vpop.f32.mrf.mxu0
      %v3218 = vadd.f32 %v2692, %v3217
      %v3219 = vpop.f32.mrf.mxu0
      %v3220 = vadd.f32 %v2692, %v3219
      %3221 = vmatmul.bf16.gmra.mxu0 %v2721
      %v3222 = vpop.f32.mrf.mxu0
      %v3223 = vadd.f32 %v2692, %v3222
      %v3224 = vpop.f32.mrf.mxu0
      %v3225 = vadd.f32 %v2692, %v3224
      %3226 = vdwg.mxu0
      %3227 = vmatpush.bf16.msra.mxu0 %v3069
      %3228 = vmatpush.bf16.msra.mxu0 %v3068
      %3229 = vmatpush.bf16.msra.mxu0 %v3067
      %3230 = vmatpush.bf16.msra.mxu0 %v3066
      %3231 = vmatpush.bf16.msra.mxu0 %v3065
      %3232 = vmatpush.bf16.msra.mxu0 %v3064
      %3233 = vmatpush.bf16.msra.mxu0 %v3063
      %3234 = vmatpush.bf16.msra.mxu0 %v3062
      %3235 = vmatmul.bf16.gmra.mxu0 %v2695
      %v3236 = vpop.f32.mrf.mxu0
      %v3237 = vadd.f32 %v3208, %v3236
      %v3238 = vpop.f32.mrf.mxu0
      %v3239 = vadd.f32 %v3210, %v3238
      %3240 = vmatmul.bf16.gmra.mxu0 %v2704
      %v3241 = vpop.f32.mrf.mxu0
      %v3242 = vadd.f32 %v3213, %v3241
      %v3243 = vpop.f32.mrf.mxu0
      %v3244 = vadd.f32 %v3215, %v3243
      %3245 = vmatmul.bf16.gmra.mxu0 %v2713
      %v3246 = vpop.f32.mrf.mxu0
      %v3247 = vadd.f32 %v3218, %v3246
      %v3248 = vpop.f32.mrf.mxu0
      %v3249 = vadd.f32 %v3220, %v3248
      %3250 = vmatmul.bf16.gmra.mxu0 %v2722
      %v3251 = vpop.f32.mrf.mxu0
      %v3252 = vadd.f32 %v3223, %v3251
      %v3253 = vpop.f32.mrf.mxu0
      %v3254 = vadd.f32 %v3225, %v3253
      %3255 = vdwg.mxu0
      %3256 = vmatpush.bf16.msra.mxu0 %v3077
      %3257 = vmatpush.bf16.msra.mxu0 %v3076
      %3258 = vmatpush.bf16.msra.mxu0 %v3075
      %3259 = vmatpush.bf16.msra.mxu0 %v3074
      %3260 = vmatpush.bf16.msra.mxu0 %v3073
      %3261 = vmatpush.bf16.msra.mxu0 %v3072
      %3262 = vmatpush.bf16.msra.mxu0 %v3071
      %3263 = vmatpush.bf16.msra.mxu0 %v3070
      %3264 = vmatmul.bf16.gmra.mxu0 %v2696
      %v3265 = vpop.f32.mrf.mxu0
      %v3266 = vadd.f32 %v3237, %v3265
      %v3267 = vpop.f32.mrf.mxu0
      %v3268 = vadd.f32 %v3239, %v3267
      %3269 = vmatmul.bf16.gmra.mxu0 %v2705
      %v3270 = vpop.f32.mrf.mxu0
      %v3271 = vadd.f32 %v3242, %v3270
      %v3272 = vpop.f32.mrf.mxu0
      %v3273 = vadd.f32 %v3244, %v3272
      %3274 = vmatmul.bf16.gmra.mxu0 %v2714
      %v3275 = vpop.f32.mrf.mxu0
      %v3276 = vadd.f32 %v3247, %v3275
      %v3277 = vpop.f32.mrf.mxu0
      %v3278 = vadd.f32 %v3249, %v3277
      %3279 = vmatmul.bf16.gmra.mxu0 %v2723
      %v3280 = vpop.f32.mrf.mxu0
      %v3281 = vadd.f32 %v3252, %v3280
      %v3282 = vpop.f32.mrf.mxu0
      %v3283 = vadd.f32 %v3254, %v3282
      %3284 = vdwg.mxu0
      %3285 = vmatpush.bf16.msra.mxu0 %v3085
      %3286 = vmatpush.bf16.msra.mxu0 %v3084
      %3287 = vmatpush.bf16.msra.mxu0 %v3083
      %3288 = vmatpush.bf16.msra.mxu0 %v3082
      %3289 = vmatpush.bf16.msra.mxu0 %v3081
      %3290 = vmatpush.bf16.msra.mxu0 %v3080
      %3291 = vmatpush.bf16.msra.mxu0 %v3079
      %3292 = vmatpush.bf16.msra.mxu0 %v3078
      %3293 = vmatmul.bf16.gmra.mxu0 %v2697
      %v3294 = vpop.f32.mrf.mxu0
      %v3295 = vadd.f32 %v3266, %v3294
      %v3296 = vpop.f32.mrf.mxu0
      %v3297 = vadd.f32 %v3268, %v3296
      %3298 = vmatmul.bf16.gmra.mxu0 %v2706
      %v3299 = vpop.f32.mrf.mxu0
      %v3300 = vadd.f32 %v3271, %v3299
      %v3301 = vpop.f32.mrf.mxu0
      %v3302 = vadd.f32 %v3273, %v3301
      %3303 = vmatmul.bf16.gmra.mxu0 %v2715
      %v3304 = vpop.f32.mrf.mxu0
      %v3305 = vadd.f32 %v3276, %v3304
      %v3306 = vpop.f32.mrf.mxu0
      %v3307 = vadd.f32 %v3278, %v3306
      %3308 = vmatmul.bf16.gmra.mxu0 %v2724
      %v3309 = vpop.f32.mrf.mxu0
      %v3310 = vadd.f32 %v3281, %v3309
      %v3311 = vpop.f32.mrf.mxu0
      %v3312 = vadd.f32 %v3283, %v3311
      %3313 = vdwg.mxu0
      %3314 = vmatpush.bf16.msra.mxu0 %v3093
      %3315 = vmatpush.bf16.msra.mxu0 %v3092
      %3316 = vmatpush.bf16.msra.mxu0 %v3091
      %3317 = vmatpush.bf16.msra.mxu0 %v3090
      %3318 = vmatpush.bf16.msra.mxu0 %v3089
      %3319 = vmatpush.bf16.msra.mxu0 %v3088
      %3320 = vmatpush.bf16.msra.mxu0 %v3087
      %3321 = vmatpush.bf16.msra.mxu0 %v3086
      %3322 = vmatmul.bf16.gmra.mxu0 %v2698
      %v3323 = vpop.f32.mrf.mxu0
      %v3324 = vadd.f32 %v3295, %v3323
      %v3325 = vpop.f32.mrf.mxu0
      %v3326 = vadd.f32 %v3297, %v3325
      %3327 = vmatmul.bf16.gmra.mxu0 %v2707
      %v3328 = vpop.f32.mrf.mxu0
      %v3329 = vadd.f32 %v3300, %v3328
      %v3330 = vpop.f32.mrf.mxu0
      %v3331 = vadd.f32 %v3302, %v3330
      %3332 = vmatmul.bf16.gmra.mxu0 %v2716
      %v3333 = vpop.f32.mrf.mxu0
      %v3334 = vadd.f32 %v3305, %v3333
      %v3335 = vpop.f32.mrf.mxu0
      %v3336 = vadd.f32 %v3307, %v3335
      %3337 = vmatmul.bf16.gmra.mxu0 %v2725
      %v3338 = vpop.f32.mrf.mxu0
      %v3339 = vadd.f32 %v3310, %v3338
      %v3340 = vpop.f32.mrf.mxu0
      %v3341 = vadd.f32 %v3312, %v3340
      %3342 = vdwg.mxu0
      %3343 = vmatpush.bf16.msra.mxu0 %v3101
      %3344 = vmatpush.bf16.msra.mxu0 %v3100
      %3345 = vmatpush.bf16.msra.mxu0 %v3099
      %3346 = vmatpush.bf16.msra.mxu0 %v3098
      %3347 = vmatpush.bf16.msra.mxu0 %v3097
      %3348 = vmatpush.bf16.msra.mxu0 %v3096
      %3349 = vmatpush.bf16.msra.mxu0 %v3095
      %3350 = vmatpush.bf16.msra.mxu0 %v3094
      %3351 = vmatmul.bf16.gmra.mxu0 %v2699
      %v3352 = vpop.f32.mrf.mxu0
      %v3353 = vadd.f32 %v3324, %v3352
      %v3354 = vpop.f32.mrf.mxu0
      %v3355 = vadd.f32 %v3326, %v3354
      %3356 = vmatmul.bf16.gmra.mxu0 %v2708
      %v3357 = vpop.f32.mrf.mxu0
      %v3358 = vadd.f32 %v3329, %v3357
      %v3359 = vpop.f32.mrf.mxu0
      %v3360 = vadd.f32 %v3331, %v3359
      %3361 = vmatmul.bf16.gmra.mxu0 %v2717
      %v3362 = vpop.f32.mrf.mxu0
      %v3363 = vadd.f32 %v3334, %v3362
      %v3364 = vpop.f32.mrf.mxu0
      %v3365 = vadd.f32 %v3336, %v3364
      %3366 = vmatmul.bf16.gmra.mxu0 %v2726
      %v3367 = vpop.f32.mrf.mxu0
      %v3368 = vadd.f32 %v3339, %v3367
      %v3369 = vpop.f32.mrf.mxu0
      %v3370 = vadd.f32 %v3341, %v3369
      %3371 = vdwg.mxu0
      %3372 = vmatpush.bf16.msra.mxu0 %v3109
      %3373 = vmatpush.bf16.msra.mxu0 %v3108
      %3374 = vmatpush.bf16.msra.mxu0 %v3107
      %3375 = vmatpush.bf16.msra.mxu0 %v3106
      %3376 = vmatpush.bf16.msra.mxu0 %v3105
      %3377 = vmatpush.bf16.msra.mxu0 %v3104
      %3378 = vmatpush.bf16.msra.mxu0 %v3103
      %3379 = vmatpush.bf16.msra.mxu0 %v3102
      %3380 = vmatmul.bf16.gmra.mxu0 %v2700
      %v3381 = vpop.f32.mrf.mxu0
      %v3382 = vadd.f32 %v3353, %v3381
      %v3383 = vpop.f32.mrf.mxu0
      %v3384 = vadd.f32 %v3355, %v3383
      %3385 = vmatmul.bf16.gmra.mxu0 %v2709
      %v3386 = vpop.f32.mrf.mxu0
      %v3387 = vadd.f32 %v3358, %v3386
      %v3388 = vpop.f32.mrf.mxu0
      %v3389 = vadd.f32 %v3360, %v3388
      %3390 = vmatmul.bf16.gmra.mxu0 %v2718
      %v3391 = vpop.f32.mrf.mxu0
      %v3392 = vadd.f32 %v3363, %v3391
      %v3393 = vpop.f32.mrf.mxu0
      %v3394 = vadd.f32 %v3365, %v3393
      %3395 = vmatmul.bf16.gmra.mxu0 %v2727
      %v3396 = vpop.f32.mrf.mxu0
      %v3397 = vadd.f32 %v3368, %v3396
      %v3398 = vpop.f32.mrf.mxu0
      %v3399 = vadd.f32 %v3370, %v3398
      %3400 = vdwg.mxu0
      %3401 = vmatpush.bf16.msra.mxu0 %v3117
      %3402 = vmatpush.bf16.msra.mxu0 %v3116
      %3403 = vmatpush.bf16.msra.mxu0 %v3115
      %3404 = vmatpush.bf16.msra.mxu0 %v3114
      %3405 = vmatpush.bf16.msra.mxu0 %v3113
      %3406 = vmatpush.bf16.msra.mxu0 %v3112
      %3407 = vmatpush.bf16.msra.mxu0 %v3111
      %3408 = vmatpush.bf16.msra.mxu0 %v3110
      %3409 = vmatmul.bf16.gmra.mxu0 %v2701
      %v3410 = vpop.f32.mrf.mxu0
      %v3411 = vadd.f32 %v3382, %v3410
      %v3412 = vpop.f32.mrf.mxu0
      %v3413 = vadd.f32 %v3384, %v3412
      %3414 = vmatmul.bf16.gmra.mxu0 %v2710
      %v3415 = vpop.f32.mrf.mxu0
      %v3416 = vadd.f32 %v3387, %v3415
      %v3417 = vpop.f32.mrf.mxu0
      %v3418 = vadd.f32 %v3389, %v3417
      %3419 = vmatmul.bf16.gmra.mxu0 %v2719
      %v3420 = vpop.f32.mrf.mxu0
      %v3421 = vadd.f32 %v3392, %v3420
      %v3422 = vpop.f32.mrf.mxu0
      %v3423 = vadd.f32 %v3394, %v3422
      %3424 = vmatmul.bf16.gmra.mxu0 %v2728
      %v3425 = vpop.f32.mrf.mxu0
      %v3426 = vadd.f32 %v3397, %v3425
      %v3427 = vpop.f32.mrf.mxu0
      %v3428 = vadd.f32 %v3399, %v3427
      %3429 = vdwg.mxu0
      %3430 = vmatpush.bf16.msra.mxu0 %v3125
      %3431 = vmatpush.bf16.msra.mxu0 %v3124
      %3432 = vmatpush.bf16.msra.mxu0 %v3123
      %3433 = vmatpush.bf16.msra.mxu0 %v3122
      %3434 = vmatpush.bf16.msra.mxu0 %v3121
      %3435 = vmatpush.bf16.msra.mxu0 %v3120
      %3436 = vmatpush.bf16.msra.mxu0 %v3119
      %3437 = vmatpush.bf16.msra.mxu0 %v3118
      %3438 = vmatmul.bf16.gmra.mxu0 %v2702
      %v3439 = vpop.f32.mrf.mxu0
      %v3440 = vadd.f32 %v3411, %v3439
      %v3441 = vpop.f32.mrf.mxu0
      %v3442 = vadd.f32 %v3413, %v3441
      %3443 = vmatmul.bf16.gmra.mxu0 %v2711
      %v3444 = vpop.f32.mrf.mxu0
      %v3445 = vadd.f32 %v3416, %v3444
      %v3446 = vpop.f32.mrf.mxu0
      %v3447 = vadd.f32 %v3418, %v3446
      %3448 = vmatmul.bf16.gmra.mxu0 %v2720
      %v3449 = vpop.f32.mrf.mxu0
      %v3450 = vadd.f32 %v3421, %v3449
      %v3451 = vpop.f32.mrf.mxu0
      %v3452 = vadd.f32 %v3423, %v3451
      %3453 = vmatmul.bf16.gmra.mxu0 %v2729
      %v3454 = vpop.f32.mrf.mxu0
      %v3455 = vadd.f32 %v3426, %v3454
      %v3456 = vpop.f32.mrf.mxu0
      %v3457 = vadd.f32 %v3428, %v3456
      %3458 = vdwg.mxu0
      %v3459 = vadd.f32 %v3440, %v2022
      %v3460 = vadd.f32 %v3442, %v2024
      %v3461 = vadd.f32 %v3445, %v2027
      %v3462 = vadd.f32 %v3447, %v2029
      %v3463 = vadd.f32 %v3450, %v2032
      %v3464 = vadd.f32 %v3452, %v2034
      %v3465 = vadd.f32 %v3455, %v2037
      %v3466 = vadd.f32 %v3457, %v2039
      %v3467 = vmax.f32 %v3459, 0.0
      %v3468 = vmax.f32 %v3460, 0.0
      %v3469 = vmax.f32 %v3461, 0.0
      %v3470 = vmax.f32 %v3462, 0.0
      %v3471 = vmax.f32 %v3463, 0.0
      %v3472 = vmax.f32 %v3464, 0.0
      %v3473 = vmax.f32 %v3465, 0.0
      %v3474 = vmax.f32 %v3466, 0.0
      %v3475 = vpack.c.bf16 %v3467, %v3467
      %v3476 = vpack.c.bf16 %v3468, %v3468
      %v3477 = vpack.c.bf16 %v3469, %v3469
      %v3478 = vpack.c.bf16 %v3470, %v3470
      %v3479 = vpack.c.bf16 %v3471, %v3471
      %v3480 = vpack.c.bf16 %v3472, %v3472
      %v3481 = vpack.c.bf16 %v3473, %v3473
      %v3482 = vpack.c.bf16 %v3474, %v3474
      %v3484 = vshrl.u32 %v3475, 16
      %v3486 = vrot.slane %v3484, 7
      %v3487 = vshll.u32 %v3475, 16
      %v3489 = vor.u32 %v3486, %v3487
      %v3490 = vrot.slane %v3486, 4
      %v3492 = vshrl.u32 %v3476, 16
      %v3494 = vrot.slane %v3492, 7
      %v3495 = vshll.u32 %v3476, 16
      %v3497 = vor.u32 %v3494, %v3495
      %v3498 = vrot.slane %v3494, 4
      %v3500 = vshrl.u32 %v3477, 16
      %v3502 = vrot.slane %v3500, 7
      %v3503 = vshll.u32 %v3477, 16
      %v3505 = vor.u32 %v3502, %v3503
      %v3506 = vrot.slane %v3502, 4
      %v3508 = vshrl.u32 %v3478, 16
      %v3510 = vrot.slane %v3508, 7
      %v3511 = vshll.u32 %v3478, 16
      %v3513 = vor.u32 %v3510, %v3511
      %v3514 = vrot.slane %v3510, 4
      %v3516 = vshrl.u32 %v3479, 16
      %v3518 = vrot.slane %v3516, 7
      %v3519 = vshll.u32 %v3479, 16
      %v3521 = vor.u32 %v3518, %v3519
      %v3522 = vrot.slane %v3518, 4
      %v3524 = vshrl.u32 %v3480, 16
      %v3526 = vrot.slane %v3524, 7
      %v3527 = vshll.u32 %v3480, 16
      %v3529 = vor.u32 %v3526, %v3527
      %v3530 = vrot.slane %v3526, 4
      %v3532 = vshrl.u32 %v3481, 16
      %v3534 = vrot.slane %v3532, 7
      %v3535 = vshll.u32 %v3481, 16
      %v3537 = vor.u32 %v3534, %v3535
      %v3538 = vrot.slane %v3534, 4
      %v3540 = vshrl.u32 %v3482, 16
      %v3542 = vrot.slane %v3540, 7
      %v3543 = vshll.u32 %v3482, 16
      %v3545 = vor.u32 %v3542, %v3543
      %v3546 = vrot.slane %v3542, 4
      %s3563 = scalar_lea.vmem [#allocation2], 8
      %v3564 = vld [vmem:[%s3563] sm:$0xf]
      %v3565 = vsel %vm1863, %v3489, %v3564
      %3566 = vst [vmem:[%s3563] sm:$0xf] %v3565
      %v3567 = vld [vmem:[%s3563 + $0x4] sm:$0x1]
      %v3568 = vsel %vm287, %v3490, %v3567
      %3569 = vst [vmem:[%s3563 + $0x4] sm:$0x1] %v3568
      %v3570 = vld [vmem:[%s3563 + $0x8] sm:$0xf]
      %v3571 = vsel %vm1863, %v3497, %v3570
      %3572 = vst [vmem:[%s3563 + $0x8] sm:$0xf] %v3571
      %v3573 = vld [vmem:[%s3563 + $0xc] sm:$0x1]
      %v3574 = vsel %vm287, %v3498, %v3573
      %3575 = vst [vmem:[%s3563 + $0xc] sm:$0x1] %v3574
      %v3576 = vld [vmem:[%s3563 + $0x10] sm:$0xf]
      %v3577 = vsel %vm1863, %v3505, %v3576
      %3578 = vst [vmem:[%s3563 + $0x10] sm:$0xf] %v3577
      %v3579 = vld [vmem:[%s3563 + $0x14] sm:$0x1]
      %v3580 = vsel %vm287, %v3506, %v3579
      %3581 = vst [vmem:[%s3563 + $0x14] sm:$0x1] %v3580
      %v3582 = vld [vmem:[%s3563 + $0x18] sm:$0xf]
      %v3583 = vsel %vm1863, %v3513, %v3582
      %3584 = vst [vmem:[%s3563 + $0x18] sm:$0xf] %v3583
      %v3585 = vld [vmem:[%s3563 + $0x1c] sm:$0x1]
      %v3586 = vsel %vm287, %v3514, %v3585
      %3587 = vst [vmem:[%s3563 + $0x1c] sm:$0x1] %v3586
      %v3588 = vld [vmem:[%s3563 + $0x20] sm:$0xf]
      %v3589 = vsel %vm1863, %v3521, %v3588
      %3590 = vst [vmem:[%s3563 + $0x20] sm:$0xf] %v3589
      %v3591 = vld [vmem:[%s3563 + $0x24] sm:$0x1]
      %v3592 = vsel %vm287, %v3522, %v3591
      %3593 = vst [vmem:[%s3563 + $0x24] sm:$0x1] %v3592
      %v3594 = vld [vmem:[%s3563 + $0x28] sm:$0xf]
      %v3595 = vsel %vm1863, %v3529, %v3594
      %3596 = vst [vmem:[%s3563 + $0x28] sm:$0xf] %v3595
      %v3597 = vld [vmem:[%s3563 + $0x2c] sm:$0x1]
      %v3598 = vsel %vm287, %v3530, %v3597
      %3599 = vst [vmem:[%s3563 + $0x2c] sm:$0x1] %v3598
      %v3600 = vld [vmem:[%s3563 + $0x30] sm:$0xf]
      %v3601 = vsel %vm1863, %v3537, %v3600
      %3602 = vst [vmem:[%s3563 + $0x30] sm:$0xf] %v3601
      %v3603 = vld [vmem:[%s3563 + $0x34] sm:$0x1]
      %v3604 = vsel %vm287, %v3538, %v3603
      %3605 = vst [vmem:[%s3563 + $0x34] sm:$0x1] %v3604
      %v3606 = vld [vmem:[%s3563 + $0x38] sm:$0xf]
      %v3607 = vsel %vm1863, %v3545, %v3606
      %3608 = vst [vmem:[%s3563 + $0x38] sm:$0xf] %v3607
      %v3609 = vld [vmem:[%s3563 + $0x3c] sm:$0x1]
      %v3610 = vsel %vm287, %v3546, %v3609
      %3611 = vst [vmem:[%s3563 + $0x3c] sm:$0x1] %v3610
      %v3612 = vld [vmem:[#allocation2] sm:$0xf]
      %v3613 = vld [vmem:[#allocation2 + $0x8] sm:$0xf]
      %v3614 = vld [vmem:[#allocation2 + $0x10] sm:$0xf]
      %v3615 = vld [vmem:[#allocation2 + $0x18] sm:$0xf]
      %v3616 = vld [vmem:[#allocation2 + $0x20] sm:$0xf]
      %v3617 = vld [vmem:[#allocation2 + $0x28] sm:$0xf]
      %v3618 = vld [vmem:[#allocation2 + $0x30] sm:$0xf]
      %v3619 = vld [vmem:[#allocation2 + $0x38] sm:$0xf]
      %v3620 = vld [vmem:[#allocation2 + $0x4] sm:$0x1]
      %v3621 = vld [vmem:[#allocation2 + $0xc] sm:$0x1]
      %v3622 = vld [vmem:[#allocation2 + $0x14] sm:$0x1]
      %v3623 = vld [vmem:[#allocation2 + $0x1c] sm:$0x1]
      %v3624 = vld [vmem:[#allocation2 + $0x24] sm:$0x1]
      %v3625 = vld [vmem:[#allocation2 + $0x2c] sm:$0x1]
      %v3626 = vld [vmem:[#allocation2 + $0x34] sm:$0x1]
      %v3627 = vld [vmem:[#allocation2 + $0x3c] sm:$0x1]
      %v3628 = vld [vmem:[#allocation2] sm:$0xe]
      %v3629 = vld [vmem:[#allocation2 + $0x8] sm:$0xe]
      %v3630 = vld [vmem:[#allocation2 + $0x10] sm:$0xe]
      %v3631 = vld [vmem:[#allocation2 + $0x18] sm:$0xe]
      %v3632 = vld [vmem:[#allocation2 + $0x20] sm:$0xe]
      %v3633 = vld [vmem:[#allocation2 + $0x28] sm:$0xe]
      %v3634 = vld [vmem:[#allocation2 + $0x30] sm:$0xe]
      %v3635 = vld [vmem:[#allocation2 + $0x38] sm:$0xe]
      %v3636 = vld [vmem:[%s3563] sm:$0xf]
      %v3637 = vld [vmem:[%s3563 + $0x8] sm:$0xf]
      %v3638 = vld [vmem:[%s3563 + $0x10] sm:$0xf]
      %v3639 = vld [vmem:[%s3563 + $0x18] sm:$0xf]
      %v3640 = vld [vmem:[%s3563 + $0x20] sm:$0xf]
      %v3641 = vld [vmem:[%s3563 + $0x28] sm:$0xf]
      %v3642 = vld [vmem:[%s3563 + $0x30] sm:$0xf]
      %v3643 = vld [vmem:[%s3563 + $0x38] sm:$0xf]
      %v3644 = vld [vmem:[%s3563 + $0x4] sm:$0x1]
      %v3645 = vld [vmem:[%s3563 + $0xc] sm:$0x1]
      %v3646 = vld [vmem:[%s3563 + $0x14] sm:$0x1]
      %v3647 = vld [vmem:[%s3563 + $0x1c] sm:$0x1]
      %v3648 = vld [vmem:[%s3563 + $0x24] sm:$0x1]
      %v3649 = vld [vmem:[%s3563 + $0x2c] sm:$0x1]
      %v3650 = vld [vmem:[%s3563 + $0x34] sm:$0x1]
      %v3651 = vld [vmem:[%s3563 + $0x3c] sm:$0x1]
      %v3652 = vld [vmem:[%s3563] sm:$0xe]
      %v3653 = vld [vmem:[%s3563 + $0x8] sm:$0xe]
      %v3654 = vld [vmem:[%s3563 + $0x10] sm:$0xe]
      %v3655 = vld [vmem:[%s3563 + $0x18] sm:$0xe]
      %v3656 = vld [vmem:[%s3563 + $0x20] sm:$0xe]
      %v3657 = vld [vmem:[%s3563 + $0x28] sm:$0xe]
      %v3658 = vld [vmem:[%s3563 + $0x30] sm:$0xe]
      %v3659 = vld [vmem:[%s3563 + $0x38] sm:$0xe]
      %s3660 = scalar_lea.vmem [#allocation2], 16
      %v3661 = vld [vmem:[%s3660] sm:$0xf]
      %v3662 = vld [vmem:[%s3660 + $0x8] sm:$0xf]
      %v3663 = vld [vmem:[%s3660 + $0x10] sm:$0xf]
      %v3664 = vld [vmem:[%s3660 + $0x18] sm:$0xf]
      %v3665 = vld [vmem:[%s3660 + $0x20] sm:$0xf]
      %v3666 = vld [vmem:[%s3660 + $0x28] sm:$0xf]
      %v3667 = vld [vmem:[%s3660 + $0x30] sm:$0xf]
      %v3668 = vld [vmem:[%s3660 + $0x38] sm:$0xf]
      %v3669 = vld [vmem:[%s3660 + $0x4] sm:$0x1]
      %v3670 = vld [vmem:[%s3660 + $0xc] sm:$0x1]
      %v3671 = vld [vmem:[%s3660 + $0x14] sm:$0x1]
      %v3672 = vld [vmem:[%s3660 + $0x1c] sm:$0x1]
      %v3673 = vld [vmem:[%s3660 + $0x24] sm:$0x1]
      %v3674 = vld [vmem:[%s3660 + $0x2c] sm:$0x1]
      %v3675 = vld [vmem:[%s3660 + $0x34] sm:$0x1]
      %v3676 = vld [vmem:[%s3660 + $0x3c] sm:$0x1]
      %v3677 = vld [vmem:[%s3660] sm:$0xe]
      %v3678 = vld [vmem:[%s3660 + $0x8] sm:$0xe]
      %v3679 = vld [vmem:[%s3660 + $0x10] sm:$0xe]
      %v3680 = vld [vmem:[%s3660 + $0x18] sm:$0xe]
      %v3681 = vld [vmem:[%s3660 + $0x20] sm:$0xe]
      %v3682 = vld [vmem:[%s3660 + $0x28] sm:$0xe]
      %v3683 = vld [vmem:[%s3660 + $0x30] sm:$0xe]
      %v3684 = vld [vmem:[%s3660 + $0x38] sm:$0xe]
      %v3701 = vunpack.c.l.b16 %v3612
      %v3702 = vunpack.c.l.b16 %v3620
      %v3703 = vunpack.c.l.b16 %v3613
      %v3704 = vunpack.c.l.b16 %v3621
      %v3705 = vunpack.c.l.b16 %v3614
      %v3706 = vunpack.c.l.b16 %v3622
      %v3707 = vunpack.c.l.b16 %v3615
      %v3708 = vunpack.c.l.b16 %v3623
      %v3709 = vunpack.c.l.b16 %v3616
      %v3710 = vunpack.c.l.b16 %v3624
      %v3711 = vunpack.c.l.b16 %v3617
      %v3712 = vunpack.c.l.b16 %v3625
      %v3713 = vunpack.c.l.b16 %v3618
      %v3714 = vunpack.c.l.b16 %v3626
      %v3715 = vunpack.c.l.b16 %v3619
      %v3716 = vunpack.c.l.b16 %v3627
      %v3717 = vpack.c.b16 %v3702, %v3701
      %v3718 = vpack.c.b16 %v3704, %v3703
      %v3719 = vpack.c.b16 %v3706, %v3705
      %v3720 = vpack.c.b16 %v3708, %v3707
      %v3721 = vpack.c.b16 %v3710, %v3709
      %v3722 = vpack.c.b16 %v3712, %v3711
      %v3723 = vpack.c.b16 %v3714, %v3713
      %v3724 = vpack.c.b16 %v3716, %v3715
      %v3726 = vshrl.u32 %v3717, 16
      %v3728 = vshll.u32 %v3717, 16
      %v3730 = vrot.slane %v3728, 1
      %v3731 = vor.u32 %v3726, %v3730
      %v3733 = vshrl.u32 %v3718, 16
      %v3735 = vshll.u32 %v3718, 16
      %v3737 = vrot.slane %v3735, 1
      %v3738 = vor.u32 %v3733, %v3737
      %v3740 = vshrl.u32 %v3719, 16
      %v3742 = vshll.u32 %v3719, 16
      %v3744 = vrot.slane %v3742, 1
      %v3745 = vor.u32 %v3740, %v3744
      %v3747 = vshrl.u32 %v3720, 16
      %v3749 = vshll.u32 %v3720, 16
      %v3751 = vrot.slane %v3749, 1
      %v3752 = vor.u32 %v3747, %v3751
      %v3754 = vshrl.u32 %v3721, 16
      %v3756 = vshll.u32 %v3721, 16
      %v3758 = vrot.slane %v3756, 1
      %v3759 = vor.u32 %v3754, %v3758
      %v3761 = vshrl.u32 %v3722, 16
      %v3763 = vshll.u32 %v3722, 16
      %v3765 = vrot.slane %v3763, 1
      %v3766 = vor.u32 %v3761, %v3765
      %v3768 = vshrl.u32 %v3723, 16
      %v3770 = vshll.u32 %v3723, 16
      %v3772 = vrot.slane %v3770, 1
      %v3773 = vor.u32 %v3768, %v3772
      %v3775 = vshrl.u32 %v3724, 16
      %v3777 = vshll.u32 %v3724, 16
      %v3779 = vrot.slane %v3777, 1
      %v3780 = vor.u32 %v3775, %v3779
      %v3789 = vunpack.c.l.b16 %v3628
      %v3790 = vunpack.c.l.b16 %v3629
      %v3791 = vunpack.c.l.b16 %v3630
      %v3792 = vunpack.c.l.b16 %v3631
      %v3793 = vunpack.c.l.b16 %v3632
      %v3794 = vunpack.c.l.b16 %v3633
      %v3795 = vunpack.c.l.b16 %v3634
      %v3796 = vunpack.c.l.b16 %v3635
      %v3797 = vpack.c.b16 %v3702, %v3789
      %v3798 = vpack.c.b16 %v3704, %v3790
      %v3799 = vpack.c.b16 %v3706, %v3791
      %v3800 = vpack.c.b16 %v3708, %v3792
      %v3801 = vpack.c.b16 %v3710, %v3793
      %v3802 = vpack.c.b16 %v3712, %v3794
      %v3803 = vpack.c.b16 %v3714, %v3795
      %v3804 = vpack.c.b16 %v3716, %v3796
      %v3805 = vrot.slane %v3797, 1
      %v3806 = vrot.slane %v3798, 1
      %v3807 = vrot.slane %v3799, 1
      %v3808 = vrot.slane %v3800, 1
      %v3809 = vrot.slane %v3801, 1
      %v3810 = vrot.slane %v3802, 1
      %v3811 = vrot.slane %v3803, 1
      %v3812 = vrot.slane %v3804, 1
      %v3829 = vunpack.c.l.b16 %v3636
      %v3830 = vunpack.c.l.b16 %v3644
      %v3831 = vunpack.c.l.b16 %v3637
      %v3832 = vunpack.c.l.b16 %v3645
      %v3833 = vunpack.c.l.b16 %v3638
      %v3834 = vunpack.c.l.b16 %v3646
      %v3835 = vunpack.c.l.b16 %v3639
      %v3836 = vunpack.c.l.b16 %v3647
      %v3837 = vunpack.c.l.b16 %v3640
      %v3838 = vunpack.c.l.b16 %v3648
      %v3839 = vunpack.c.l.b16 %v3641
      %v3840 = vunpack.c.l.b16 %v3649
      %v3841 = vunpack.c.l.b16 %v3642
      %v3842 = vunpack.c.l.b16 %v3650
      %v3843 = vunpack.c.l.b16 %v3643
      %v3844 = vunpack.c.l.b16 %v3651
      %v3845 = vpack.c.b16 %v3830, %v3829
      %v3846 = vpack.c.b16 %v3832, %v3831
      %v3847 = vpack.c.b16 %v3834, %v3833
      %v3848 = vpack.c.b16 %v3836, %v3835
      %v3849 = vpack.c.b16 %v3838, %v3837
      %v3850 = vpack.c.b16 %v3840, %v3839
      %v3851 = vpack.c.b16 %v3842, %v3841
      %v3852 = vpack.c.b16 %v3844, %v3843
      %v3854 = vshrl.u32 %v3845, 16
      %v3856 = vshll.u32 %v3845, 16
      %v3858 = vrot.slane %v3856, 1
      %v3859 = vor.u32 %v3854, %v3858
      %v3861 = vshrl.u32 %v3846, 16
      %v3863 = vshll.u32 %v3846, 16
      %v3865 = vrot.slane %v3863, 1
      %v3866 = vor.u32 %v3861, %v3865
      %v3868 = vshrl.u32 %v3847, 16
      %v3870 = vshll.u32 %v3847, 16
      %v3872 = vrot.slane %v3870, 1
      %v3873 = vor.u32 %v3868, %v3872
      %v3875 = vshrl.u32 %v3848, 16
      %v3877 = vshll.u32 %v3848, 16
      %v3879 = vrot.slane %v3877, 1
      %v3880 = vor.u32 %v3875, %v3879
      %v3882 = vshrl.u32 %v3849, 16
      %v3884 = vshll.u32 %v3849, 16
      %v3886 = vrot.slane %v3884, 1
      %v3887 = vor.u32 %v3882, %v3886
      %v3889 = vshrl.u32 %v3850, 16
      %v3891 = vshll.u32 %v3850, 16
      %v3893 = vrot.slane %v3891, 1
      %v3894 = vor.u32 %v3889, %v3893
      %v3896 = vshrl.u32 %v3851, 16
      %v3898 = vshll.u32 %v3851, 16
      %v3900 = vrot.slane %v3898, 1
      %v3901 = vor.u32 %v3896, %v3900
      %v3903 = vshrl.u32 %v3852, 16
      %v3905 = vshll.u32 %v3852, 16
      %v3907 = vrot.slane %v3905, 1
      %v3908 = vor.u32 %v3903, %v3907
      %v3917 = vunpack.c.l.b16 %v3652
      %v3918 = vunpack.c.l.b16 %v3653
      %v3919 = vunpack.c.l.b16 %v3654
      %v3920 = vunpack.c.l.b16 %v3655
      %v3921 = vunpack.c.l.b16 %v3656
      %v3922 = vunpack.c.l.b16 %v3657
      %v3923 = vunpack.c.l.b16 %v3658
      %v3924 = vunpack.c.l.b16 %v3659
      %v3925 = vpack.c.b16 %v3830, %v3917
      %v3926 = vpack.c.b16 %v3832, %v3918
      %v3927 = vpack.c.b16 %v3834, %v3919
      %v3928 = vpack.c.b16 %v3836, %v3920
      %v3929 = vpack.c.b16 %v3838, %v3921
      %v3930 = vpack.c.b16 %v3840, %v3922
      %v3931 = vpack.c.b16 %v3842, %v3923
      %v3932 = vpack.c.b16 %v3844, %v3924
      %v3933 = vrot.slane %v3925, 1
      %v3934 = vrot.slane %v3926, 1
      %v3935 = vrot.slane %v3927, 1
      %v3936 = vrot.slane %v3928, 1
      %v3937 = vrot.slane %v3929, 1
      %v3938 = vrot.slane %v3930, 1
      %v3939 = vrot.slane %v3931, 1
      %v3940 = vrot.slane %v3932, 1
      %v3957 = vunpack.c.l.b16 %v3661
      %v3958 = vunpack.c.l.b16 %v3669
      %v3959 = vunpack.c.l.b16 %v3662
      %v3960 = vunpack.c.l.b16 %v3670
      %v3961 = vunpack.c.l.b16 %v3663
      %v3962 = vunpack.c.l.b16 %v3671
      %v3963 = vunpack.c.l.b16 %v3664
      %v3964 = vunpack.c.l.b16 %v3672
      %v3965 = vunpack.c.l.b16 %v3665
      %v3966 = vunpack.c.l.b16 %v3673
      %v3967 = vunpack.c.l.b16 %v3666
      %v3968 = vunpack.c.l.b16 %v3674
      %v3969 = vunpack.c.l.b16 %v3667
      %v3970 = vunpack.c.l.b16 %v3675
      %v3971 = vunpack.c.l.b16 %v3668
      %v3972 = vunpack.c.l.b16 %v3676
      %v3973 = vpack.c.b16 %v3958, %v3957
      %v3974 = vpack.c.b16 %v3960, %v3959
      %v3975 = vpack.c.b16 %v3962, %v3961
      %v3976 = vpack.c.b16 %v3964, %v3963
      %v3977 = vpack.c.b16 %v3966, %v3965
      %v3978 = vpack.c.b16 %v3968, %v3967
      %v3979 = vpack.c.b16 %v3970, %v3969
      %v3980 = vpack.c.b16 %v3972, %v3971
      %v3982 = vshrl.u32 %v3973, 16
      %v3984 = vshll.u32 %v3973, 16
      %v3986 = vrot.slane %v3984, 1
      %v3987 = vor.u32 %v3982, %v3986
      %v3989 = vshrl.u32 %v3974, 16
      %v3991 = vshll.u32 %v3974, 16
      %v3993 = vrot.slane %v3991, 1
      %v3994 = vor.u32 %v3989, %v3993
      %v3996 = vshrl.u32 %v3975, 16
      %v3998 = vshll.u32 %v3975, 16
      %v4000 = vrot.slane %v3998, 1
      %v4001 = vor.u32 %v3996, %v4000
      %v4003 = vshrl.u32 %v3976, 16
      %v4005 = vshll.u32 %v3976, 16
      %v4007 = vrot.slane %v4005, 1
      %v4008 = vor.u32 %v4003, %v4007
      %v4010 = vshrl.u32 %v3977, 16
      %v4012 = vshll.u32 %v3977, 16
      %v4014 = vrot.slane %v4012, 1
      %v4015 = vor.u32 %v4010, %v4014
      %v4017 = vshrl.u32 %v3978, 16
      %v4019 = vshll.u32 %v3978, 16
      %v4021 = vrot.slane %v4019, 1
      %v4022 = vor.u32 %v4017, %v4021
      %v4024 = vshrl.u32 %v3979, 16
      %v4026 = vshll.u32 %v3979, 16
      %v4028 = vrot.slane %v4026, 1
      %v4029 = vor.u32 %v4024, %v4028
      %v4031 = vshrl.u32 %v3980, 16
      %v4033 = vshll.u32 %v3980, 16
      %v4035 = vrot.slane %v4033, 1
      %v4036 = vor.u32 %v4031, %v4035
      %v4045 = vunpack.c.l.b16 %v3677
      %v4046 = vunpack.c.l.b16 %v3678
      %v4047 = vunpack.c.l.b16 %v3679
      %v4048 = vunpack.c.l.b16 %v3680
      %v4049 = vunpack.c.l.b16 %v3681
      %v4050 = vunpack.c.l.b16 %v3682
      %v4051 = vunpack.c.l.b16 %v3683
      %v4052 = vunpack.c.l.b16 %v3684
      %v4053 = vpack.c.b16 %v3958, %v4045
      %v4054 = vpack.c.b16 %v3960, %v4046
      %v4055 = vpack.c.b16 %v3962, %v4047
      %v4056 = vpack.c.b16 %v3964, %v4048
      %v4057 = vpack.c.b16 %v3966, %v4049
      %v4058 = vpack.c.b16 %v3968, %v4050
      %v4059 = vpack.c.b16 %v3970, %v4051
      %v4060 = vpack.c.b16 %v3972, %v4052
      %v4061 = vrot.slane %v4053, 1
      %v4062 = vrot.slane %v4054, 1
      %v4063 = vrot.slane %v4055, 1
      %v4064 = vrot.slane %v4056, 1
      %v4065 = vrot.slane %v4057, 1
      %v4066 = vrot.slane %v4058, 1
      %v4067 = vrot.slane %v4059, 1
      %v4068 = vrot.slane %v4060, 1
      %v4069 = vunpack.c.l.b16 %v3731
      %v4070 = vunpack.c.l.b16 %v3805
      %v4071 = vunpack.c.l.b16 %v3859
      %v4072 = vunpack.c.l.b16 %v3933
      %v4073 = vunpack.c.l.b16 %v3987
      %v4074 = vunpack.c.l.b16 %v4061
      %v4075 = vunpack.c.l.b16 %v3738
      %v4076 = vunpack.c.l.b16 %v3806
      %v4077 = vunpack.c.l.b16 %v3866
      %v4078 = vunpack.c.l.b16 %v3934
      %v4079 = vunpack.c.l.b16 %v3994
      %v4080 = vunpack.c.l.b16 %v4062
      %v4081 = vunpack.c.l.b16 %v3745
      %v4082 = vunpack.c.l.b16 %v3807
      %v4083 = vunpack.c.l.b16 %v3873
      %v4084 = vunpack.c.l.b16 %v3935
      %v4085 = vunpack.c.l.b16 %v4001
      %v4086 = vunpack.c.l.b16 %v4063
      %v4087 = vunpack.c.l.b16 %v3752
      %v4088 = vunpack.c.l.b16 %v3808
      %v4089 = vunpack.c.l.b16 %v3880
      %v4090 = vunpack.c.l.b16 %v3936
      %v4091 = vunpack.c.l.b16 %v4008
      %v4092 = vunpack.c.l.b16 %v4064
      %v4093 = vunpack.c.l.b16 %v3759
      %v4094 = vunpack.c.l.b16 %v3809
      %v4095 = vunpack.c.l.b16 %v3887
      %v4096 = vunpack.c.l.b16 %v3937
      %v4097 = vunpack.c.l.b16 %v4015
      %v4098 = vunpack.c.l.b16 %v4065
      %v4099 = vunpack.c.l.b16 %v3766
      %v4100 = vunpack.c.l.b16 %v3810
      %v4101 = vunpack.c.l.b16 %v3894
      %v4102 = vunpack.c.l.b16 %v3938
      %v4103 = vunpack.c.l.b16 %v4022
      %v4104 = vunpack.c.l.b16 %v4066
      %v4105 = vunpack.c.l.b16 %v3773
      %v4106 = vunpack.c.l.b16 %v3811
      %v4107 = vunpack.c.l.b16 %v3901
      %v4108 = vunpack.c.l.b16 %v3939
      %v4109 = vunpack.c.l.b16 %v4029
      %v4110 = vunpack.c.l.b16 %v4067
      %v4111 = vunpack.c.l.b16 %v3780
      %v4112 = vunpack.c.l.b16 %v3812
      %v4113 = vunpack.c.l.b16 %v3908
      %v4114 = vunpack.c.l.b16 %v3940
      %v4115 = vunpack.c.l.b16 %v4036
      %v4116 = vunpack.c.l.b16 %v4068
      %s4117 = scalar_lea.vmem %s1, 576
      %v4118 = vld [vmem:[%s4117] sm:$0xf]
      %v4119 = vld [vmem:[%s4117 + $0x4] sm:$0xf]
      %v4120 = vld [vmem:[%s4117 + $0x8] sm:$0xf]
      %v4121 = vld [vmem:[%s4117 + $0xc] sm:$0xf]
      %v4122 = vld [vmem:[%s4117 + $0x10] sm:$0xf]
      %v4123 = vld [vmem:[%s4117 + $0x14] sm:$0xf]
      %v4124 = vld [vmem:[%s4117 + $0x18] sm:$0xf]
      %v4125 = vld [vmem:[%s4117 + $0x1c] sm:$0xf]
      %v4126 = vld [vmem:[%s4117 + $0x20] sm:$0xf]
      %v4127 = vld [vmem:[%s4117 + $0x24] sm:$0xf]
      %v4128 = vld [vmem:[%s4117 + $0x28] sm:$0xf]
      %v4129 = vld [vmem:[%s4117 + $0x2c] sm:$0xf]
      %v4130 = vld [vmem:[%s4117 + $0x30] sm:$0xf]
      %v4131 = vld [vmem:[%s4117 + $0x34] sm:$0xf]
      %v4132 = vld [vmem:[%s4117 + $0x38] sm:$0xf]
      %v4133 = vld [vmem:[%s4117 + $0x3c] sm:$0xf]
      %v4134 = vld [vmem:[%s4117 + $0x40] sm:$0xf]
      %v4135 = vld [vmem:[%s4117 + $0x44] sm:$0xf]
      %v4136 = vld [vmem:[%s4117 + $0x48] sm:$0xf]
      %v4137 = vld [vmem:[%s4117 + $0x4c] sm:$0xf]
      %v4138 = vld [vmem:[%s4117 + $0x50] sm:$0xf]
      %v4139 = vld [vmem:[%s4117 + $0x54] sm:$0xf]
      %v4140 = vld [vmem:[%s4117 + $0x58] sm:$0xf]
      %v4141 = vld [vmem:[%s4117 + $0x5c] sm:$0xf]
      %v4142 = vld [vmem:[%s4117 + $0x60] sm:$0xf]
      %v4143 = vld [vmem:[%s4117 + $0x64] sm:$0xf]
      %v4144 = vld [vmem:[%s4117 + $0x68] sm:$0xf]
      %v4145 = vld [vmem:[%s4117 + $0x6c] sm:$0xf]
      %v4146 = vld [vmem:[%s4117 + $0x70] sm:$0xf]
      %v4147 = vld [vmem:[%s4117 + $0x74] sm:$0xf]
      %v4148 = vld [vmem:[%s4117 + $0x78] sm:$0xf]
      %v4149 = vld [vmem:[%s4117 + $0x7c] sm:$0xf]
      %v4150 = vld [vmem:[%s4117 + $0x80] sm:$0xf]
      %v4151 = vld [vmem:[%s4117 + $0x84] sm:$0xf]
      %v4152 = vld [vmem:[%s4117 + $0x88] sm:$0xf]
      %v4153 = vld [vmem:[%s4117 + $0x8c] sm:$0xf]
      %v4154 = vld [vmem:[%s4117 + $0x90] sm:$0xf]
      %v4155 = vld [vmem:[%s4117 + $0x94] sm:$0xf]
      %v4156 = vld [vmem:[%s4117 + $0x98] sm:$0xf]
      %v4157 = vld [vmem:[%s4117 + $0x9c] sm:$0xf]
      %v4158 = vld [vmem:[%s4117 + $0xa0] sm:$0xf]
      %v4159 = vld [vmem:[%s4117 + $0xa4] sm:$0xf]
      %v4160 = vld [vmem:[%s4117 + $0xa8] sm:$0xf]
      %v4161 = vld [vmem:[%s4117 + $0xac] sm:$0xf]
      %v4162 = vld [vmem:[%s4117 + $0xb0] sm:$0xf]
      %v4163 = vld [vmem:[%s4117 + $0xb4] sm:$0xf]
      %v4164 = vld [vmem:[%s4117 + $0xb8] sm:$0xf]
      %v4165 = vld [vmem:[%s4117 + $0xbc] sm:$0xf]
      %v4166 = vld [vmem:[%s4117 + $0xc0] sm:$0xf]
      %v4167 = vld [vmem:[%s4117 + $0xc4] sm:$0xf]
      %v4168 = vld [vmem:[%s4117 + $0xc8] sm:$0xf]
      %v4169 = vld [vmem:[%s4117 + $0xcc] sm:$0xf]
      %v4170 = vld [vmem:[%s4117 + $0xd0] sm:$0xf]
      %v4171 = vld [vmem:[%s4117 + $0xd4] sm:$0xf]
      %v4172 = vld [vmem:[%s4117 + $0xd8] sm:$0xf]
      %v4173 = vld [vmem:[%s4117 + $0xdc] sm:$0xf]
      %v4174 = vld [vmem:[%s4117 + $0xe0] sm:$0xf]
      %v4175 = vld [vmem:[%s4117 + $0xe4] sm:$0xf]
      %v4176 = vld [vmem:[%s4117 + $0xe8] sm:$0xf]
      %v4177 = vld [vmem:[%s4117 + $0xec] sm:$0xf]
      %v4178 = vld [vmem:[%s4117 + $0xf0] sm:$0xf]
      %v4179 = vld [vmem:[%s4117 + $0xf4] sm:$0xf]
      %v4180 = vld [vmem:[%s4117 + $0xf8] sm:$0xf]
      %v4181 = vld [vmem:[%s4117 + $0xfc] sm:$0xf]
      %v4182 = vld [vmem:[%s4117 + $0x100] sm:$0xf]
      %v4183 = vld [vmem:[%s4117 + $0x104] sm:$0xf]
      %v4184 = vld [vmem:[%s4117 + $0x108] sm:$0xf]
      %v4185 = vld [vmem:[%s4117 + $0x10c] sm:$0xf]
      %v4186 = vld [vmem:[%s4117 + $0x110] sm:$0xf]
      %v4187 = vld [vmem:[%s4117 + $0x114] sm:$0xf]
      %v4188 = vld [vmem:[%s4117 + $0x118] sm:$0xf]
      %v4189 = vld [vmem:[%s4117 + $0x11c] sm:$0xf]
      %v4190 = vld [vmem:[%s4117 + $0x120] sm:$0xf]
      %v4191 = vld [vmem:[%s4117 + $0x124] sm:$0xf]
      %v4192 = vld [vmem:[%s4117 + $0x128] sm:$0xf]
      %v4193 = vld [vmem:[%s4117 + $0x12c] sm:$0xf]
      %v4194 = vld [vmem:[%s4117 + $0x130] sm:$0xf]
      %v4195 = vld [vmem:[%s4117 + $0x134] sm:$0xf]
      %v4196 = vld [vmem:[%s4117 + $0x138] sm:$0xf]
      %v4197 = vld [vmem:[%s4117 + $0x13c] sm:$0xf]
      %v4198 = vld [vmem:[%s4117 + $0x140] sm:$0xf]
      %v4199 = vld [vmem:[%s4117 + $0x144] sm:$0xf]
      %v4200 = vld [vmem:[%s4117 + $0x148] sm:$0xf]
      %v4201 = vld [vmem:[%s4117 + $0x14c] sm:$0xf]
      %v4202 = vld [vmem:[%s4117 + $0x150] sm:$0xf]
      %v4203 = vld [vmem:[%s4117 + $0x154] sm:$0xf]
      %v4204 = vld [vmem:[%s4117 + $0x158] sm:$0xf]
      %v4205 = vld [vmem:[%s4117 + $0x15c] sm:$0xf]
      %v4206 = vld [vmem:[%s4117 + $0x160] sm:$0xf]
      %v4207 = vld [vmem:[%s4117 + $0x164] sm:$0xf]
      %v4208 = vld [vmem:[%s4117 + $0x168] sm:$0xf]
      %v4209 = vld [vmem:[%s4117 + $0x16c] sm:$0xf]
      %v4210 = vld [vmem:[%s4117 + $0x170] sm:$0xf]
      %v4211 = vld [vmem:[%s4117 + $0x174] sm:$0xf]
      %v4212 = vld [vmem:[%s4117 + $0x178] sm:$0xf]
      %v4213 = vld [vmem:[%s4117 + $0x17c] sm:$0xf]
      %v4214 = vld [vmem:[%s4117 + $0x180] sm:$0xf]
      %v4215 = vld [vmem:[%s4117 + $0x184] sm:$0xf]
      %v4216 = vld [vmem:[%s4117 + $0x188] sm:$0xf]
      %v4217 = vld [vmem:[%s4117 + $0x18c] sm:$0xf]
      %v4218 = vld [vmem:[%s4117 + $0x190] sm:$0xf]
      %v4219 = vld [vmem:[%s4117 + $0x194] sm:$0xf]
      %v4220 = vld [vmem:[%s4117 + $0x198] sm:$0xf]
      %v4221 = vld [vmem:[%s4117 + $0x19c] sm:$0xf]
      %v4222 = vld [vmem:[%s4117 + $0x1a0] sm:$0xf]
      %v4223 = vld [vmem:[%s4117 + $0x1a4] sm:$0xf]
      %v4224 = vld [vmem:[%s4117 + $0x1a8] sm:$0xf]
      %v4225 = vld [vmem:[%s4117 + $0x1ac] sm:$0xf]
      %v4226 = vld [vmem:[%s4117 + $0x1b0] sm:$0xf]
      %v4227 = vld [vmem:[%s4117 + $0x1b4] sm:$0xf]
      %v4228 = vld [vmem:[%s4117 + $0x1b8] sm:$0xf]
      %v4229 = vld [vmem:[%s4117 + $0x1bc] sm:$0xf]
      %v4230 = vld [vmem:[%s4117 + $0x1c0] sm:$0xf]
      %v4231 = vld [vmem:[%s4117 + $0x1c4] sm:$0xf]
      %v4232 = vld [vmem:[%s4117 + $0x1c8] sm:$0xf]
      %v4233 = vld [vmem:[%s4117 + $0x1cc] sm:$0xf]
      %v4234 = vld [vmem:[%s4117 + $0x1d0] sm:$0xf]
      %v4235 = vld [vmem:[%s4117 + $0x1d4] sm:$0xf]
      %v4236 = vld [vmem:[%s4117 + $0x1d8] sm:$0xf]
      %v4237 = vld [vmem:[%s4117 + $0x1dc] sm:$0xf]
      %v4238 = vld [vmem:[%s4117 + $0x1e0] sm:$0xf]
      %v4239 = vld [vmem:[%s4117 + $0x1e4] sm:$0xf]
      %v4240 = vld [vmem:[%s4117 + $0x1e8] sm:$0xf]
      %v4241 = vld [vmem:[%s4117 + $0x1ec] sm:$0xf]
      %v4242 = vld [vmem:[%s4117 + $0x1f0] sm:$0xf]
      %v4243 = vld [vmem:[%s4117 + $0x1f4] sm:$0xf]
      %v4244 = vld [vmem:[%s4117 + $0x1f8] sm:$0xf]
      %v4245 = vld [vmem:[%s4117 + $0x1fc] sm:$0xf]
      %v4246 = vld [vmem:[%s4117 + $0x200] sm:$0xf]
      %v4247 = vld [vmem:[%s4117 + $0x204] sm:$0xf]
      %v4248 = vld [vmem:[%s4117 + $0x208] sm:$0xf]
      %v4249 = vld [vmem:[%s4117 + $0x20c] sm:$0xf]
      %v4250 = vld [vmem:[%s4117 + $0x210] sm:$0xf]
      %v4251 = vld [vmem:[%s4117 + $0x214] sm:$0xf]
      %v4252 = vld [vmem:[%s4117 + $0x218] sm:$0xf]
      %v4253 = vld [vmem:[%s4117 + $0x21c] sm:$0xf]
      %v4254 = vld [vmem:[%s4117 + $0x220] sm:$0xf]
      %v4255 = vld [vmem:[%s4117 + $0x224] sm:$0xf]
      %v4256 = vld [vmem:[%s4117 + $0x228] sm:$0xf]
      %v4257 = vld [vmem:[%s4117 + $0x22c] sm:$0xf]
      %v4258 = vld [vmem:[%s4117 + $0x230] sm:$0xf]
      %v4259 = vld [vmem:[%s4117 + $0x234] sm:$0xf]
      %v4260 = vld [vmem:[%s4117 + $0x238] sm:$0xf]
      %v4261 = vld [vmem:[%s4117 + $0x23c] sm:$0xf]
      %s4262 = scalar_lea.vmem %s2, 1
      %v4263 = vld [vmem:[%s4262] sm:$0x1]
      %v4265 = vperm.slane %v4263, 0
      %v4267 = vpack.c.b16 %v3703, %v3701
      %v4268 = vpack.c.b16 %v4075, %v4069
      %v4269 = vpack.c.b16 %v4076, %v4070
      %v4270 = vpack.c.b16 %v3831, %v3829
      %v4271 = vpack.c.b16 %v4077, %v4071
      %v4272 = vpack.c.b16 %v4078, %v4072
      %v4273 = vpack.c.b16 %v3959, %v3957
      %v4274 = vpack.c.b16 %v4079, %v4073
      %v4275 = vpack.c.b16 %v4080, %v4074
      %v4276 = vpack.c.b16 %v3707, %v3705
      %v4277 = vpack.c.b16 %v4087, %v4081
      %v4278 = vpack.c.b16 %v4088, %v4082
      %v4279 = vpack.c.b16 %v3835, %v3833
      %v4280 = vpack.c.b16 %v4089, %v4083
      %v4281 = vpack.c.b16 %v4090, %v4084
      %v4282 = vpack.c.b16 %v3963, %v3961
      %v4283 = vpack.c.b16 %v4091, %v4085
      %v4284 = vpack.c.b16 %v4092, %v4086
      %v4285 = vpack.c.b16 %v3711, %v3709
      %v4286 = vpack.c.b16 %v4099, %v4093
      %v4287 = vpack.c.b16 %v4100, %v4094
      %v4288 = vpack.c.b16 %v3839, %v3837
      %v4289 = vpack.c.b16 %v4101, %v4095
      %v4290 = vpack.c.b16 %v4102, %v4096
      %v4291 = vpack.c.b16 %v3967, %v3965
      %v4292 = vpack.c.b16 %v4103, %v4097
      %v4293 = vpack.c.b16 %v4104, %v4098
      %v4294 = vpack.c.b16 %v3715, %v3713
      %v4295 = vpack.c.b16 %v4111, %v4105
      %v4296 = vpack.c.b16 %v4112, %v4106
      %v4297 = vpack.c.b16 %v3843, %v3841
      %v4298 = vpack.c.b16 %v4113, %v4107
      %v4299 = vpack.c.b16 %v4114, %v4108
      %v4300 = vpack.c.b16 %v3971, %v3969
      %v4301 = vpack.c.b16 %v4115, %v4109
      %v4302 = vpack.c.b16 %v4116, %v4110
      %v4483 = vunpack.c.l.b16 %v4118
      %v4484 = vunpack.c.l.b16 %v4119
      %v4485 = vunpack.c.l.b16 %v4120
      %v4486 = vunpack.c.l.b16 %v4121
      %v4487 = vunpack.c.l.b16 %v4122
      %v4488 = vunpack.c.l.b16 %v4123
      %v4489 = vunpack.c.l.b16 %v4124
      %v4490 = vunpack.c.l.b16 %v4125
      %v4491 = vunpack.c.l.b16 %v4126
      %v4492 = vunpack.c.l.b16 %v4127
      %v4493 = vunpack.c.l.b16 %v4128
      %v4494 = vunpack.c.l.b16 %v4129
      %v4495 = vunpack.c.l.b16 %v4130
      %v4496 = vunpack.c.l.b16 %v4131
      %v4497 = vunpack.c.l.b16 %v4132
      %v4498 = vunpack.c.l.b16 %v4133
      %v4499 = vunpack.c.l.b16 %v4134
      %v4500 = vunpack.c.l.b16 %v4135
      %v4501 = vunpack.c.l.b16 %v4136
      %v4502 = vunpack.c.l.b16 %v4137
      %v4503 = vunpack.c.l.b16 %v4138
      %v4504 = vunpack.c.l.b16 %v4139
      %v4505 = vunpack.c.l.b16 %v4140
      %v4506 = vunpack.c.l.b16 %v4141
      %v4507 = vunpack.c.l.b16 %v4142
      %v4508 = vunpack.c.l.b16 %v4143
      %v4509 = vunpack.c.l.b16 %v4144
      %v4510 = vunpack.c.l.b16 %v4145
      %v4511 = vunpack.c.l.b16 %v4146
      %v4512 = vunpack.c.l.b16 %v4147
      %v4513 = vunpack.c.l.b16 %v4148
      %v4514 = vunpack.c.l.b16 %v4149
      %v4515 = vunpack.c.l.b16 %v4150
      %v4516 = vunpack.c.l.b16 %v4151
      %v4517 = vunpack.c.l.b16 %v4152
      %v4518 = vunpack.c.l.b16 %v4153
      %v4519 = vunpack.c.l.b16 %v4154
      %v4520 = vunpack.c.l.b16 %v4155
      %v4521 = vunpack.c.l.b16 %v4156
      %v4522 = vunpack.c.l.b16 %v4157
      %v4523 = vunpack.c.l.b16 %v4158
      %v4524 = vunpack.c.l.b16 %v4159
      %v4525 = vunpack.c.l.b16 %v4160
      %v4526 = vunpack.c.l.b16 %v4161
      %v4527 = vunpack.c.l.b16 %v4162
      %v4528 = vunpack.c.l.b16 %v4163
      %v4529 = vunpack.c.l.b16 %v4164
      %v4530 = vunpack.c.l.b16 %v4165
      %v4531 = vunpack.c.l.b16 %v4166
      %v4532 = vunpack.c.l.b16 %v4167
      %v4533 = vunpack.c.l.b16 %v4168
      %v4534 = vunpack.c.l.b16 %v4169
      %v4535 = vunpack.c.l.b16 %v4170
      %v4536 = vunpack.c.l.b16 %v4171
      %v4537 = vunpack.c.l.b16 %v4172
      %v4538 = vunpack.c.l.b16 %v4173
      %v4539 = vunpack.c.l.b16 %v4174
      %v4540 = vunpack.c.l.b16 %v4175
      %v4541 = vunpack.c.l.b16 %v4176
      %v4542 = vunpack.c.l.b16 %v4177
      %v4543 = vunpack.c.l.b16 %v4178
      %v4544 = vunpack.c.l.b16 %v4179
      %v4545 = vunpack.c.l.b16 %v4180
      %v4546 = vunpack.c.l.b16 %v4181
      %v4547 = vunpack.c.l.b16 %v4182
      %v4548 = vunpack.c.l.b16 %v4183
      %v4549 = vunpack.c.l.b16 %v4184
      %v4550 = vunpack.c.l.b16 %v4185
      %v4551 = vunpack.c.l.b16 %v4186
      %v4552 = vunpack.c.l.b16 %v4187
      %v4553 = vunpack.c.l.b16 %v4188
      %v4554 = vunpack.c.l.b16 %v4189
      %v4555 = vunpack.c.l.b16 %v4190
      %v4556 = vunpack.c.l.b16 %v4191
      %v4557 = vunpack.c.l.b16 %v4192
      %v4558 = vunpack.c.l.b16 %v4193
      %v4559 = vunpack.c.l.b16 %v4194
      %v4560 = vunpack.c.l.b16 %v4195
      %v4561 = vunpack.c.l.b16 %v4196
      %v4562 = vunpack.c.l.b16 %v4197
      %v4563 = vunpack.c.l.b16 %v4198
      %v4564 = vunpack.c.l.b16 %v4199
      %v4565 = vunpack.c.l.b16 %v4200
      %v4566 = vunpack.c.l.b16 %v4201
      %v4567 = vunpack.c.l.b16 %v4202
      %v4568 = vunpack.c.l.b16 %v4203
      %v4569 = vunpack.c.l.b16 %v4204
      %v4570 = vunpack.c.l.b16 %v4205
      %v4571 = vunpack.c.l.b16 %v4206
      %v4572 = vunpack.c.l.b16 %v4207
      %v4573 = vunpack.c.l.b16 %v4208
      %v4574 = vunpack.c.l.b16 %v4209
      %v4575 = vunpack.c.l.b16 %v4210
      %v4576 = vunpack.c.l.b16 %v4211
      %v4577 = vunpack.c.l.b16 %v4212
      %v4578 = vunpack.c.l.b16 %v4213
      %v4579 = vunpack.c.l.b16 %v4214
      %v4580 = vunpack.c.l.b16 %v4215
      %v4581 = vunpack.c.l.b16 %v4216
      %v4582 = vunpack.c.l.b16 %v4217
      %v4583 = vunpack.c.l.b16 %v4218
      %v4584 = vunpack.c.l.b16 %v4219
      %v4585 = vunpack.c.l.b16 %v4220
      %v4586 = vunpack.c.l.b16 %v4221
      %v4587 = vunpack.c.l.b16 %v4222
      %v4588 = vunpack.c.l.b16 %v4223
      %v4589 = vunpack.c.l.b16 %v4224
      %v4590 = vunpack.c.l.b16 %v4225
      %v4591 = vunpack.c.l.b16 %v4226
      %v4592 = vunpack.c.l.b16 %v4227
      %v4593 = vunpack.c.l.b16 %v4228
      %v4594 = vunpack.c.l.b16 %v4229
      %v4595 = vunpack.c.l.b16 %v4230
      %v4596 = vunpack.c.l.b16 %v4231
      %v4597 = vunpack.c.l.b16 %v4232
      %v4598 = vunpack.c.l.b16 %v4233
      %v4599 = vunpack.c.l.b16 %v4234
      %v4600 = vunpack.c.l.b16 %v4235
      %v4601 = vunpack.c.l.b16 %v4236
      %v4602 = vunpack.c.l.b16 %v4237
      %v4603 = vunpack.c.l.b16 %v4238
      %v4604 = vunpack.c.l.b16 %v4239
      %v4605 = vunpack.c.l.b16 %v4240
      %v4606 = vunpack.c.l.b16 %v4241
      %v4607 = vunpack.c.l.b16 %v4242
      %v4608 = vunpack.c.l.b16 %v4243
      %v4609 = vunpack.c.l.b16 %v4244
      %v4610 = vunpack.c.l.b16 %v4245
      %v4611 = vunpack.c.l.b16 %v4246
      %v4612 = vunpack.c.l.b16 %v4247
      %v4613 = vunpack.c.l.b16 %v4248
      %v4614 = vunpack.c.l.b16 %v4249
      %v4615 = vunpack.c.l.b16 %v4250
      %v4616 = vunpack.c.l.b16 %v4251
      %v4617 = vunpack.c.l.b16 %v4252
      %v4618 = vunpack.c.l.b16 %v4253
      %v4619 = vunpack.c.l.b16 %v4254
      %v4620 = vunpack.c.l.b16 %v4255
      %v4621 = vunpack.c.l.b16 %v4256
      %v4622 = vunpack.c.l.b16 %v4257
      %v4623 = vunpack.c.l.b16 %v4258
      %v4624 = vunpack.c.l.b16 %v4259
      %v4625 = vunpack.c.l.b16 %v4260
      %v4626 = vunpack.c.l.b16 %v4261
      %v4627 = vpack.c.b16 %v4484, %v4483
      %v4628 = vpack.c.b16 %v4486, %v4485
      %v4629 = vpack.c.b16 %v4488, %v4487
      %v4630 = vpack.c.b16 %v4490, %v4489
      %v4631 = vpack.c.b16 %v4492, %v4491
      %v4632 = vpack.c.b16 %v4494, %v4493
      %v4633 = vpack.c.b16 %v4496, %v4495
      %v4634 = vpack.c.b16 %v4498, %v4497
      %v4635 = vpack.c.b16 %v4500, %v4499
      %v4636 = vpack.c.b16 %v4502, %v4501
      %v4637 = vpack.c.b16 %v4504, %v4503
      %v4638 = vpack.c.b16 %v4506, %v4505
      %v4639 = vpack.c.b16 %v4508, %v4507
      %v4640 = vpack.c.b16 %v4510, %v4509
      %v4641 = vpack.c.b16 %v4512, %v4511
      %v4642 = vpack.c.b16 %v4514, %v4513
      %v4643 = vpack.c.b16 %v4516, %v4515
      %v4644 = vpack.c.b16 %v4518, %v4517
      %v4645 = vpack.c.b16 %v4520, %v4519
      %v4646 = vpack.c.b16 %v4522, %v4521
      %v4647 = vpack.c.b16 %v4524, %v4523
      %v4648 = vpack.c.b16 %v4526, %v4525
      %v4649 = vpack.c.b16 %v4528, %v4527
      %v4650 = vpack.c.b16 %v4530, %v4529
      %v4651 = vpack.c.b16 %v4532, %v4531
      %v4652 = vpack.c.b16 %v4534, %v4533
      %v4653 = vpack.c.b16 %v4536, %v4535
      %v4654 = vpack.c.b16 %v4538, %v4537
      %v4655 = vpack.c.b16 %v4540, %v4539
      %v4656 = vpack.c.b16 %v4542, %v4541
      %v4657 = vpack.c.b16 %v4544, %v4543
      %v4658 = vpack.c.b16 %v4546, %v4545
      %v4659 = vpack.c.b16 %v4548, %v4547
      %v4660 = vpack.c.b16 %v4550, %v4549
      %v4661 = vpack.c.b16 %v4552, %v4551
      %v4662 = vpack.c.b16 %v4554, %v4553
      %v4663 = vpack.c.b16 %v4556, %v4555
      %v4664 = vpack.c.b16 %v4558, %v4557
      %v4665 = vpack.c.b16 %v4560, %v4559
      %v4666 = vpack.c.b16 %v4562, %v4561
      %v4667 = vpack.c.b16 %v4564, %v4563
      %v4668 = vpack.c.b16 %v4566, %v4565
      %v4669 = vpack.c.b16 %v4568, %v4567
      %v4670 = vpack.c.b16 %v4570, %v4569
      %v4671 = vpack.c.b16 %v4572, %v4571
      %v4672 = vpack.c.b16 %v4574, %v4573
      %v4673 = vpack.c.b16 %v4576, %v4575
      %v4674 = vpack.c.b16 %v4578, %v4577
      %v4675 = vpack.c.b16 %v4580, %v4579
      %v4676 = vpack.c.b16 %v4582, %v4581
      %v4677 = vpack.c.b16 %v4584, %v4583
      %v4678 = vpack.c.b16 %v4586, %v4585
      %v4679 = vpack.c.b16 %v4588, %v4587
      %v4680 = vpack.c.b16 %v4590, %v4589
      %v4681 = vpack.c.b16 %v4592, %v4591
      %v4682 = vpack.c.b16 %v4594, %v4593
      %v4683 = vpack.c.b16 %v4596, %v4595
      %v4684 = vpack.c.b16 %v4598, %v4597
      %v4685 = vpack.c.b16 %v4600, %v4599
      %v4686 = vpack.c.b16 %v4602, %v4601
      %v4687 = vpack.c.b16 %v4604, %v4603
      %v4688 = vpack.c.b16 %v4606, %v4605
      %v4689 = vpack.c.b16 %v4608, %v4607
      %v4690 = vpack.c.b16 %v4610, %v4609
      %v4691 = vpack.c.b16 %v4612, %v4611
      %v4692 = vpack.c.b16 %v4614, %v4613
      %v4693 = vpack.c.b16 %v4616, %v4615
      %v4694 = vpack.c.b16 %v4618, %v4617
      %v4695 = vpack.c.b16 %v4620, %v4619
      %v4696 = vpack.c.b16 %v4622, %v4621
      %v4697 = vpack.c.b16 %v4624, %v4623
      %v4698 = vpack.c.b16 %v4626, %v4625
      %4771 = vmatpush.bf16.msra.mxu0 %v4634
      %4772 = vmatpush.bf16.msra.mxu0 %v4633
      %4773 = vmatpush.bf16.msra.mxu0 %v4632
      %4774 = vmatpush.bf16.msra.mxu0 %v4631
      %4775 = vmatpush.bf16.msra.mxu0 %v4630
      %4776 = vmatpush.bf16.msra.mxu0 %v4629
      %4777 = vmatpush.bf16.msra.mxu0 %v4628
      %4778 = vmatpush.bf16.msra.mxu0 %v4627
      %4779 = vmatmul.bf16.gmra.mxu0 %v4267
      %v4780 = vpop.f32.mrf.mxu0
      %v4781 = vadd.f32 %v4265, %v4780
      %v4782 = vpop.f32.mrf.mxu0
      %v4783 = vadd.f32 %v4265, %v4782
      %4784 = vmatmul.bf16.gmra.mxu0 %v4276
      %v4785 = vpop.f32.mrf.mxu0
      %v4786 = vadd.f32 %v4265, %v4785
      %v4787 = vpop.f32.mrf.mxu0
      %v4788 = vadd.f32 %v4265, %v4787
      %4789 = vmatmul.bf16.gmra.mxu0 %v4285
      %v4790 = vpop.f32.mrf.mxu0
      %v4791 = vadd.f32 %v4265, %v4790
      %v4792 = vpop.f32.mrf.mxu0
      %v4793 = vadd.f32 %v4265, %v4792
      %4794 = vmatmul.bf16.gmra.mxu0 %v4294
      %v4795 = vpop.f32.mrf.mxu0
      %v4796 = vadd.f32 %v4265, %v4795
      %v4797 = vpop.f32.mrf.mxu0
      %v4798 = vadd.f32 %v4265, %v4797
      %4799 = vdwg.mxu0
      %4800 = vmatpush.bf16.msra.mxu0 %v4642
      %4801 = vmatpush.bf16.msra.mxu0 %v4641
      %4802 = vmatpush.bf16.msra.mxu0 %v4640
      %4803 = vmatpush.bf16.msra.mxu0 %v4639
      %4804 = vmatpush.bf16.msra.mxu0 %v4638
      %4805 = vmatpush.bf16.msra.mxu0 %v4637
      %4806 = vmatpush.bf16.msra.mxu0 %v4636
      %4807 = vmatpush.bf16.msra.mxu0 %v4635
      %4808 = vmatmul.bf16.gmra.mxu0 %v4268
      %v4809 = vpop.f32.mrf.mxu0
      %v4810 = vadd.f32 %v4781, %v4809
      %v4811 = vpop.f32.mrf.mxu0
      %v4812 = vadd.f32 %v4783, %v4811
      %4813 = vmatmul.bf16.gmra.mxu0 %v4277
      %v4814 = vpop.f32.mrf.mxu0
      %v4815 = vadd.f32 %v4786, %v4814
      %v4816 = vpop.f32.mrf.mxu0
      %v4817 = vadd.f32 %v4788, %v4816
      %4818 = vmatmul.bf16.gmra.mxu0 %v4286
      %v4819 = vpop.f32.mrf.mxu0
      %v4820 = vadd.f32 %v4791, %v4819
      %v4821 = vpop.f32.mrf.mxu0
      %v4822 = vadd.f32 %v4793, %v4821
      %4823 = vmatmul.bf16.gmra.mxu0 %v4295
      %v4824 = vpop.f32.mrf.mxu0
      %v4825 = vadd.f32 %v4796, %v4824
      %v4826 = vpop.f32.mrf.mxu0
      %v4827 = vadd.f32 %v4798, %v4826
      %4828 = vdwg.mxu0
      %4829 = vmatpush.bf16.msra.mxu0 %v4650
      %4830 = vmatpush.bf16.msra.mxu0 %v4649
      %4831 = vmatpush.bf16.msra.mxu0 %v4648
      %4832 = vmatpush.bf16.msra.mxu0 %v4647
      %4833 = vmatpush.bf16.msra.mxu0 %v4646
      %4834 = vmatpush.bf16.msra.mxu0 %v4645
      %4835 = vmatpush.bf16.msra.mxu0 %v4644
      %4836 = vmatpush.bf16.msra.mxu0 %v4643
      %4837 = vmatmul.bf16.gmra.mxu0 %v4269
      %v4838 = vpop.f32.mrf.mxu0
      %v4839 = vadd.f32 %v4810, %v4838
      %v4840 = vpop.f32.mrf.mxu0
      %v4841 = vadd.f32 %v4812, %v4840
      %4842 = vmatmul.bf16.gmra.mxu0 %v4278
      %v4843 = vpop.f32.mrf.mxu0
      %v4844 = vadd.f32 %v4815, %v4843
      %v4845 = vpop.f32.mrf.mxu0
      %v4846 = vadd.f32 %v4817, %v4845
      %4847 = vmatmul.bf16.gmra.mxu0 %v4287
      %v4848 = vpop.f32.mrf.mxu0
      %v4849 = vadd.f32 %v4820, %v4848
      %v4850 = vpop.f32.mrf.mxu0
      %v4851 = vadd.f32 %v4822, %v4850
      %4852 = vmatmul.bf16.gmra.mxu0 %v4296
      %v4853 = vpop.f32.mrf.mxu0
      %v4854 = vadd.f32 %v4825, %v4853
      %v4855 = vpop.f32.mrf.mxu0
      %v4856 = vadd.f32 %v4827, %v4855
      %4857 = vdwg.mxu0
      %4858 = vmatpush.bf16.msra.mxu0 %v4658
      %4859 = vmatpush.bf16.msra.mxu0 %v4657
      %4860 = vmatpush.bf16.msra.mxu0 %v4656
      %4861 = vmatpush.bf16.msra.mxu0 %v4655
      %4862 = vmatpush.bf16.msra.mxu0 %v4654
      %4863 = vmatpush.bf16.msra.mxu0 %v4653
      %4864 = vmatpush.bf16.msra.mxu0 %v4652
      %4865 = vmatpush.bf16.msra.mxu0 %v4651
      %4866 = vmatmul.bf16.gmra.mxu0 %v4270
      %v4867 = vpop.f32.mrf.mxu0
      %v4868 = vadd.f32 %v4839, %v4867
      %v4869 = vpop.f32.mrf.mxu0
      %v4870 = vadd.f32 %v4841, %v4869
      %4871 = vmatmul.bf16.gmra.mxu0 %v4279
      %v4872 = vpop.f32.mrf.mxu0
      %v4873 = vadd.f32 %v4844, %v4872
      %v4874 = vpop.f32.mrf.mxu0
      %v4875 = vadd.f32 %v4846, %v4874
      %4876 = vmatmul.bf16.gmra.mxu0 %v4288
      %v4877 = vpop.f32.mrf.mxu0
      %v4878 = vadd.f32 %v4849, %v4877
      %v4879 = vpop.f32.mrf.mxu0
      %v4880 = vadd.f32 %v4851, %v4879
      %4881 = vmatmul.bf16.gmra.mxu0 %v4297
      %v4882 = vpop.f32.mrf.mxu0
      %v4883 = vadd.f32 %v4854, %v4882
      %v4884 = vpop.f32.mrf.mxu0
      %v4885 = vadd.f32 %v4856, %v4884
      %4886 = vdwg.mxu0
      %4887 = vmatpush.bf16.msra.mxu0 %v4666
      %4888 = vmatpush.bf16.msra.mxu0 %v4665
      %4889 = vmatpush.bf16.msra.mxu0 %v4664
      %4890 = vmatpush.bf16.msra.mxu0 %v4663
      %4891 = vmatpush.bf16.msra.mxu0 %v4662
      %4892 = vmatpush.bf16.msra.mxu0 %v4661
      %4893 = vmatpush.bf16.msra.mxu0 %v4660
      %4894 = vmatpush.bf16.msra.mxu0 %v4659
      %4895 = vmatmul.bf16.gmra.mxu0 %v4271
      %v4896 = vpop.f32.mrf.mxu0
      %v4897 = vadd.f32 %v4868, %v4896
      %v4898 = vpop.f32.mrf.mxu0
      %v4899 = vadd.f32 %v4870, %v4898
      %4900 = vmatmul.bf16.gmra.mxu0 %v4280
      %v4901 = vpop.f32.mrf.mxu0
      %v4902 = vadd.f32 %v4873, %v4901
      %v4903 = vpop.f32.mrf.mxu0
      %v4904 = vadd.f32 %v4875, %v4903
      %4905 = vmatmul.bf16.gmra.mxu0 %v4289
      %v4906 = vpop.f32.mrf.mxu0
      %v4907 = vadd.f32 %v4878, %v4906
      %v4908 = vpop.f32.mrf.mxu0
      %v4909 = vadd.f32 %v4880, %v4908
      %4910 = vmatmul.bf16.gmra.mxu0 %v4298
      %v4911 = vpop.f32.mrf.mxu0
      %v4912 = vadd.f32 %v4883, %v4911
      %v4913 = vpop.f32.mrf.mxu0
      %v4914 = vadd.f32 %v4885, %v4913
      %4915 = vdwg.mxu0
      %4916 = vmatpush.bf16.msra.mxu0 %v4674
      %4917 = vmatpush.bf16.msra.mxu0 %v4673
      %4918 = vmatpush.bf16.msra.mxu0 %v4672
      %4919 = vmatpush.bf16.msra.mxu0 %v4671
      %4920 = vmatpush.bf16.msra.mxu0 %v4670
      %4921 = vmatpush.bf16.msra.mxu0 %v4669
      %4922 = vmatpush.bf16.msra.mxu0 %v4668
      %4923 = vmatpush.bf16.msra.mxu0 %v4667
      %4924 = vmatmul.bf16.gmra.mxu0 %v4272
      %v4925 = vpop.f32.mrf.mxu0
      %v4926 = vadd.f32 %v4897, %v4925
      %v4927 = vpop.f32.mrf.mxu0
      %v4928 = vadd.f32 %v4899, %v4927
      %4929 = vmatmul.bf16.gmra.mxu0 %v4281
      %v4930 = vpop.f32.mrf.mxu0
      %v4931 = vadd.f32 %v4902, %v4930
      %v4932 = vpop.f32.mrf.mxu0
      %v4933 = vadd.f32 %v4904, %v4932
      %4934 = vmatmul.bf16.gmra.mxu0 %v4290
      %v4935 = vpop.f32.mrf.mxu0
      %v4936 = vadd.f32 %v4907, %v4935
      %v4937 = vpop.f32.mrf.mxu0
      %v4938 = vadd.f32 %v4909, %v4937
      %4939 = vmatmul.bf16.gmra.mxu0 %v4299
      %v4940 = vpop.f32.mrf.mxu0
      %v4941 = vadd.f32 %v4912, %v4940
      %v4942 = vpop.f32.mrf.mxu0
      %v4943 = vadd.f32 %v4914, %v4942
      %4944 = vdwg.mxu0
      %4945 = vmatpush.bf16.msra.mxu0 %v4682
      %4946 = vmatpush.bf16.msra.mxu0 %v4681
      %4947 = vmatpush.bf16.msra.mxu0 %v4680
      %4948 = vmatpush.bf16.msra.mxu0 %v4679
      %4949 = vmatpush.bf16.msra.mxu0 %v4678
      %4950 = vmatpush.bf16.msra.mxu0 %v4677
      %4951 = vmatpush.bf16.msra.mxu0 %v4676
      %4952 = vmatpush.bf16.msra.mxu0 %v4675
      %4953 = vmatmul.bf16.gmra.mxu0 %v4273
      %v4954 = vpop.f32.mrf.mxu0
      %v4955 = vadd.f32 %v4926, %v4954
      %v4956 = vpop.f32.mrf.mxu0
      %v4957 = vadd.f32 %v4928, %v4956
      %4958 = vmatmul.bf16.gmra.mxu0 %v4282
      %v4959 = vpop.f32.mrf.mxu0
      %v4960 = vadd.f32 %v4931, %v4959
      %v4961 = vpop.f32.mrf.mxu0
      %v4962 = vadd.f32 %v4933, %v4961
      %4963 = vmatmul.bf16.gmra.mxu0 %v4291
      %v4964 = vpop.f32.mrf.mxu0
      %v4965 = vadd.f32 %v4936, %v4964
      %v4966 = vpop.f32.mrf.mxu0
      %v4967 = vadd.f32 %v4938, %v4966
      %4968 = vmatmul.bf16.gmra.mxu0 %v4300
      %v4969 = vpop.f32.mrf.mxu0
      %v4970 = vadd.f32 %v4941, %v4969
      %v4971 = vpop.f32.mrf.mxu0
      %v4972 = vadd.f32 %v4943, %v4971
      %4973 = vdwg.mxu0
      %4974 = vmatpush.bf16.msra.mxu0 %v4690
      %4975 = vmatpush.bf16.msra.mxu0 %v4689
      %4976 = vmatpush.bf16.msra.mxu0 %v4688
      %4977 = vmatpush.bf16.msra.mxu0 %v4687
      %4978 = vmatpush.bf16.msra.mxu0 %v4686
      %4979 = vmatpush.bf16.msra.mxu0 %v4685
      %4980 = vmatpush.bf16.msra.mxu0 %v4684
      %4981 = vmatpush.bf16.msra.mxu0 %v4683
      %4982 = vmatmul.bf16.gmra.mxu0 %v4274
      %v4983 = vpop.f32.mrf.mxu0
      %v4984 = vadd.f32 %v4955, %v4983
      %v4985 = vpop.f32.mrf.mxu0
      %v4986 = vadd.f32 %v4957, %v4985
      %4987 = vmatmul.bf16.gmra.mxu0 %v4283
      %v4988 = vpop.f32.mrf.mxu0
      %v4989 = vadd.f32 %v4960, %v4988
      %v4990 = vpop.f32.mrf.mxu0
      %v4991 = vadd.f32 %v4962, %v4990
      %4992 = vmatmul.bf16.gmra.mxu0 %v4292
      %v4993 = vpop.f32.mrf.mxu0
      %v4994 = vadd.f32 %v4965, %v4993
      %v4995 = vpop.f32.mrf.mxu0
      %v4996 = vadd.f32 %v4967, %v4995
      %4997 = vmatmul.bf16.gmra.mxu0 %v4301
      %v4998 = vpop.f32.mrf.mxu0
      %v4999 = vadd.f32 %v4970, %v4998
      %v5000 = vpop.f32.mrf.mxu0
      %v5001 = vadd.f32 %v4972, %v5000
      %5002 = vdwg.mxu0
      %5003 = vmatpush.bf16.msra.mxu0 %v4698
      %5004 = vmatpush.bf16.msra.mxu0 %v4697
      %5005 = vmatpush.bf16.msra.mxu0 %v4696
      %5006 = vmatpush.bf16.msra.mxu0 %v4695
      %5007 = vmatpush.bf16.msra.mxu0 %v4694
      %5008 = vmatpush.bf16.msra.mxu0 %v4693
      %5009 = vmatpush.bf16.msra.mxu0 %v4692
      %5010 = vmatpush.bf16.msra.mxu0 %v4691
      %5011 = vmatmul.bf16.gmra.mxu0 %v4275
      %v5012 = vpop.f32.mrf.mxu0
      %v5013 = vadd.f32 %v4984, %v5012
      %v5014 = vpop.f32.mrf.mxu0
      %v5015 = vadd.f32 %v4986, %v5014
      %5016 = vmatmul.bf16.gmra.mxu0 %v4284
      %v5017 = vpop.f32.mrf.mxu0
      %v5018 = vadd.f32 %v4989, %v5017
      %v5019 = vpop.f32.mrf.mxu0
      %v5020 = vadd.f32 %v4991, %v5019
      %5021 = vmatmul.bf16.gmra.mxu0 %v4293
      %v5022 = vpop.f32.mrf.mxu0
      %v5023 = vadd.f32 %v4994, %v5022
      %v5024 = vpop.f32.mrf.mxu0
      %v5025 = vadd.f32 %v4996, %v5024
      %5026 = vmatmul.bf16.gmra.mxu0 %v4302
      %v5027 = vpop.f32.mrf.mxu0
      %v5028 = vadd.f32 %v4999, %v5027
      %v5029 = vpop.f32.mrf.mxu0
      %v5030 = vadd.f32 %v5001, %v5029
      %5031 = vdwg.mxu0
      %v5032 = vmax.f32 %v5013, 0.0
      %v5033 = vmax.f32 %v5015, 0.0
      %v5034 = vmax.f32 %v5018, 0.0
      %v5035 = vmax.f32 %v5020, 0.0
      %v5036 = vmax.f32 %v5023, 0.0
      %v5037 = vmax.f32 %v5025, 0.0
      %v5038 = vmax.f32 %v5028, 0.0
      %v5039 = vmax.f32 %v5030, 0.0
      %v5040 = vpack.c.bf16 %v5032, %v5032
      %v5041 = vpack.c.bf16 %v5033, %v5033
      %v5042 = vpack.c.bf16 %v5034, %v5034
      %v5043 = vpack.c.bf16 %v5035, %v5035
      %v5044 = vpack.c.bf16 %v5036, %v5036
      %v5045 = vpack.c.bf16 %v5037, %v5037
      %v5046 = vpack.c.bf16 %v5038, %v5038
      %v5047 = vpack.c.bf16 %v5039, %v5039
      %v5049 = vshrl.u32 %v5040, 16
      %v5051 = vrot.slane %v5049, 7
      %v5052 = vshll.u32 %v5040, 16
      %v5054 = vor.u32 %v5051, %v5052
      %v5055 = vrot.slane %v5051, 4
      %v5057 = vshrl.u32 %v5041, 16
      %v5059 = vrot.slane %v5057, 7
      %v5060 = vshll.u32 %v5041, 16
      %v5062 = vor.u32 %v5059, %v5060
      %v5063 = vrot.slane %v5059, 4
      %v5065 = vshrl.u32 %v5042, 16
      %v5067 = vrot.slane %v5065, 7
      %v5068 = vshll.u32 %v5042, 16
      %v5070 = vor.u32 %v5067, %v5068
      %v5071 = vrot.slane %v5067, 4
      %v5073 = vshrl.u32 %v5043, 16
      %v5075 = vrot.slane %v5073, 7
      %v5076 = vshll.u32 %v5043, 16
      %v5078 = vor.u32 %v5075, %v5076
      %v5079 = vrot.slane %v5075, 4
      %v5081 = vshrl.u32 %v5044, 16
      %v5083 = vrot.slane %v5081, 7
      %v5084 = vshll.u32 %v5044, 16
      %v5086 = vor.u32 %v5083, %v5084
      %v5087 = vrot.slane %v5083, 4
      %v5089 = vshrl.u32 %v5045, 16
      %v5091 = vrot.slane %v5089, 7
      %v5092 = vshll.u32 %v5045, 16
      %v5094 = vor.u32 %v5091, %v5092
      %v5095 = vrot.slane %v5091, 4
      %v5097 = vshrl.u32 %v5046, 16
      %v5099 = vrot.slane %v5097, 7
      %v5100 = vshll.u32 %v5046, 16
      %v5102 = vor.u32 %v5099, %v5100
      %v5103 = vrot.slane %v5099, 4
      %v5105 = vshrl.u32 %v5047, 16
      %v5107 = vrot.slane %v5105, 7
      %v5108 = vshll.u32 %v5047, 16
      %v5110 = vor.u32 %v5107, %v5108
      %v5111 = vrot.slane %v5107, 4
      %v5128 = vld [vmem:[%s1861] sm:$0xf]
      %v5129 = vsel %vm1863, %v5054, %v5128
      %5130 = vst [vmem:[%s1861] sm:$0xf] %v5129
      %v5131 = vld [vmem:[%s1861 + $0x4] sm:$0x1]
      %v5132 = vsel %vm287, %v5055, %v5131
      %5133 = vst [vmem:[%s1861 + $0x4] sm:$0x1] %v5132
      %v5134 = vld [vmem:[%s1861 + $0x8] sm:$0xf]
      %v5135 = vsel %vm1863, %v5062, %v5134
      %5136 = vst [vmem:[%s1861 + $0x8] sm:$0xf] %v5135
      %v5137 = vld [vmem:[%s1861 + $0xc] sm:$0x1]
      %v5138 = vsel %vm287, %v5063, %v5137
      %5139 = vst [vmem:[%s1861 + $0xc] sm:$0x1] %v5138
      %v5140 = vld [vmem:[%s1861 + $0x10] sm:$0xf]
      %v5141 = vsel %vm1863, %v5070, %v5140
      %5142 = vst [vmem:[%s1861 + $0x10] sm:$0xf] %v5141
      %v5143 = vld [vmem:[%s1861 + $0x14] sm:$0x1]
      %v5144 = vsel %vm287, %v5071, %v5143
      %5145 = vst [vmem:[%s1861 + $0x14] sm:$0x1] %v5144
      %v5146 = vld [vmem:[%s1861 + $0x18] sm:$0xf]
      %v5147 = vsel %vm1863, %v5078, %v5146
      %5148 = vst [vmem:[%s1861 + $0x18] sm:$0xf] %v5147
      %v5149 = vld [vmem:[%s1861 + $0x1c] sm:$0x1]
      %v5150 = vsel %vm287, %v5079, %v5149
      %5151 = vst [vmem:[%s1861 + $0x1c] sm:$0x1] %v5150
      %v5152 = vld [vmem:[%s1861 + $0x20] sm:$0xf]
      %v5153 = vsel %vm1863, %v5086, %v5152
      %5154 = vst [vmem:[%s1861 + $0x20] sm:$0xf] %v5153
      %v5155 = vld [vmem:[%s1861 + $0x24] sm:$0x1]
      %v5156 = vsel %vm287, %v5087, %v5155
      %5157 = vst [vmem:[%s1861 + $0x24] sm:$0x1] %v5156
      %v5158 = vld [vmem:[%s1861 + $0x28] sm:$0xf]
      %v5159 = vsel %vm1863, %v5094, %v5158
      %5160 = vst [vmem:[%s1861 + $0x28] sm:$0xf] %v5159
      %v5161 = vld [vmem:[%s1861 + $0x2c] sm:$0x1]
      %v5162 = vsel %vm287, %v5095, %v5161
      %5163 = vst [vmem:[%s1861 + $0x2c] sm:$0x1] %v5162
      %v5164 = vld [vmem:[%s1861 + $0x30] sm:$0xf]
      %v5165 = vsel %vm1863, %v5102, %v5164
      %5166 = vst [vmem:[%s1861 + $0x30] sm:$0xf] %v5165
      %v5167 = vld [vmem:[%s1861 + $0x34] sm:$0x1]
      %v5168 = vsel %vm287, %v5103, %v5167
      %5169 = vst [vmem:[%s1861 + $0x34] sm:$0x1] %v5168
      %v5170 = vld [vmem:[%s1861 + $0x38] sm:$0xf]
      %v5171 = vsel %vm1863, %v5110, %v5170
      %5172 = vst [vmem:[%s1861 + $0x38] sm:$0xf] %v5171
      %v5173 = vld [vmem:[%s1861 + $0x3c] sm:$0x1]
      %v5174 = vsel %vm287, %v5111, %v5173
      %5175 = vst [vmem:[%s1861 + $0x3c] sm:$0x1] %v5174
      %v5176 = vld [vmem:[%s3563] sm:$0xf]
      %v5177 = vld [vmem:[%s3563 + $0x4] sm:$0x1]
      %v5178 = vld [vmem:[%s3563 + $0x8] sm:$0xf]
      %v5179 = vld [vmem:[%s3563 + $0xc] sm:$0x1]
      %v5180 = vld [vmem:[%s3563 + $0x10] sm:$0xf]
      %v5181 = vld [vmem:[%s3563 + $0x14] sm:$0x1]
      %v5182 = vld [vmem:[%s3563 + $0x18] sm:$0xf]
      %v5183 = vld [vmem:[%s3563 + $0x1c] sm:$0x1]
      %v5184 = vld [vmem:[%s3563 + $0x20] sm:$0xf]
      %v5185 = vld [vmem:[%s3563 + $0x24] sm:$0x1]
      %v5186 = vld [vmem:[%s3563 + $0x28] sm:$0xf]
      %v5187 = vld [vmem:[%s3563 + $0x2c] sm:$0x1]
      %v5188 = vld [vmem:[%s3563 + $0x30] sm:$0xf]
      %v5189 = vld [vmem:[%s3563 + $0x34] sm:$0x1]
      %v5190 = vld [vmem:[%s3563 + $0x38] sm:$0xf]
      %v5191 = vld [vmem:[%s3563 + $0x3c] sm:$0x1]
      %vm5192 = vsmask.f32 3328
      %vm5193 = vsmask.f32 7440
      %vm5194 = vmor %vm5192, %vm5193
      %v5196 = vshrl.u32 %v5176, 16
      %v5198 = vrot.slane %v5196, 4
      %v5199 = vshll.u32 %v5176, 16
      %v5201 = vrot.slane %v5199, 5
      %v5202 = vor.u32 %v5198, %v5201
      %v5203 = vrot.slane %v5202, 4
      %v5205 = vshll.u32 %v5177, 16
      %v5207 = vrot.slane %v5205, 5
      %v5208 = vsel %vm5194, %v5203, %v5207
      %v5210 = vshrl.u32 %v5178, 16
      %v5212 = vrot.slane %v5210, 4
      %v5213 = vshll.u32 %v5178, 16
      %v5215 = vrot.slane %v5213, 5
      %v5216 = vor.u32 %v5212, %v5215
      %v5217 = vrot.slane %v5216, 4
      %v5219 = vshll.u32 %v5179, 16
      %v5221 = vrot.slane %v5219, 5
      %v5222 = vsel %vm5194, %v5217, %v5221
      %v5224 = vshrl.u32 %v5180, 16
      %v5226 = vrot.slane %v5224, 4
      %v5227 = vshll.u32 %v5180, 16
      %v5229 = vrot.slane %v5227, 5
      %v5230 = vor.u32 %v5226, %v5229
      %v5231 = vrot.slane %v5230, 4
      %v5233 = vshll.u32 %v5181, 16
      %v5235 = vrot.slane %v5233, 5
      %v5236 = vsel %vm5194, %v5231, %v5235
      %v5238 = vshrl.u32 %v5182, 16
      %v5240 = vrot.slane %v5238, 4
      %v5241 = vshll.u32 %v5182, 16
      %v5243 = vrot.slane %v5241, 5
      %v5244 = vor.u32 %v5240, %v5243
      %v5245 = vrot.slane %v5244, 4
      %v5247 = vshll.u32 %v5183, 16
      %v5249 = vrot.slane %v5247, 5
      %v5250 = vsel %vm5194, %v5245, %v5249
      %v5252 = vshrl.u32 %v5184, 16
      %v5254 = vrot.slane %v5252, 4
      %v5255 = vshll.u32 %v5184, 16
      %v5257 = vrot.slane %v5255, 5
      %v5258 = vor.u32 %v5254, %v5257
      %v5259 = vrot.slane %v5258, 4
      %v5261 = vshll.u32 %v5185, 16
      %v5263 = vrot.slane %v5261, 5
      %v5264 = vsel %vm5194, %v5259, %v5263
      %v5266 = vshrl.u32 %v5186, 16
      %v5268 = vrot.slane %v5266, 4
      %v5269 = vshll.u32 %v5186, 16
      %v5271 = vrot.slane %v5269, 5
      %v5272 = vor.u32 %v5268, %v5271
      %v5273 = vrot.slane %v5272, 4
      %v5275 = vshll.u32 %v5187, 16
      %v5277 = vrot.slane %v5275, 5
      %v5278 = vsel %vm5194, %v5273, %v5277
      %v5280 = vshrl.u32 %v5188, 16
      %v5282 = vrot.slane %v5280, 4
      %v5283 = vshll.u32 %v5188, 16
      %v5285 = vrot.slane %v5283, 5
      %v5286 = vor.u32 %v5282, %v5285
      %v5287 = vrot.slane %v5286, 4
      %v5289 = vshll.u32 %v5189, 16
      %v5291 = vrot.slane %v5289, 5
      %v5292 = vsel %vm5194, %v5287, %v5291
      %v5294 = vshrl.u32 %v5190, 16
      %v5296 = vrot.slane %v5294, 4
      %v5297 = vshll.u32 %v5190, 16
      %v5299 = vrot.slane %v5297, 5
      %v5300 = vor.u32 %v5296, %v5299
      %v5301 = vrot.slane %v5300, 4
      %v5303 = vshll.u32 %v5191, 16
      %v5305 = vrot.slane %v5303, 5
      %v5306 = vsel %vm5194, %v5301, %v5305
      %v5315 = vunpack.c.l.bf16 %v5208
      %v5316 = vunpack.c.l.bf16 %v5222
      %v5317 = vunpack.c.l.bf16 %v5236
      %v5318 = vunpack.c.l.bf16 %v5250
      %v5319 = vunpack.c.l.bf16 %v5264
      %v5320 = vunpack.c.l.bf16 %v5278
      %v5321 = vunpack.c.l.bf16 %v5292
      %v5322 = vunpack.c.l.bf16 %v5306
      %v5323 = vld [vmem:[#allocation3] sm:$0xf]
      %v5324 = vld [vmem:[#allocation3 + $0x8] sm:$0xf]
      %v5325 = vld [vmem:[#allocation3 + $0x10] sm:$0xf]
      %v5326 = vld [vmem:[#allocation3 + $0x18] sm:$0xf]
      %v5327 = vld [vmem:[#allocation3 + $0x20] sm:$0xf]
      %v5328 = vld [vmem:[#allocation3 + $0x28] sm:$0xf]
      %v5329 = vld [vmem:[#allocation3 + $0x30] sm:$0xf]
      %v5330 = vld [vmem:[#allocation3 + $0x38] sm:$0xf]
      %v5331 = vld [vmem:[#allocation3 + $0x4] sm:$0x1]
      %v5332 = vld [vmem:[#allocation3 + $0xc] sm:$0x1]
      %v5333 = vld [vmem:[#allocation3 + $0x14] sm:$0x1]
      %v5334 = vld [vmem:[#allocation3 + $0x1c] sm:$0x1]
      %v5335 = vld [vmem:[#allocation3 + $0x24] sm:$0x1]
      %v5336 = vld [vmem:[#allocation3 + $0x2c] sm:$0x1]
      %v5337 = vld [vmem:[#allocation3 + $0x34] sm:$0x1]
      %v5338 = vld [vmem:[#allocation3 + $0x3c] sm:$0x1]
      %v5339 = vld [vmem:[#allocation3] sm:$0xe]
      %v5340 = vld [vmem:[#allocation3 + $0x8] sm:$0xe]
      %v5341 = vld [vmem:[#allocation3 + $0x10] sm:$0xe]
      %v5342 = vld [vmem:[#allocation3 + $0x18] sm:$0xe]
      %v5343 = vld [vmem:[#allocation3 + $0x20] sm:$0xe]
      %v5344 = vld [vmem:[#allocation3 + $0x28] sm:$0xe]
      %v5345 = vld [vmem:[#allocation3 + $0x30] sm:$0xe]
      %v5346 = vld [vmem:[#allocation3 + $0x38] sm:$0xe]
      %v5347 = vld [vmem:[%s1861] sm:$0xf]
      %v5348 = vld [vmem:[%s1861 + $0x8] sm:$0xf]
      %v5349 = vld [vmem:[%s1861 + $0x10] sm:$0xf]
      %v5350 = vld [vmem:[%s1861 + $0x18] sm:$0xf]
      %v5351 = vld [vmem:[%s1861 + $0x20] sm:$0xf]
      %v5352 = vld [vmem:[%s1861 + $0x28] sm:$0xf]
      %v5353 = vld [vmem:[%s1861 + $0x30] sm:$0xf]
      %v5354 = vld [vmem:[%s1861 + $0x38] sm:$0xf]
      %v5355 = vld [vmem:[%s1861 + $0x4] sm:$0x1]
      %v5356 = vld [vmem:[%s1861 + $0xc] sm:$0x1]
      %v5357 = vld [vmem:[%s1861 + $0x14] sm:$0x1]
      %v5358 = vld [vmem:[%s1861 + $0x1c] sm:$0x1]
      %v5359 = vld [vmem:[%s1861 + $0x24] sm:$0x1]
      %v5360 = vld [vmem:[%s1861 + $0x2c] sm:$0x1]
      %v5361 = vld [vmem:[%s1861 + $0x34] sm:$0x1]
      %v5362 = vld [vmem:[%s1861 + $0x3c] sm:$0x1]
      %v5363 = vld [vmem:[%s1861] sm:$0xe]
      %v5364 = vld [vmem:[%s1861 + $0x8] sm:$0xe]
      %v5365 = vld [vmem:[%s1861 + $0x10] sm:$0xe]
      %v5366 = vld [vmem:[%s1861 + $0x18] sm:$0xe]
      %v5367 = vld [vmem:[%s1861 + $0x20] sm:$0xe]
      %v5368 = vld [vmem:[%s1861 + $0x28] sm:$0xe]
      %v5369 = vld [vmem:[%s1861 + $0x30] sm:$0xe]
      %v5370 = vld [vmem:[%s1861 + $0x38] sm:$0xe]
      %v5371 = vld [vmem:[%s2089] sm:$0xf]
      %v5372 = vld [vmem:[%s2089 + $0x8] sm:$0xf]
      %v5373 = vld [vmem:[%s2089 + $0x10] sm:$0xf]
      %v5374 = vld [vmem:[%s2089 + $0x18] sm:$0xf]
      %v5375 = vld [vmem:[%s2089 + $0x20] sm:$0xf]
      %v5376 = vld [vmem:[%s2089 + $0x28] sm:$0xf]
      %v5377 = vld [vmem:[%s2089 + $0x30] sm:$0xf]
      %v5378 = vld [vmem:[%s2089 + $0x38] sm:$0xf]
      %v5379 = vld [vmem:[%s2089 + $0x4] sm:$0x1]
      %v5380 = vld [vmem:[%s2089 + $0xc] sm:$0x1]
      %v5381 = vld [vmem:[%s2089 + $0x14] sm:$0x1]
      %v5382 = vld [vmem:[%s2089 + $0x1c] sm:$0x1]
      %v5383 = vld [vmem:[%s2089 + $0x24] sm:$0x1]
      %v5384 = vld [vmem:[%s2089 + $0x2c] sm:$0x1]
      %v5385 = vld [vmem:[%s2089 + $0x34] sm:$0x1]
      %v5386 = vld [vmem:[%s2089 + $0x3c] sm:$0x1]
      %v5387 = vld [vmem:[%s2089] sm:$0xe]
      %v5388 = vld [vmem:[%s2089 + $0x8] sm:$0xe]
      %v5389 = vld [vmem:[%s2089 + $0x10] sm:$0xe]
      %v5390 = vld [vmem:[%s2089 + $0x18] sm:$0xe]
      %v5391 = vld [vmem:[%s2089 + $0x20] sm:$0xe]
      %v5392 = vld [vmem:[%s2089 + $0x28] sm:$0xe]
      %v5393 = vld [vmem:[%s2089 + $0x30] sm:$0xe]
      %v5394 = vld [vmem:[%s2089 + $0x38] sm:$0xe]
      %v5411 = vunpack.c.l.b16 %v5323
      %v5412 = vunpack.c.l.b16 %v5331
      %v5413 = vunpack.c.l.b16 %v5324
      %v5414 = vunpack.c.l.b16 %v5332
      %v5415 = vunpack.c.l.b16 %v5325
      %v5416 = vunpack.c.l.b16 %v5333
      %v5417 = vunpack.c.l.b16 %v5326
      %v5418 = vunpack.c.l.b16 %v5334
      %v5419 = vunpack.c.l.b16 %v5327
      %v5420 = vunpack.c.l.b16 %v5335
      %v5421 = vunpack.c.l.b16 %v5328
      %v5422 = vunpack.c.l.b16 %v5336
      %v5423 = vunpack.c.l.b16 %v5329
      %v5424 = vunpack.c.l.b16 %v5337
      %v5425 = vunpack.c.l.b16 %v5330
      %v5426 = vunpack.c.l.b16 %v5338
      %v5427 = vpack.c.b16 %v5412, %v5411
      %v5428 = vpack.c.b16 %v5414, %v5413
      %v5429 = vpack.c.b16 %v5416, %v5415
      %v5430 = vpack.c.b16 %v5418, %v5417
      %v5431 = vpack.c.b16 %v5420, %v5419
      %v5432 = vpack.c.b16 %v5422, %v5421
      %v5433 = vpack.c.b16 %v5424, %v5423
      %v5434 = vpack.c.b16 %v5426, %v5425
      %v5436 = vshrl.u32 %v5427, 16
      %v5438 = vshll.u32 %v5427, 16
      %v5440 = vrot.slane %v5438, 1
      %v5441 = vor.u32 %v5436, %v5440
      %v5443 = vshrl.u32 %v5428, 16
      %v5445 = vshll.u32 %v5428, 16
      %v5447 = vrot.slane %v5445, 1
      %v5448 = vor.u32 %v5443, %v5447
      %v5450 = vshrl.u32 %v5429, 16
      %v5452 = vshll.u32 %v5429, 16
      %v5454 = vrot.slane %v5452, 1
      %v5455 = vor.u32 %v5450, %v5454
      %v5457 = vshrl.u32 %v5430, 16
      %v5459 = vshll.u32 %v5430, 16
      %v5461 = vrot.slane %v5459, 1
      %v5462 = vor.u32 %v5457, %v5461
      %v5464 = vshrl.u32 %v5431, 16
      %v5466 = vshll.u32 %v5431, 16
      %v5468 = vrot.slane %v5466, 1
      %v5469 = vor.u32 %v5464, %v5468
      %v5471 = vshrl.u32 %v5432, 16
      %v5473 = vshll.u32 %v5432, 16
      %v5475 = vrot.slane %v5473, 1
      %v5476 = vor.u32 %v5471, %v5475
      %v5478 = vshrl.u32 %v5433, 16
      %v5480 = vshll.u32 %v5433, 16
      %v5482 = vrot.slane %v5480, 1
      %v5483 = vor.u32 %v5478, %v5482
      %v5485 = vshrl.u32 %v5434, 16
      %v5487 = vshll.u32 %v5434, 16
      %v5489 = vrot.slane %v5487, 1
      %v5490 = vor.u32 %v5485, %v5489
      %v5499 = vunpack.c.l.b16 %v5339
      %v5500 = vunpack.c.l.b16 %v5340
      %v5501 = vunpack.c.l.b16 %v5341
      %v5502 = vunpack.c.l.b16 %v5342
      %v5503 = vunpack.c.l.b16 %v5343
      %v5504 = vunpack.c.l.b16 %v5344
      %v5505 = vunpack.c.l.b16 %v5345
      %v5506 = vunpack.c.l.b16 %v5346
      %v5507 = vpack.c.b16 %v5412, %v5499
      %v5508 = vpack.c.b16 %v5414, %v5500
      %v5509 = vpack.c.b16 %v5416, %v5501
      %v5510 = vpack.c.b16 %v5418, %v5502
      %v5511 = vpack.c.b16 %v5420, %v5503
      %v5512 = vpack.c.b16 %v5422, %v5504
      %v5513 = vpack.c.b16 %v5424, %v5505
      %v5514 = vpack.c.b16 %v5426, %v5506
      %v5515 = vrot.slane %v5507, 1
      %v5516 = vrot.slane %v5508, 1
      %v5517 = vrot.slane %v5509, 1
      %v5518 = vrot.slane %v5510, 1
      %v5519 = vrot.slane %v5511, 1
      %v5520 = vrot.slane %v5512, 1
      %v5521 = vrot.slane %v5513, 1
      %v5522 = vrot.slane %v5514, 1
      %v5539 = vunpack.c.l.b16 %v5347
      %v5540 = vunpack.c.l.b16 %v5355
      %v5541 = vunpack.c.l.b16 %v5348
      %v5542 = vunpack.c.l.b16 %v5356
      %v5543 = vunpack.c.l.b16 %v5349
      %v5544 = vunpack.c.l.b16 %v5357
      %v5545 = vunpack.c.l.b16 %v5350
      %v5546 = vunpack.c.l.b16 %v5358
      %v5547 = vunpack.c.l.b16 %v5351
      %v5548 = vunpack.c.l.b16 %v5359
      %v5549 = vunpack.c.l.b16 %v5352
      %v5550 = vunpack.c.l.b16 %v5360
      %v5551 = vunpack.c.l.b16 %v5353
      %v5552 = vunpack.c.l.b16 %v5361
      %v5553 = vunpack.c.l.b16 %v5354
      %v5554 = vunpack.c.l.b16 %v5362
      %v5555 = vpack.c.b16 %v5540, %v5539
      %v5556 = vpack.c.b16 %v5542, %v5541
      %v5557 = vpack.c.b16 %v5544, %v5543
      %v5558 = vpack.c.b16 %v5546, %v5545
      %v5559 = vpack.c.b16 %v5548, %v5547
      %v5560 = vpack.c.b16 %v5550, %v5549
      %v5561 = vpack.c.b16 %v5552, %v5551
      %v5562 = vpack.c.b16 %v5554, %v5553
      %v5564 = vshrl.u32 %v5555, 16
      %v5566 = vshll.u32 %v5555, 16
      %v5568 = vrot.slane %v5566, 1
      %v5569 = vor.u32 %v5564, %v5568
      %v5571 = vshrl.u32 %v5556, 16
      %v5573 = vshll.u32 %v5556, 16
      %v5575 = vrot.slane %v5573, 1
      %v5576 = vor.u32 %v5571, %v5575
      %v5578 = vshrl.u32 %v5557, 16
      %v5580 = vshll.u32 %v5557, 16
      %v5582 = vrot.slane %v5580, 1
      %v5583 = vor.u32 %v5578, %v5582
      %v5585 = vshrl.u32 %v5558, 16
      %v5587 = vshll.u32 %v5558, 16
      %v5589 = vrot.slane %v5587, 1
      %v5590 = vor.u32 %v5585, %v5589
      %v5592 = vshrl.u32 %v5559, 16
      %v5594 = vshll.u32 %v5559, 16
      %v5596 = vrot.slane %v5594, 1
      %v5597 = vor.u32 %v5592, %v5596
      %v5599 = vshrl.u32 %v5560, 16
      %v5601 = vshll.u32 %v5560, 16
      %v5603 = vrot.slane %v5601, 1
      %v5604 = vor.u32 %v5599, %v5603
      %v5606 = vshrl.u32 %v5561, 16
      %v5608 = vshll.u32 %v5561, 16
      %v5610 = vrot.slane %v5608, 1
      %v5611 = vor.u32 %v5606, %v5610
      %v5613 = vshrl.u32 %v5562, 16
      %v5615 = vshll.u32 %v5562, 16
      %v5617 = vrot.slane %v5615, 1
      %v5618 = vor.u32 %v5613, %v5617
      %v5627 = vunpack.c.l.b16 %v5363
      %v5628 = vunpack.c.l.b16 %v5364
      %v5629 = vunpack.c.l.b16 %v5365
      %v5630 = vunpack.c.l.b16 %v5366
      %v5631 = vunpack.c.l.b16 %v5367
      %v5632 = vunpack.c.l.b16 %v5368
      %v5633 = vunpack.c.l.b16 %v5369
      %v5634 = vunpack.c.l.b16 %v5370
      %v5635 = vpack.c.b16 %v5540, %v5627
      %v5636 = vpack.c.b16 %v5542, %v5628
      %v5637 = vpack.c.b16 %v5544, %v5629
      %v5638 = vpack.c.b16 %v5546, %v5630
      %v5639 = vpack.c.b16 %v5548, %v5631
      %v5640 = vpack.c.b16 %v5550, %v5632
      %v5641 = vpack.c.b16 %v5552, %v5633
      %v5642 = vpack.c.b16 %v5554, %v5634
      %v5643 = vrot.slane %v5635, 1
      %v5644 = vrot.slane %v5636, 1
      %v5645 = vrot.slane %v5637, 1
      %v5646 = vrot.slane %v5638, 1
      %v5647 = vrot.slane %v5639, 1
      %v5648 = vrot.slane %v5640, 1
      %v5649 = vrot.slane %v5641, 1
      %v5650 = vrot.slane %v5642, 1
      %v5667 = vunpack.c.l.b16 %v5371
      %v5668 = vunpack.c.l.b16 %v5379
      %v5669 = vunpack.c.l.b16 %v5372
      %v5670 = vunpack.c.l.b16 %v5380
      %v5671 = vunpack.c.l.b16 %v5373
      %v5672 = vunpack.c.l.b16 %v5381
      %v5673 = vunpack.c.l.b16 %v5374
      %v5674 = vunpack.c.l.b16 %v5382
      %v5675 = vunpack.c.l.b16 %v5375
      %v5676 = vunpack.c.l.b16 %v5383
      %v5677 = vunpack.c.l.b16 %v5376
      %v5678 = vunpack.c.l.b16 %v5384
      %v5679 = vunpack.c.l.b16 %v5377
      %v5680 = vunpack.c.l.b16 %v5385
      %v5681 = vunpack.c.l.b16 %v5378
      %v5682 = vunpack.c.l.b16 %v5386
      %v5683 = vpack.c.b16 %v5668, %v5667
      %v5684 = vpack.c.b16 %v5670, %v5669
      %v5685 = vpack.c.b16 %v5672, %v5671
      %v5686 = vpack.c.b16 %v5674, %v5673
      %v5687 = vpack.c.b16 %v5676, %v5675
      %v5688 = vpack.c.b16 %v5678, %v5677
      %v5689 = vpack.c.b16 %v5680, %v5679
      %v5690 = vpack.c.b16 %v5682, %v5681
      %v5692 = vshrl.u32 %v5683, 16
      %v5694 = vshll.u32 %v5683, 16
      %v5696 = vrot.slane %v5694, 1
      %v5697 = vor.u32 %v5692, %v5696
      %v5699 = vshrl.u32 %v5684, 16
      %v5701 = vshll.u32 %v5684, 16
      %v5703 = vrot.slane %v5701, 1
      %v5704 = vor.u32 %v5699, %v5703
      %v5706 = vshrl.u32 %v5685, 16
      %v5708 = vshll.u32 %v5685, 16
      %v5710 = vrot.slane %v5708, 1
      %v5711 = vor.u32 %v5706, %v5710
      %v5713 = vshrl.u32 %v5686, 16
      %v5715 = vshll.u32 %v5686, 16
      %v5717 = vrot.slane %v5715, 1
      %v5718 = vor.u32 %v5713, %v5717
      %v5720 = vshrl.u32 %v5687, 16
      %v5722 = vshll.u32 %v5687, 16
      %v5724 = vrot.slane %v5722, 1
      %v5725 = vor.u32 %v5720, %v5724
      %v5727 = vshrl.u32 %v5688, 16
      %v5729 = vshll.u32 %v5688, 16
      %v5731 = vrot.slane %v5729, 1
      %v5732 = vor.u32 %v5727, %v5731
      %v5734 = vshrl.u32 %v5689, 16
      %v5736 = vshll.u32 %v5689, 16
      %v5738 = vrot.slane %v5736, 1
      %v5739 = vor.u32 %v5734, %v5738
      %v5741 = vshrl.u32 %v5690, 16
      %v5743 = vshll.u32 %v5690, 16
      %v5745 = vrot.slane %v5743, 1
      %v5746 = vor.u32 %v5741, %v5745
      %v5755 = vunpack.c.l.b16 %v5387
      %v5756 = vunpack.c.l.b16 %v5388
      %v5757 = vunpack.c.l.b16 %v5389
      %v5758 = vunpack.c.l.b16 %v5390
      %v5759 = vunpack.c.l.b16 %v5391
      %v5760 = vunpack.c.l.b16 %v5392
      %v5761 = vunpack.c.l.b16 %v5393
      %v5762 = vunpack.c.l.b16 %v5394
      %v5763 = vpack.c.b16 %v5668, %v5755
      %v5764 = vpack.c.b16 %v5670, %v5756
      %v5765 = vpack.c.b16 %v5672, %v5757
      %v5766 = vpack.c.b16 %v5674, %v5758
      %v5767 = vpack.c.b16 %v5676, %v5759
      %v5768 = vpack.c.b16 %v5678, %v5760
      %v5769 = vpack.c.b16 %v5680, %v5761
      %v5770 = vpack.c.b16 %v5682, %v5762
      %v5771 = vrot.slane %v5763, 1
      %v5772 = vrot.slane %v5764, 1
      %v5773 = vrot.slane %v5765, 1
      %v5774 = vrot.slane %v5766, 1
      %v5775 = vrot.slane %v5767, 1
      %v5776 = vrot.slane %v5768, 1
      %v5777 = vrot.slane %v5769, 1
      %v5778 = vrot.slane %v5770, 1
      %v5779 = vunpack.c.l.b16 %v5441
      %v5780 = vunpack.c.l.b16 %v5515
      %v5781 = vunpack.c.l.b16 %v5569
      %v5782 = vunpack.c.l.b16 %v5643
      %v5783 = vunpack.c.l.b16 %v5697
      %v5784 = vunpack.c.l.b16 %v5771
      %v5785 = vunpack.c.l.b16 %v5448
      %v5786 = vunpack.c.l.b16 %v5516
      %v5787 = vunpack.c.l.b16 %v5576
      %v5788 = vunpack.c.l.b16 %v5644
      %v5789 = vunpack.c.l.b16 %v5704
      %v5790 = vunpack.c.l.b16 %v5772
      %v5791 = vunpack.c.l.b16 %v5455
      %v5792 = vunpack.c.l.b16 %v5517
      %v5793 = vunpack.c.l.b16 %v5583
      %v5794 = vunpack.c.l.b16 %v5645
      %v5795 = vunpack.c.l.b16 %v5711
      %v5796 = vunpack.c.l.b16 %v5773
      %v5797 = vunpack.c.l.b16 %v5462
      %v5798 = vunpack.c.l.b16 %v5518
      %v5799 = vunpack.c.l.b16 %v5590
      %v5800 = vunpack.c.l.b16 %v5646
      %v5801 = vunpack.c.l.b16 %v5718
      %v5802 = vunpack.c.l.b16 %v5774
      %v5803 = vunpack.c.l.b16 %v5469
      %v5804 = vunpack.c.l.b16 %v5519
      %v5805 = vunpack.c.l.b16 %v5597
      %v5806 = vunpack.c.l.b16 %v5647
      %v5807 = vunpack.c.l.b16 %v5725
      %v5808 = vunpack.c.l.b16 %v5775
      %v5809 = vunpack.c.l.b16 %v5476
      %v5810 = vunpack.c.l.b16 %v5520
      %v5811 = vunpack.c.l.b16 %v5604
      %v5812 = vunpack.c.l.b16 %v5648
      %v5813 = vunpack.c.l.b16 %v5732
      %v5814 = vunpack.c.l.b16 %v5776
      %v5815 = vunpack.c.l.b16 %v5483
      %v5816 = vunpack.c.l.b16 %v5521
      %v5817 = vunpack.c.l.b16 %v5611
      %v5818 = vunpack.c.l.b16 %v5649
      %v5819 = vunpack.c.l.b16 %v5739
      %v5820 = vunpack.c.l.b16 %v5777
      %v5821 = vunpack.c.l.b16 %v5490
      %v5822 = vunpack.c.l.b16 %v5522
      %v5823 = vunpack.c.l.b16 %v5618
      %v5824 = vunpack.c.l.b16 %v5650
      %v5825 = vunpack.c.l.b16 %v5746
      %v5826 = vunpack.c.l.b16 %v5778
      %s5827 = scalar_lea.vmem %s3, 576
      %v5828 = vld [vmem:[%s5827] sm:$0xf]
      %v5829 = vld [vmem:[%s5827 + $0x4] sm:$0xf]
      %v5830 = vld [vmem:[%s5827 + $0x8] sm:$0xf]
      %v5831 = vld [vmem:[%s5827 + $0xc] sm:$0xf]
      %v5832 = vld [vmem:[%s5827 + $0x10] sm:$0xf]
      %v5833 = vld [vmem:[%s5827 + $0x14] sm:$0xf]
      %v5834 = vld [vmem:[%s5827 + $0x18] sm:$0xf]
      %v5835 = vld [vmem:[%s5827 + $0x1c] sm:$0xf]
      %v5836 = vld [vmem:[%s5827 + $0x20] sm:$0xf]
      %v5837 = vld [vmem:[%s5827 + $0x24] sm:$0xf]
      %v5838 = vld [vmem:[%s5827 + $0x28] sm:$0xf]
      %v5839 = vld [vmem:[%s5827 + $0x2c] sm:$0xf]
      %v5840 = vld [vmem:[%s5827 + $0x30] sm:$0xf]
      %v5841 = vld [vmem:[%s5827 + $0x34] sm:$0xf]
      %v5842 = vld [vmem:[%s5827 + $0x38] sm:$0xf]
      %v5843 = vld [vmem:[%s5827 + $0x3c] sm:$0xf]
      %v5844 = vld [vmem:[%s5827 + $0x40] sm:$0xf]
      %v5845 = vld [vmem:[%s5827 + $0x44] sm:$0xf]
      %v5846 = vld [vmem:[%s5827 + $0x48] sm:$0xf]
      %v5847 = vld [vmem:[%s5827 + $0x4c] sm:$0xf]
      %v5848 = vld [vmem:[%s5827 + $0x50] sm:$0xf]
      %v5849 = vld [vmem:[%s5827 + $0x54] sm:$0xf]
      %v5850 = vld [vmem:[%s5827 + $0x58] sm:$0xf]
      %v5851 = vld [vmem:[%s5827 + $0x5c] sm:$0xf]
      %v5852 = vld [vmem:[%s5827 + $0x60] sm:$0xf]
      %v5853 = vld [vmem:[%s5827 + $0x64] sm:$0xf]
      %v5854 = vld [vmem:[%s5827 + $0x68] sm:$0xf]
      %v5855 = vld [vmem:[%s5827 + $0x6c] sm:$0xf]
      %v5856 = vld [vmem:[%s5827 + $0x70] sm:$0xf]
      %v5857 = vld [vmem:[%s5827 + $0x74] sm:$0xf]
      %v5858 = vld [vmem:[%s5827 + $0x78] sm:$0xf]
      %v5859 = vld [vmem:[%s5827 + $0x7c] sm:$0xf]
      %v5860 = vld [vmem:[%s5827 + $0x80] sm:$0xf]
      %v5861 = vld [vmem:[%s5827 + $0x84] sm:$0xf]
      %v5862 = vld [vmem:[%s5827 + $0x88] sm:$0xf]
      %v5863 = vld [vmem:[%s5827 + $0x8c] sm:$0xf]
      %v5864 = vld [vmem:[%s5827 + $0x90] sm:$0xf]
      %v5865 = vld [vmem:[%s5827 + $0x94] sm:$0xf]
      %v5866 = vld [vmem:[%s5827 + $0x98] sm:$0xf]
      %v5867 = vld [vmem:[%s5827 + $0x9c] sm:$0xf]
      %v5868 = vld [vmem:[%s5827 + $0xa0] sm:$0xf]
      %v5869 = vld [vmem:[%s5827 + $0xa4] sm:$0xf]
      %v5870 = vld [vmem:[%s5827 + $0xa8] sm:$0xf]
      %v5871 = vld [vmem:[%s5827 + $0xac] sm:$0xf]
      %v5872 = vld [vmem:[%s5827 + $0xb0] sm:$0xf]
      %v5873 = vld [vmem:[%s5827 + $0xb4] sm:$0xf]
      %v5874 = vld [vmem:[%s5827 + $0xb8] sm:$0xf]
      %v5875 = vld [vmem:[%s5827 + $0xbc] sm:$0xf]
      %v5876 = vld [vmem:[%s5827 + $0xc0] sm:$0xf]
      %v5877 = vld [vmem:[%s5827 + $0xc4] sm:$0xf]
      %v5878 = vld [vmem:[%s5827 + $0xc8] sm:$0xf]
      %v5879 = vld [vmem:[%s5827 + $0xcc] sm:$0xf]
      %v5880 = vld [vmem:[%s5827 + $0xd0] sm:$0xf]
      %v5881 = vld [vmem:[%s5827 + $0xd4] sm:$0xf]
      %v5882 = vld [vmem:[%s5827 + $0xd8] sm:$0xf]
      %v5883 = vld [vmem:[%s5827 + $0xdc] sm:$0xf]
      %v5884 = vld [vmem:[%s5827 + $0xe0] sm:$0xf]
      %v5885 = vld [vmem:[%s5827 + $0xe4] sm:$0xf]
      %v5886 = vld [vmem:[%s5827 + $0xe8] sm:$0xf]
      %v5887 = vld [vmem:[%s5827 + $0xec] sm:$0xf]
      %v5888 = vld [vmem:[%s5827 + $0xf0] sm:$0xf]
      %v5889 = vld [vmem:[%s5827 + $0xf4] sm:$0xf]
      %v5890 = vld [vmem:[%s5827 + $0xf8] sm:$0xf]
      %v5891 = vld [vmem:[%s5827 + $0xfc] sm:$0xf]
      %v5892 = vld [vmem:[%s5827 + $0x100] sm:$0xf]
      %v5893 = vld [vmem:[%s5827 + $0x104] sm:$0xf]
      %v5894 = vld [vmem:[%s5827 + $0x108] sm:$0xf]
      %v5895 = vld [vmem:[%s5827 + $0x10c] sm:$0xf]
      %v5896 = vld [vmem:[%s5827 + $0x110] sm:$0xf]
      %v5897 = vld [vmem:[%s5827 + $0x114] sm:$0xf]
      %v5898 = vld [vmem:[%s5827 + $0x118] sm:$0xf]
      %v5899 = vld [vmem:[%s5827 + $0x11c] sm:$0xf]
      %v5900 = vld [vmem:[%s5827 + $0x120] sm:$0xf]
      %v5901 = vld [vmem:[%s5827 + $0x124] sm:$0xf]
      %v5902 = vld [vmem:[%s5827 + $0x128] sm:$0xf]
      %v5903 = vld [vmem:[%s5827 + $0x12c] sm:$0xf]
      %v5904 = vld [vmem:[%s5827 + $0x130] sm:$0xf]
      %v5905 = vld [vmem:[%s5827 + $0x134] sm:$0xf]
      %v5906 = vld [vmem:[%s5827 + $0x138] sm:$0xf]
      %v5907 = vld [vmem:[%s5827 + $0x13c] sm:$0xf]
      %v5908 = vld [vmem:[%s5827 + $0x140] sm:$0xf]
      %v5909 = vld [vmem:[%s5827 + $0x144] sm:$0xf]
      %v5910 = vld [vmem:[%s5827 + $0x148] sm:$0xf]
      %v5911 = vld [vmem:[%s5827 + $0x14c] sm:$0xf]
      %v5912 = vld [vmem:[%s5827 + $0x150] sm:$0xf]
      %v5913 = vld [vmem:[%s5827 + $0x154] sm:$0xf]
      %v5914 = vld [vmem:[%s5827 + $0x158] sm:$0xf]
      %v5915 = vld [vmem:[%s5827 + $0x15c] sm:$0xf]
      %v5916 = vld [vmem:[%s5827 + $0x160] sm:$0xf]
      %v5917 = vld [vmem:[%s5827 + $0x164] sm:$0xf]
      %v5918 = vld [vmem:[%s5827 + $0x168] sm:$0xf]
      %v5919 = vld [vmem:[%s5827 + $0x16c] sm:$0xf]
      %v5920 = vld [vmem:[%s5827 + $0x170] sm:$0xf]
      %v5921 = vld [vmem:[%s5827 + $0x174] sm:$0xf]
      %v5922 = vld [vmem:[%s5827 + $0x178] sm:$0xf]
      %v5923 = vld [vmem:[%s5827 + $0x17c] sm:$0xf]
      %v5924 = vld [vmem:[%s5827 + $0x180] sm:$0xf]
      %v5925 = vld [vmem:[%s5827 + $0x184] sm:$0xf]
      %v5926 = vld [vmem:[%s5827 + $0x188] sm:$0xf]
      %v5927 = vld [vmem:[%s5827 + $0x18c] sm:$0xf]
      %v5928 = vld [vmem:[%s5827 + $0x190] sm:$0xf]
      %v5929 = vld [vmem:[%s5827 + $0x194] sm:$0xf]
      %v5930 = vld [vmem:[%s5827 + $0x198] sm:$0xf]
      %v5931 = vld [vmem:[%s5827 + $0x19c] sm:$0xf]
      %v5932 = vld [vmem:[%s5827 + $0x1a0] sm:$0xf]
      %v5933 = vld [vmem:[%s5827 + $0x1a4] sm:$0xf]
      %v5934 = vld [vmem:[%s5827 + $0x1a8] sm:$0xf]
      %v5935 = vld [vmem:[%s5827 + $0x1ac] sm:$0xf]
      %v5936 = vld [vmem:[%s5827 + $0x1b0] sm:$0xf]
      %v5937 = vld [vmem:[%s5827 + $0x1b4] sm:$0xf]
      %v5938 = vld [vmem:[%s5827 + $0x1b8] sm:$0xf]
      %v5939 = vld [vmem:[%s5827 + $0x1bc] sm:$0xf]
      %v5940 = vld [vmem:[%s5827 + $0x1c0] sm:$0xf]
      %v5941 = vld [vmem:[%s5827 + $0x1c4] sm:$0xf]
      %v5942 = vld [vmem:[%s5827 + $0x1c8] sm:$0xf]
      %v5943 = vld [vmem:[%s5827 + $0x1cc] sm:$0xf]
      %v5944 = vld [vmem:[%s5827 + $0x1d0] sm:$0xf]
      %v5945 = vld [vmem:[%s5827 + $0x1d4] sm:$0xf]
      %v5946 = vld [vmem:[%s5827 + $0x1d8] sm:$0xf]
      %v5947 = vld [vmem:[%s5827 + $0x1dc] sm:$0xf]
      %v5948 = vld [vmem:[%s5827 + $0x1e0] sm:$0xf]
      %v5949 = vld [vmem:[%s5827 + $0x1e4] sm:$0xf]
      %v5950 = vld [vmem:[%s5827 + $0x1e8] sm:$0xf]
      %v5951 = vld [vmem:[%s5827 + $0x1ec] sm:$0xf]
      %v5952 = vld [vmem:[%s5827 + $0x1f0] sm:$0xf]
      %v5953 = vld [vmem:[%s5827 + $0x1f4] sm:$0xf]
      %v5954 = vld [vmem:[%s5827 + $0x1f8] sm:$0xf]
      %v5955 = vld [vmem:[%s5827 + $0x1fc] sm:$0xf]
      %v5956 = vld [vmem:[%s5827 + $0x200] sm:$0xf]
      %v5957 = vld [vmem:[%s5827 + $0x204] sm:$0xf]
      %v5958 = vld [vmem:[%s5827 + $0x208] sm:$0xf]
      %v5959 = vld [vmem:[%s5827 + $0x20c] sm:$0xf]
      %v5960 = vld [vmem:[%s5827 + $0x210] sm:$0xf]
      %v5961 = vld [vmem:[%s5827 + $0x214] sm:$0xf]
      %v5962 = vld [vmem:[%s5827 + $0x218] sm:$0xf]
      %v5963 = vld [vmem:[%s5827 + $0x21c] sm:$0xf]
      %v5964 = vld [vmem:[%s5827 + $0x220] sm:$0xf]
      %v5965 = vld [vmem:[%s5827 + $0x224] sm:$0xf]
      %v5966 = vld [vmem:[%s5827 + $0x228] sm:$0xf]
      %v5967 = vld [vmem:[%s5827 + $0x22c] sm:$0xf]
      %v5968 = vld [vmem:[%s5827 + $0x230] sm:$0xf]
      %v5969 = vld [vmem:[%s5827 + $0x234] sm:$0xf]
      %v5970 = vld [vmem:[%s5827 + $0x238] sm:$0xf]
      %v5971 = vld [vmem:[%s5827 + $0x23c] sm:$0xf]
      %s5972 = scalar_lea.vmem %s4, 1
      %v5973 = vld [vmem:[%s5972] sm:$0x1]
      %v5975 = vperm.slane %v5973, 0
      %v5977 = vpack.c.b16 %v5413, %v5411
      %v5978 = vpack.c.b16 %v5785, %v5779
      %v5979 = vpack.c.b16 %v5786, %v5780
      %v5980 = vpack.c.b16 %v5541, %v5539
      %v5981 = vpack.c.b16 %v5787, %v5781
      %v5982 = vpack.c.b16 %v5788, %v5782
      %v5983 = vpack.c.b16 %v5669, %v5667
      %v5984 = vpack.c.b16 %v5789, %v5783
      %v5985 = vpack.c.b16 %v5790, %v5784
      %v5986 = vpack.c.b16 %v5417, %v5415
      %v5987 = vpack.c.b16 %v5797, %v5791
      %v5988 = vpack.c.b16 %v5798, %v5792
      %v5989 = vpack.c.b16 %v5545, %v5543
      %v5990 = vpack.c.b16 %v5799, %v5793
      %v5991 = vpack.c.b16 %v5800, %v5794
      %v5992 = vpack.c.b16 %v5673, %v5671
      %v5993 = vpack.c.b16 %v5801, %v5795
      %v5994 = vpack.c.b16 %v5802, %v5796
      %v5995 = vpack.c.b16 %v5421, %v5419
      %v5996 = vpack.c.b16 %v5809, %v5803
      %v5997 = vpack.c.b16 %v5810, %v5804
      %v5998 = vpack.c.b16 %v5549, %v5547
      %v5999 = vpack.c.b16 %v5811, %v5805
      %v6000 = vpack.c.b16 %v5812, %v5806
      %v6001 = vpack.c.b16 %v5677, %v5675
      %v6002 = vpack.c.b16 %v5813, %v5807
      %v6003 = vpack.c.b16 %v5814, %v5808
      %v6004 = vpack.c.b16 %v5425, %v5423
      %v6005 = vpack.c.b16 %v5821, %v5815
      %v6006 = vpack.c.b16 %v5822, %v5816
      %v6007 = vpack.c.b16 %v5553, %v5551
      %v6008 = vpack.c.b16 %v5823, %v5817
      %v6009 = vpack.c.b16 %v5824, %v5818
      %v6010 = vpack.c.b16 %v5681, %v5679
      %v6011 = vpack.c.b16 %v5825, %v5819
      %v6012 = vpack.c.b16 %v5826, %v5820
      %v6193 = vunpack.c.l.b16 %v5828
      %v6194 = vunpack.c.l.b16 %v5829
      %v6195 = vunpack.c.l.b16 %v5830
      %v6196 = vunpack.c.l.b16 %v5831
      %v6197 = vunpack.c.l.b16 %v5832
      %v6198 = vunpack.c.l.b16 %v5833
      %v6199 = vunpack.c.l.b16 %v5834
      %v6200 = vunpack.c.l.b16 %v5835
      %v6201 = vunpack.c.l.b16 %v5836
      %v6202 = vunpack.c.l.b16 %v5837
      %v6203 = vunpack.c.l.b16 %v5838
      %v6204 = vunpack.c.l.b16 %v5839
      %v6205 = vunpack.c.l.b16 %v5840
      %v6206 = vunpack.c.l.b16 %v5841
      %v6207 = vunpack.c.l.b16 %v5842
      %v6208 = vunpack.c.l.b16 %v5843
      %v6209 = vunpack.c.l.b16 %v5844
      %v6210 = vunpack.c.l.b16 %v5845
      %v6211 = vunpack.c.l.b16 %v5846
      %v6212 = vunpack.c.l.b16 %v5847
      %v6213 = vunpack.c.l.b16 %v5848
      %v6214 = vunpack.c.l.b16 %v5849
      %v6215 = vunpack.c.l.b16 %v5850
      %v6216 = vunpack.c.l.b16 %v5851
      %v6217 = vunpack.c.l.b16 %v5852
      %v6218 = vunpack.c.l.b16 %v5853
      %v6219 = vunpack.c.l.b16 %v5854
      %v6220 = vunpack.c.l.b16 %v5855
      %v6221 = vunpack.c.l.b16 %v5856
      %v6222 = vunpack.c.l.b16 %v5857
      %v6223 = vunpack.c.l.b16 %v5858
      %v6224 = vunpack.c.l.b16 %v5859
      %v6225 = vunpack.c.l.b16 %v5860
      %v6226 = vunpack.c.l.b16 %v5861
      %v6227 = vunpack.c.l.b16 %v5862
      %v6228 = vunpack.c.l.b16 %v5863
      %v6229 = vunpack.c.l.b16 %v5864
      %v6230 = vunpack.c.l.b16 %v5865
      %v6231 = vunpack.c.l.b16 %v5866
      %v6232 = vunpack.c.l.b16 %v5867
      %v6233 = vunpack.c.l.b16 %v5868
      %v6234 = vunpack.c.l.b16 %v5869
      %v6235 = vunpack.c.l.b16 %v5870
      %v6236 = vunpack.c.l.b16 %v5871
      %v6237 = vunpack.c.l.b16 %v5872
      %v6238 = vunpack.c.l.b16 %v5873
      %v6239 = vunpack.c.l.b16 %v5874
      %v6240 = vunpack.c.l.b16 %v5875
      %v6241 = vunpack.c.l.b16 %v5876
      %v6242 = vunpack.c.l.b16 %v5877
      %v6243 = vunpack.c.l.b16 %v5878
      %v6244 = vunpack.c.l.b16 %v5879
      %v6245 = vunpack.c.l.b16 %v5880
      %v6246 = vunpack.c.l.b16 %v5881
      %v6247 = vunpack.c.l.b16 %v5882
      %v6248 = vunpack.c.l.b16 %v5883
      %v6249 = vunpack.c.l.b16 %v5884
      %v6250 = vunpack.c.l.b16 %v5885
      %v6251 = vunpack.c.l.b16 %v5886
      %v6252 = vunpack.c.l.b16 %v5887
      %v6253 = vunpack.c.l.b16 %v5888
      %v6254 = vunpack.c.l.b16 %v5889
      %v6255 = vunpack.c.l.b16 %v5890
      %v6256 = vunpack.c.l.b16 %v5891
      %v6257 = vunpack.c.l.b16 %v5892
      %v6258 = vunpack.c.l.b16 %v5893
      %v6259 = vunpack.c.l.b16 %v5894
      %v6260 = vunpack.c.l.b16 %v5895
      %v6261 = vunpack.c.l.b16 %v5896
      %v6262 = vunpack.c.l.b16 %v5897
      %v6263 = vunpack.c.l.b16 %v5898
      %v6264 = vunpack.c.l.b16 %v5899
      %v6265 = vunpack.c.l.b16 %v5900
      %v6266 = vunpack.c.l.b16 %v5901
      %v6267 = vunpack.c.l.b16 %v5902
      %v6268 = vunpack.c.l.b16 %v5903
      %v6269 = vunpack.c.l.b16 %v5904
      %v6270 = vunpack.c.l.b16 %v5905
      %v6271 = vunpack.c.l.b16 %v5906
      %v6272 = vunpack.c.l.b16 %v5907
      %v6273 = vunpack.c.l.b16 %v5908
      %v6274 = vunpack.c.l.b16 %v5909
      %v6275 = vunpack.c.l.b16 %v5910
      %v6276 = vunpack.c.l.b16 %v5911
      %v6277 = vunpack.c.l.b16 %v5912
      %v6278 = vunpack.c.l.b16 %v5913
      %v6279 = vunpack.c.l.b16 %v5914
      %v6280 = vunpack.c.l.b16 %v5915
      %v6281 = vunpack.c.l.b16 %v5916
      %v6282 = vunpack.c.l.b16 %v5917
      %v6283 = vunpack.c.l.b16 %v5918
      %v6284 = vunpack.c.l.b16 %v5919
      %v6285 = vunpack.c.l.b16 %v5920
      %v6286 = vunpack.c.l.b16 %v5921
      %v6287 = vunpack.c.l.b16 %v5922
      %v6288 = vunpack.c.l.b16 %v5923
      %v6289 = vunpack.c.l.b16 %v5924
      %v6290 = vunpack.c.l.b16 %v5925
      %v6291 = vunpack.c.l.b16 %v5926
      %v6292 = vunpack.c.l.b16 %v5927
      %v6293 = vunpack.c.l.b16 %v5928
      %v6294 = vunpack.c.l.b16 %v5929
      %v6295 = vunpack.c.l.b16 %v5930
      %v6296 = vunpack.c.l.b16 %v5931
      %v6297 = vunpack.c.l.b16 %v5932
      %v6298 = vunpack.c.l.b16 %v5933
      %v6299 = vunpack.c.l.b16 %v5934
      %v6300 = vunpack.c.l.b16 %v5935
      %v6301 = vunpack.c.l.b16 %v5936
      %v6302 = vunpack.c.l.b16 %v5937
      %v6303 = vunpack.c.l.b16 %v5938
      %v6304 = vunpack.c.l.b16 %v5939
      %v6305 = vunpack.c.l.b16 %v5940
      %v6306 = vunpack.c.l.b16 %v5941
      %v6307 = vunpack.c.l.b16 %v5942
      %v6308 = vunpack.c.l.b16 %v5943
      %v6309 = vunpack.c.l.b16 %v5944
      %v6310 = vunpack.c.l.b16 %v5945
      %v6311 = vunpack.c.l.b16 %v5946
      %v6312 = vunpack.c.l.b16 %v5947
      %v6313 = vunpack.c.l.b16 %v5948
      %v6314 = vunpack.c.l.b16 %v5949
      %v6315 = vunpack.c.l.b16 %v5950
      %v6316 = vunpack.c.l.b16 %v5951
      %v6317 = vunpack.c.l.b16 %v5952
      %v6318 = vunpack.c.l.b16 %v5953
      %v6319 = vunpack.c.l.b16 %v5954
      %v6320 = vunpack.c.l.b16 %v5955
      %v6321 = vunpack.c.l.b16 %v5956
      %v6322 = vunpack.c.l.b16 %v5957
      %v6323 = vunpack.c.l.b16 %v5958
      %v6324 = vunpack.c.l.b16 %v5959
      %v6325 = vunpack.c.l.b16 %v5960
      %v6326 = vunpack.c.l.b16 %v5961
      %v6327 = vunpack.c.l.b16 %v5962
      %v6328 = vunpack.c.l.b16 %v5963
      %v6329 = vunpack.c.l.b16 %v5964
      %v6330 = vunpack.c.l.b16 %v5965
      %v6331 = vunpack.c.l.b16 %v5966
      %v6332 = vunpack.c.l.b16 %v5967
      %v6333 = vunpack.c.l.b16 %v5968
      %v6334 = vunpack.c.l.b16 %v5969
      %v6335 = vunpack.c.l.b16 %v5970
      %v6336 = vunpack.c.l.b16 %v5971
      %v6337 = vpack.c.b16 %v6194, %v6193
      %v6338 = vpack.c.b16 %v6196, %v6195
      %v6339 = vpack.c.b16 %v6198, %v6197
      %v6340 = vpack.c.b16 %v6200, %v6199
      %v6341 = vpack.c.b16 %v6202, %v6201
      %v6342 = vpack.c.b16 %v6204, %v6203
      %v6343 = vpack.c.b16 %v6206, %v6205
      %v6344 = vpack.c.b16 %v6208, %v6207
      %v6345 = vpack.c.b16 %v6210, %v6209
      %v6346 = vpack.c.b16 %v6212, %v6211
      %v6347 = vpack.c.b16 %v6214, %v6213
      %v6348 = vpack.c.b16 %v6216, %v6215
      %v6349 = vpack.c.b16 %v6218, %v6217
      %v6350 = vpack.c.b16 %v6220, %v6219
      %v6351 = vpack.c.b16 %v6222, %v6221
      %v6352 = vpack.c.b16 %v6224, %v6223
      %v6353 = vpack.c.b16 %v6226, %v6225
      %v6354 = vpack.c.b16 %v6228, %v6227
      %v6355 = vpack.c.b16 %v6230, %v6229
      %v6356 = vpack.c.b16 %v6232, %v6231
      %v6357 = vpack.c.b16 %v6234, %v6233
      %v6358 = vpack.c.b16 %v6236, %v6235
      %v6359 = vpack.c.b16 %v6238, %v6237
      %v6360 = vpack.c.b16 %v6240, %v6239
      %v6361 = vpack.c.b16 %v6242, %v6241
      %v6362 = vpack.c.b16 %v6244, %v6243
      %v6363 = vpack.c.b16 %v6246, %v6245
      %v6364 = vpack.c.b16 %v6248, %v6247
      %v6365 = vpack.c.b16 %v6250, %v6249
      %v6366 = vpack.c.b16 %v6252, %v6251
      %v6367 = vpack.c.b16 %v6254, %v6253
      %v6368 = vpack.c.b16 %v6256, %v6255
      %v6369 = vpack.c.b16 %v6258, %v6257
      %v6370 = vpack.c.b16 %v6260, %v6259
      %v6371 = vpack.c.b16 %v6262, %v6261
      %v6372 = vpack.c.b16 %v6264, %v6263
      %v6373 = vpack.c.b16 %v6266, %v6265
      %v6374 = vpack.c.b16 %v6268, %v6267
      %v6375 = vpack.c.b16 %v6270, %v6269
      %v6376 = vpack.c.b16 %v6272, %v6271
      %v6377 = vpack.c.b16 %v6274, %v6273
      %v6378 = vpack.c.b16 %v6276, %v6275
      %v6379 = vpack.c.b16 %v6278, %v6277
      %v6380 = vpack.c.b16 %v6280, %v6279
      %v6381 = vpack.c.b16 %v6282, %v6281
      %v6382 = vpack.c.b16 %v6284, %v6283
      %v6383 = vpack.c.b16 %v6286, %v6285
      %v6384 = vpack.c.b16 %v6288, %v6287
      %v6385 = vpack.c.b16 %v6290, %v6289
      %v6386 = vpack.c.b16 %v6292, %v6291
      %v6387 = vpack.c.b16 %v6294, %v6293
      %v6388 = vpack.c.b16 %v6296, %v6295
      %v6389 = vpack.c.b16 %v6298, %v6297
      %v6390 = vpack.c.b16 %v6300, %v6299
      %v6391 = vpack.c.b16 %v6302, %v6301
      %v6392 = vpack.c.b16 %v6304, %v6303
      %v6393 = vpack.c.b16 %v6306, %v6305
      %v6394 = vpack.c.b16 %v6308, %v6307
      %v6395 = vpack.c.b16 %v6310, %v6309
      %v6396 = vpack.c.b16 %v6312, %v6311
      %v6397 = vpack.c.b16 %v6314, %v6313
      %v6398 = vpack.c.b16 %v6316, %v6315
      %v6399 = vpack.c.b16 %v6318, %v6317
      %v6400 = vpack.c.b16 %v6320, %v6319
      %v6401 = vpack.c.b16 %v6322, %v6321
      %v6402 = vpack.c.b16 %v6324, %v6323
      %v6403 = vpack.c.b16 %v6326, %v6325
      %v6404 = vpack.c.b16 %v6328, %v6327
      %v6405 = vpack.c.b16 %v6330, %v6329
      %v6406 = vpack.c.b16 %v6332, %v6331
      %v6407 = vpack.c.b16 %v6334, %v6333
      %v6408 = vpack.c.b16 %v6336, %v6335
      %6481 = vmatpush.bf16.msra.mxu0 %v6344
      %6482 = vmatpush.bf16.msra.mxu0 %v6343
      %6483 = vmatpush.bf16.msra.mxu0 %v6342
      %6484 = vmatpush.bf16.msra.mxu0 %v6341
      %6485 = vmatpush.bf16.msra.mxu0 %v6340
      %6486 = vmatpush.bf16.msra.mxu0 %v6339
      %6487 = vmatpush.bf16.msra.mxu0 %v6338
      %6488 = vmatpush.bf16.msra.mxu0 %v6337
      %6489 = vmatmul.bf16.gmra.mxu0 %v5977
      %v6490 = vpop.f32.mrf.mxu0
      %v6491 = vadd.f32 %v5975, %v6490
      %v6492 = vpop.f32.mrf.mxu0
      %v6493 = vadd.f32 %v5975, %v6492
      %6494 = vmatmul.bf16.gmra.mxu0 %v5986
      %v6495 = vpop.f32.mrf.mxu0
      %v6496 = vadd.f32 %v5975, %v6495
      %v6497 = vpop.f32.mrf.mxu0
      %v6498 = vadd.f32 %v5975, %v6497
      %6499 = vmatmul.bf16.gmra.mxu0 %v5995
      %v6500 = vpop.f32.mrf.mxu0
      %v6501 = vadd.f32 %v5975, %v6500
      %v6502 = vpop.f32.mrf.mxu0
      %v6503 = vadd.f32 %v5975, %v6502
      %6504 = vmatmul.bf16.gmra.mxu0 %v6004
      %v6505 = vpop.f32.mrf.mxu0
      %v6506 = vadd.f32 %v5975, %v6505
      %v6507 = vpop.f32.mrf.mxu0
      %v6508 = vadd.f32 %v5975, %v6507
      %6509 = vdwg.mxu0
      %6510 = vmatpush.bf16.msra.mxu0 %v6352
      %6511 = vmatpush.bf16.msra.mxu0 %v6351
      %6512 = vmatpush.bf16.msra.mxu0 %v6350
      %6513 = vmatpush.bf16.msra.mxu0 %v6349
      %6514 = vmatpush.bf16.msra.mxu0 %v6348
      %6515 = vmatpush.bf16.msra.mxu0 %v6347
      %6516 = vmatpush.bf16.msra.mxu0 %v6346
      %6517 = vmatpush.bf16.msra.mxu0 %v6345
      %6518 = vmatmul.bf16.gmra.mxu0 %v5978
      %v6519 = vpop.f32.mrf.mxu0
      %v6520 = vadd.f32 %v6491, %v6519
      %v6521 = vpop.f32.mrf.mxu0
      %v6522 = vadd.f32 %v6493, %v6521
      %6523 = vmatmul.bf16.gmra.mxu0 %v5987
      %v6524 = vpop.f32.mrf.mxu0
      %v6525 = vadd.f32 %v6496, %v6524
      %v6526 = vpop.f32.mrf.mxu0
      %v6527 = vadd.f32 %v6498, %v6526
      %6528 = vmatmul.bf16.gmra.mxu0 %v5996
      %v6529 = vpop.f32.mrf.mxu0
      %v6530 = vadd.f32 %v6501, %v6529
      %v6531 = vpop.f32.mrf.mxu0
      %v6532 = vadd.f32 %v6503, %v6531
      %6533 = vmatmul.bf16.gmra.mxu0 %v6005
      %v6534 = vpop.f32.mrf.mxu0
      %v6535 = vadd.f32 %v6506, %v6534
      %v6536 = vpop.f32.mrf.mxu0
      %v6537 = vadd.f32 %v6508, %v6536
      %6538 = vdwg.mxu0
      %6539 = vmatpush.bf16.msra.mxu0 %v6360
      %6540 = vmatpush.bf16.msra.mxu0 %v6359
      %6541 = vmatpush.bf16.msra.mxu0 %v6358
      %6542 = vmatpush.bf16.msra.mxu0 %v6357
      %6543 = vmatpush.bf16.msra.mxu0 %v6356
      %6544 = vmatpush.bf16.msra.mxu0 %v6355
      %6545 = vmatpush.bf16.msra.mxu0 %v6354
      %6546 = vmatpush.bf16.msra.mxu0 %v6353
      %6547 = vmatmul.bf16.gmra.mxu0 %v5979
      %v6548 = vpop.f32.mrf.mxu0
      %v6549 = vadd.f32 %v6520, %v6548
      %v6550 = vpop.f32.mrf.mxu0
      %v6551 = vadd.f32 %v6522, %v6550
      %6552 = vmatmul.bf16.gmra.mxu0 %v5988
      %v6553 = vpop.f32.mrf.mxu0
      %v6554 = vadd.f32 %v6525, %v6553
      %v6555 = vpop.f32.mrf.mxu0
      %v6556 = vadd.f32 %v6527, %v6555
      %6557 = vmatmul.bf16.gmra.mxu0 %v5997
      %v6558 = vpop.f32.mrf.mxu0
      %v6559 = vadd.f32 %v6530, %v6558
      %v6560 = vpop.f32.mrf.mxu0
      %v6561 = vadd.f32 %v6532, %v6560
      %6562 = vmatmul.bf16.gmra.mxu0 %v6006
      %v6563 = vpop.f32.mrf.mxu0
      %v6564 = vadd.f32 %v6535, %v6563
      %v6565 = vpop.f32.mrf.mxu0
      %v6566 = vadd.f32 %v6537, %v6565
      %6567 = vdwg.mxu0
      %6568 = vmatpush.bf16.msra.mxu0 %v6368
      %6569 = vmatpush.bf16.msra.mxu0 %v6367
      %6570 = vmatpush.bf16.msra.mxu0 %v6366
      %6571 = vmatpush.bf16.msra.mxu0 %v6365
      %6572 = vmatpush.bf16.msra.mxu0 %v6364
      %6573 = vmatpush.bf16.msra.mxu0 %v6363
      %6574 = vmatpush.bf16.msra.mxu0 %v6362
      %6575 = vmatpush.bf16.msra.mxu0 %v6361
      %6576 = vmatmul.bf16.gmra.mxu0 %v5980
      %v6577 = vpop.f32.mrf.mxu0
      %v6578 = vadd.f32 %v6549, %v6577
      %v6579 = vpop.f32.mrf.mxu0
      %v6580 = vadd.f32 %v6551, %v6579
      %6581 = vmatmul.bf16.gmra.mxu0 %v5989
      %v6582 = vpop.f32.mrf.mxu0
      %v6583 = vadd.f32 %v6554, %v6582
      %v6584 = vpop.f32.mrf.mxu0
      %v6585 = vadd.f32 %v6556, %v6584
      %6586 = vmatmul.bf16.gmra.mxu0 %v5998
      %v6587 = vpop.f32.mrf.mxu0
      %v6588 = vadd.f32 %v6559, %v6587
      %v6589 = vpop.f32.mrf.mxu0
      %v6590 = vadd.f32 %v6561, %v6589
      %6591 = vmatmul.bf16.gmra.mxu0 %v6007
      %v6592 = vpop.f32.mrf.mxu0
      %v6593 = vadd.f32 %v6564, %v6592
      %v6594 = vpop.f32.mrf.mxu0
      %v6595 = vadd.f32 %v6566, %v6594
      %6596 = vdwg.mxu0
      %6597 = vmatpush.bf16.msra.mxu0 %v6376
      %6598 = vmatpush.bf16.msra.mxu0 %v6375
      %6599 = vmatpush.bf16.msra.mxu0 %v6374
      %6600 = vmatpush.bf16.msra.mxu0 %v6373
      %6601 = vmatpush.bf16.msra.mxu0 %v6372
      %6602 = vmatpush.bf16.msra.mxu0 %v6371
      %6603 = vmatpush.bf16.msra.mxu0 %v6370
      %6604 = vmatpush.bf16.msra.mxu0 %v6369
      %6605 = vmatmul.bf16.gmra.mxu0 %v5981
      %v6606 = vpop.f32.mrf.mxu0
      %v6607 = vadd.f32 %v6578, %v6606
      %v6608 = vpop.f32.mrf.mxu0
      %v6609 = vadd.f32 %v6580, %v6608
      %6610 = vmatmul.bf16.gmra.mxu0 %v5990
      %v6611 = vpop.f32.mrf.mxu0
      %v6612 = vadd.f32 %v6583, %v6611
      %v6613 = vpop.f32.mrf.mxu0
      %v6614 = vadd.f32 %v6585, %v6613
      %6615 = vmatmul.bf16.gmra.mxu0 %v5999
      %v6616 = vpop.f32.mrf.mxu0
      %v6617 = vadd.f32 %v6588, %v6616
      %v6618 = vpop.f32.mrf.mxu0
      %v6619 = vadd.f32 %v6590, %v6618
      %6620 = vmatmul.bf16.gmra.mxu0 %v6008
      %v6621 = vpop.f32.mrf.mxu0
      %v6622 = vadd.f32 %v6593, %v6621
      %v6623 = vpop.f32.mrf.mxu0
      %v6624 = vadd.f32 %v6595, %v6623
      %6625 = vdwg.mxu0
      %6626 = vmatpush.bf16.msra.mxu0 %v6384
      %6627 = vmatpush.bf16.msra.mxu0 %v6383
      %6628 = vmatpush.bf16.msra.mxu0 %v6382
      %6629 = vmatpush.bf16.msra.mxu0 %v6381
      %6630 = vmatpush.bf16.msra.mxu0 %v6380
      %6631 = vmatpush.bf16.msra.mxu0 %v6379
      %6632 = vmatpush.bf16.msra.mxu0 %v6378
      %6633 = vmatpush.bf16.msra.mxu0 %v6377
      %6634 = vmatmul.bf16.gmra.mxu0 %v5982
      %v6635 = vpop.f32.mrf.mxu0
      %v6636 = vadd.f32 %v6607, %v6635
      %v6637 = vpop.f32.mrf.mxu0
      %v6638 = vadd.f32 %v6609, %v6637
      %6639 = vmatmul.bf16.gmra.mxu0 %v5991
      %v6640 = vpop.f32.mrf.mxu0
      %v6641 = vadd.f32 %v6612, %v6640
      %v6642 = vpop.f32.mrf.mxu0
      %v6643 = vadd.f32 %v6614, %v6642
      %6644 = vmatmul.bf16.gmra.mxu0 %v6000
      %v6645 = vpop.f32.mrf.mxu0
      %v6646 = vadd.f32 %v6617, %v6645
      %v6647 = vpop.f32.mrf.mxu0
      %v6648 = vadd.f32 %v6619, %v6647
      %6649 = vmatmul.bf16.gmra.mxu0 %v6009
      %v6650 = vpop.f32.mrf.mxu0
      %v6651 = vadd.f32 %v6622, %v6650
      %v6652 = vpop.f32.mrf.mxu0
      %v6653 = vadd.f32 %v6624, %v6652
      %6654 = vdwg.mxu0
      %6655 = vmatpush.bf16.msra.mxu0 %v6392
      %6656 = vmatpush.bf16.msra.mxu0 %v6391
      %6657 = vmatpush.bf16.msra.mxu0 %v6390
      %6658 = vmatpush.bf16.msra.mxu0 %v6389
      %6659 = vmatpush.bf16.msra.mxu0 %v6388
      %6660 = vmatpush.bf16.msra.mxu0 %v6387
      %6661 = vmatpush.bf16.msra.mxu0 %v6386
      %6662 = vmatpush.bf16.msra.mxu0 %v6385
      %6663 = vmatmul.bf16.gmra.mxu0 %v5983
      %v6664 = vpop.f32.mrf.mxu0
      %v6665 = vadd.f32 %v6636, %v6664
      %v6666 = vpop.f32.mrf.mxu0
      %v6667 = vadd.f32 %v6638, %v6666
      %6668 = vmatmul.bf16.gmra.mxu0 %v5992
      %v6669 = vpop.f32.mrf.mxu0
      %v6670 = vadd.f32 %v6641, %v6669
      %v6671 = vpop.f32.mrf.mxu0
      %v6672 = vadd.f32 %v6643, %v6671
      %6673 = vmatmul.bf16.gmra.mxu0 %v6001
      %v6674 = vpop.f32.mrf.mxu0
      %v6675 = vadd.f32 %v6646, %v6674
      %v6676 = vpop.f32.mrf.mxu0
      %v6677 = vadd.f32 %v6648, %v6676
      %6678 = vmatmul.bf16.gmra.mxu0 %v6010
      %v6679 = vpop.f32.mrf.mxu0
      %v6680 = vadd.f32 %v6651, %v6679
      %v6681 = vpop.f32.mrf.mxu0
      %v6682 = vadd.f32 %v6653, %v6681
      %6683 = vdwg.mxu0
      %6684 = vmatpush.bf16.msra.mxu0 %v6400
      %6685 = vmatpush.bf16.msra.mxu0 %v6399
      %6686 = vmatpush.bf16.msra.mxu0 %v6398
      %6687 = vmatpush.bf16.msra.mxu0 %v6397
      %6688 = vmatpush.bf16.msra.mxu0 %v6396
      %6689 = vmatpush.bf16.msra.mxu0 %v6395
      %6690 = vmatpush.bf16.msra.mxu0 %v6394
      %6691 = vmatpush.bf16.msra.mxu0 %v6393
      %6692 = vmatmul.bf16.gmra.mxu0 %v5984
      %v6693 = vpop.f32.mrf.mxu0
      %v6694 = vadd.f32 %v6665, %v6693
      %v6695 = vpop.f32.mrf.mxu0
      %v6696 = vadd.f32 %v6667, %v6695
      %6697 = vmatmul.bf16.gmra.mxu0 %v5993
      %v6698 = vpop.f32.mrf.mxu0
      %v6699 = vadd.f32 %v6670, %v6698
      %v6700 = vpop.f32.mrf.mxu0
      %v6701 = vadd.f32 %v6672, %v6700
      %6702 = vmatmul.bf16.gmra.mxu0 %v6002
      %v6703 = vpop.f32.mrf.mxu0
      %v6704 = vadd.f32 %v6675, %v6703
      %v6705 = vpop.f32.mrf.mxu0
      %v6706 = vadd.f32 %v6677, %v6705
      %6707 = vmatmul.bf16.gmra.mxu0 %v6011
      %v6708 = vpop.f32.mrf.mxu0
      %v6709 = vadd.f32 %v6680, %v6708
      %v6710 = vpop.f32.mrf.mxu0
      %v6711 = vadd.f32 %v6682, %v6710
      %6712 = vdwg.mxu0
      %6713 = vmatpush.bf16.msra.mxu0 %v6408
      %6714 = vmatpush.bf16.msra.mxu0 %v6407
      %6715 = vmatpush.bf16.msra.mxu0 %v6406
      %6716 = vmatpush.bf16.msra.mxu0 %v6405
      %6717 = vmatpush.bf16.msra.mxu0 %v6404
      %6718 = vmatpush.bf16.msra.mxu0 %v6403
      %6719 = vmatpush.bf16.msra.mxu0 %v6402
      %6720 = vmatpush.bf16.msra.mxu0 %v6401
      %6721 = vmatmul.bf16.gmra.mxu0 %v5985
      %v6722 = vpop.f32.mrf.mxu0
      %v6723 = vadd.f32 %v6694, %v6722
      %v6724 = vpop.f32.mrf.mxu0
      %v6725 = vadd.f32 %v6696, %v6724
      %6726 = vmatmul.bf16.gmra.mxu0 %v5994
      %v6727 = vpop.f32.mrf.mxu0
      %v6728 = vadd.f32 %v6699, %v6727
      %v6729 = vpop.f32.mrf.mxu0
      %v6730 = vadd.f32 %v6701, %v6729
      %6731 = vmatmul.bf16.gmra.mxu0 %v6003
      %v6732 = vpop.f32.mrf.mxu0
      %v6733 = vadd.f32 %v6704, %v6732
      %v6734 = vpop.f32.mrf.mxu0
      %v6735 = vadd.f32 %v6706, %v6734
      %6736 = vmatmul.bf16.gmra.mxu0 %v6012
      %v6737 = vpop.f32.mrf.mxu0
      %v6738 = vadd.f32 %v6709, %v6737
      %v6739 = vpop.f32.mrf.mxu0
      %v6740 = vadd.f32 %v6711, %v6739
      %6741 = vdwg.mxu0
      %v6742 = vadd.f32 %v6723, %v5315
      %v6743 = vadd.f32 %v6725, %v5316
      %v6744 = vadd.f32 %v6728, %v5317
      %v6745 = vadd.f32 %v6730, %v5318
      %v6746 = vadd.f32 %v6733, %v5319
      %v6747 = vadd.f32 %v6735, %v5320
      %v6748 = vadd.f32 %v6738, %v5321
      %v6749 = vadd.f32 %v6740, %v5322
      %v6750 = vmax.f32 %v6742, 0.0
      %v6751 = vmax.f32 %v6743, 0.0
      %v6752 = vmax.f32 %v6744, 0.0
      %v6753 = vmax.f32 %v6745, 0.0
      %v6754 = vmax.f32 %v6746, 0.0
      %v6755 = vmax.f32 %v6747, 0.0
      %v6756 = vmax.f32 %v6748, 0.0
      %v6757 = vmax.f32 %v6749, 0.0
      %v6758 = vpack.c.bf16 %v6750, %v6750
      %v6759 = vpack.c.bf16 %v6751, %v6751
      %v6760 = vpack.c.bf16 %v6752, %v6752
      %v6761 = vpack.c.bf16 %v6753, %v6753
      %v6762 = vpack.c.bf16 %v6754, %v6754
      %v6763 = vpack.c.bf16 %v6755, %v6755
      %v6764 = vpack.c.bf16 %v6756, %v6756
      %v6765 = vpack.c.bf16 %v6757, %v6757
      %6766 = vst [vmem:[%s278] sm:$0xf] %v6758
      %6767 = vst [vmem:[%s278 + $0x4] sm:$0xf] %v6759
      %6768 = vst [vmem:[%s278 + $0x8] sm:$0xf] %v6760
      %6769 = vst [vmem:[%s278 + $0xc] sm:$0xf] %v6761
      %6770 = vst [vmem:[%s278 + $0x10] sm:$0xf] %v6762
      %6771 = vst [vmem:[%s278 + $0x14] sm:$0xf] %v6763
      %6772 = vst [vmem:[%s278 + $0x18] sm:$0xf] %v6764
      %6773 = vst [vmem:[%s278 + $0x1c] sm:$0xf] %v6765
      %p6774 = scmp.lt.s32.totalorder %s18, 1
      %s6775 = scalar_select %p6774, %s18, 1
      %s6776 = smul.addr %s6775, 8
      %s6777 = smul.addr %s6776, 4
      %s6778 = scalar_lea.vmem %s7, %s6777
      // Predicated region
      $region49: #{_lambda_.1} parent=47 // pred_check
        %p6779 = pneg %p188
      $region50: #{_lambda_.1} parent=47 // pred_check_branch
        %6781 = sbr.rel (%p6779) target = $region52
      $region51: #{_lambda_.1} parent=47 // pred_region
        _
      $region52: #{_lambda_.1} parent=47 // pred_fallthru
        _
    $region48: #{_lambda_.1} parent=5 // pred_fallthru
      _
    %p6782 = scmp.le.s32.totalorder 2, %s13
    // Predicated region
    $region53: #{_lambda_.1} parent=5 // pred_check
      %p6783 = pneg %p6782
    $region54: #{_lambda_.1} parent=5 // pred_check_branch
      %6785 = sbr.rel (%p6783) target = $region56
    $region55: #{_lambda_.1} parent=5 // pred_region
      %s6786 = ssub.s32 %s13, 2
      // Predicated region
      $region57: #{_lambda_.1} parent=55 // pred_check
        %p6787 = pneg %p194
      $region58: #{_lambda_.1} parent=55 // pred_check_branch
        %6789 = sbr.rel (%p6787) target = $region60
      $region59: #{_lambda_.1} parent=55 // pred_region
        %p6790 = scmp.lt.s32.totalorder %s19, 1
        %s6791 = scalar_select %p6790, %s19, 1
        %s6792 = smul.addr %s6791, 8
        %s6793 = smul.addr %s6792, 4
        %s6794 = scalar_lea.vmem %s7, %s6793
      $region60: #{_lambda_.1} parent=55 // pred_fallthru
        _
    $region56: #{_lambda_.1} parent=5 // pred_fallthru
      _
  $region6: #{_lambda_.1} parent=0 // loop_footer
    %s17 = sadd.s32 1, %s13
  $region7: #{_lambda_.1} parent=0 // loop_footer_branch
    %12 = sbr.rel target = $region3
  $region8: #{_lambda_.1} parent=0 // loop_exit
    _

</llo_original>
